<compile_context>
chip_gen: v6e
topology: v6e:2x2x1
jax: 0.10.0
libtpu: 0.0.40
codegen_flags: <defaults>
</compile_context>

<pallas_src>
import functools

import jax
import jax.numpy as jnp
from jax import lax
from jax.experimental import pallas as pl
from jax.experimental.pallas import tpu as pltpu

_F32_MAX_BITS = 0x7F7FFFFF   # bit pattern of the largest finite float32


def _loss_kernel(ploc_ref, plabel_ref, gloc_ref, glabel_ref, db_ref, out_ref,
                 con_ref, conneg_ref, pos_acc, sl1_acc, cpos_acc,
                 *, scale_xy, scale_wh, d_real, d_pad, dc, exact_tie_break):
    c = pl.program_id(1)
    n_chunks = pl.num_programs(1)

    # ---- init per-sample accumulators on the first anchor chunk -------------
    @pl.when(c == 0)
    def _():
        pos_acc[...] = jnp.zeros_like(pos_acc)
        sl1_acc[...] = jnp.zeros_like(sl1_acc)
        cpos_acc[...] = jnp.zeros_like(cpos_acc)

    # ---- per-chunk work: anchors [c*dc, (c+1)*dc) ----------------------------
    ploc = ploc_ref[...].astype(jnp.float32)       # (bt, 4, dc)
    gloc = gloc_ref[...].astype(jnp.float32)       # (bt, 4, dc)
    db = db_ref[...].astype(jnp.float32)           # (1, 4, dc); rows 2:4 = 1/wh
    logits = plabel_ref[...].astype(jnp.float32)   # (bt, L, dc)
    glabel = glabel_ref[...]                       # (bt, dc) int32

    bt, num_cls, _ = logits.shape

    mask = glabel > 0
    mask_f = mask.astype(jnp.float32)
    pos_acc[...] += jnp.sum(mask_f, axis=1, keepdims=True)

    # _loc_vec: encode GT boxes wrt default boxes (wh rows of db hold 1/wh).
    gxy = scale_xy * (gloc[:, :2, :] - db[:, :2, :]) * db[:, 2:, :]
    gwh = scale_wh * jnp.log(gloc[:, 2:, :] * db[:, 2:, :])

    def smooth_l1(x):
        ax = jnp.abs(x)
        return jnp.where(ax < 1.0, 0.5 * x * x, ax - 0.5)

    sl1_per = (jnp.sum(smooth_l1(ploc[:, :2, :] - gxy), axis=1) +
               jnp.sum(smooth_l1(ploc[:, 2:, :] - gwh), axis=1))      # (bt, dc)
    sl1_acc[...] += jnp.sum(mask_f * sl1_per, axis=1, keepdims=True)

    # per-anchor cross entropy
    mx = jnp.max(logits, axis=1)                                      # (bt, dc)
    lse = mx + jnp.log(jnp.sum(jnp.exp(logits - mx[:, None, :]), axis=1))
    cls_iota = lax.broadcasted_iota(jnp.int32, logits.shape, 1)
    sel = jnp.sum(jnp.where(cls_iota == glabel[:, None, :], logits, 0.0),
                  axis=1)                                             # (bt, dc)
    con = lse - sel                                                   # >= 0

    if d_pad != d_real:
        # Padded anchors must never look like hard negatives.
        anchor = c * dc + lax.broadcasted_iota(jnp.int32, con.shape, 1)
        con = jnp.where(anchor < d_real, con, 0.0)

    conneg = jnp.abs(jnp.where(mask, 0.0, con))    # abs clears any -0.0

    cpos_acc[...] += jnp.sum(con * mask_f, axis=1, keepdims=True)

    con_ref[c] = con          # dynamic index on the leading scratch axis only
    conneg_ref[c] = conneg

    # ---- finalize: hard negative mining + loss on the last chunk ------------
    @pl.when(c == n_chunks - 1)
    def _():
        pos_num = pos_acc[...]                                        # (bt, 1)
        k = jnp.minimum(3.0 * pos_num, float(d_real))                 # (bt, 1)

        con_all = con_ref[...]                            # (n_chunks, bt, dc)
        u = pltpu.bitcast(conneg_ref[...], jnp.int32)     # (n_chunks, bt, dc)

        def count(ind):                                   # bool 3d -> (bt, 1)
            f = jnp.where(ind, 1.0, 0.0)
            return jnp.sum(jnp.sum(f, axis=0), axis=-1, keepdims=True)

        # (a) bisection on the int32 bit pattern (monotone for nonneg f32):
        #     tau = bits of the k-th largest con_neg value.
        def bit_body(_, carry):
            lo, hi = carry
            mid = lo + ((hi - lo + 1) >> 1)
            ok = count(u >= mid[None]) >= k
            return jnp.where(ok, mid, lo), jnp.where(ok, hi, mid - 1)

        lo0 = jnp.zeros((bt, 1), jnp.int32)
        hi0 = jnp.full((bt, 1), _F32_MAX_BITS, jnp.int32)
        tau, _ = lax.fori_loop(0, 31, bit_body, (lo0, hi0), unroll=True)

        gt_mask = u > tau[None]
        cnt_gt = count(gt_mask)
        r = k - cnt_gt                         # number of value-ties to keep

        if exact_tie_break:
            # (b) bisection on the anchor index (stable, index-order ties),
            #     exactly matching torch's sort-of-sort ranking.
            tie = u == tau[None]
            idx = (dc * lax.broadcasted_iota(jnp.int32, u.shape, 0) +
                   lax.broadcasted_iota(jnp.int32, u.shape, 2))

            def idx_body(_, carry):
                lo, hi = carry
                mid = (lo + hi) >> 1
                ok = count(tie & (idx <= mid[None])) >= r
                return jnp.where(ok, lo, mid + 1), jnp.where(ok, mid, hi)

            ilo0 = jnp.zeros((bt, 1), jnp.int32)
            ihi0 = jnp.full((bt, 1), d_pad - 1, jnp.int32)
            num_idx_iters = max(1, (d_pad - 1).bit_length())
            m_star, _ = lax.fori_loop(0, num_idx_iters, idx_body,
                                      (ilo0, ihi0), unroll=True)

            neg_mask = gt_mask | (tie & (idx <= m_star[None]) &
                                  (r[None] >= 1.0))
            neg_f = jnp.where(neg_mask, 1.0, 0.0)
            closs_neg = jnp.sum(jnp.sum(con_all * neg_f, axis=0),
                                axis=-1, keepdims=True)
        else:
            # Tied anchors all contribute tau, so "first r ties by index"
            # reduces to r * tau (exact whenever tau > 0).
            gt_f = jnp.where(gt_mask, 1.0, 0.0)
            tau_f = pltpu.bitcast(tau, jnp.float32)
            r_eff = jnp.where(r >= 1.0, r, 0.0)
            closs_neg = (jnp.sum(jnp.sum(con_all * gt_f, axis=0),
                                 axis=-1, keepdims=True) + r_eff * tau_f)

        total = sl1_acc[...] + cpos_acc[...] + closs_neg              # (bt, 1)
        num_mask = (pos_num > 0).astype(jnp.float32)
        per_sample = total * num_mask / jnp.maximum(pos_num, 1e-6)    # (bt, 1)

        # Lane-dense (1, 1, bt) output row via an eye-masked sublane reduce.
        eye = (lax.broadcasted_iota(jnp.int32, (bt, bt), 0) ==
               lax.broadcasted_iota(jnp.int32, (bt, bt), 1))
        row = jnp.sum(jnp.where(eye, per_sample, 0.0), axis=0, keepdims=True)
        out_ref[...] = row.reshape(1, 1, bt)


def _round_up(x, m):
    return ((x + m - 1) // m) * m


def _vmem_limit_bytes():
    try:
        phys = int(pltpu.get_tpu_info().vmem_capacity_bytes)
    except Exception:
        phys = 0
    if phys >= 96 * 1024 * 1024:       # v5e / v6e: 128 MiB physical VMEM
        return 100 * 1024 * 1024
    return 44 * 1024 * 1024            # v7x-class (64 MiB) or unknown: headroom


def ssd_loss(ploc, plabel, gloc, glabel, dboxes, *, scale_xy, scale_wh,
             batch_block=8, anchor_block=1024, payload_dtype=jnp.bfloat16,
             exact_tie_break=True):
    """Mean SSD loss over the batch (PyTorch Loss.forward semantics)."""
    n, _, d = ploc.shape
    num_cls = plabel.shape[1]

    # Hoist the per-anchor reciprocal of the default-box w/h out of the kernel
    # (dboxes is grid-constant, so per-anchor divides become multiplies).
    db = jnp.concatenate([dboxes[:, :2, :], 1.0 / dboxes[:, 2:, :]],
                         axis=1).astype(jnp.float32)

    if payload_dtype is not None:
        # HBM->VMEM payload compression; all compute stays f32 in-kernel.
        ploc = ploc.astype(payload_dtype)
        plabel = plabel.astype(payload_dtype)
        gloc = gloc.astype(payload_dtype)
    glabel = glabel.astype(jnp.int32)

    # ---- anchor (D) chunking: inner "arbitrary" grid axis -------------------
    dc = max(128, (int(anchor_block) // 128) * 128)
    dc = min(dc, _round_up(d, 128))
    n_chunks = -(-d // dc)
    d_pad = n_chunks * dc
    if d_pad != d:
        pad = d_pad - d
        ploc = jnp.concatenate(
            [ploc, jnp.zeros((n, 4, pad), ploc.dtype)], axis=2)
        plabel = jnp.concatenate(
            [plabel, jnp.zeros((n, num_cls, pad), plabel.dtype)], axis=2)
        # Padded GT/default w/h of 1 keep the encode log() finite; glabel=0
        # plus the in-kernel valid-anchor mask keeps their contribution at 0.
        gloc = jnp.concatenate(
            [gloc, jnp.ones((n, 4, pad), gloc.dtype)], axis=2)
        glabel = jnp.concatenate(
            [glabel, jnp.zeros((n, pad), glabel.dtype)], axis=1)
        db = jnp.concatenate(
            [db, jnp.ones((1, 4, pad), db.dtype)], axis=2)

    # ---- batch blocking (fills all 8 vreg sublanes) --------------------------
    bt = max(1, min(batch_block, n))
    n_blocks = -(-n // bt)
    n_pad = n_blocks * bt
    if n_pad != n:
        pad = n_pad - n
        ploc = jnp.concatenate(
            [ploc, jnp.zeros((pad, 4, d_pad), ploc.dtype)], axis=0)
        plabel = jnp.concatenate(
            [plabel, jnp.zeros((pad, num_cls, d_pad), plabel.dtype)], axis=0)
        gloc = jnp.concatenate(
            [gloc, jnp.ones((pad, 4, d_pad), gloc.dtype)], axis=0)
        glabel = jnp.concatenate(
            [glabel, jnp.zeros((pad, d_pad), glabel.dtype)], axis=0)

    kernel = functools.partial(
        _loss_kernel,
        scale_xy=float(scale_xy), scale_wh=float(scale_wh),
        d_real=int(d), d_pad=int(d_pad), dc=int(dc),
        exact_tie_break=bool(exact_tie_break))

    per_sample = pl.pallas_call(
        kernel,
        out_shape=jax.ShapeDtypeStruct((n_blocks, 1, bt), jnp.float32),
        grid_spec=pltpu.PrefetchScalarGridSpec(
            num_scalar_prefetch=0,
            grid=(n_blocks, n_chunks),
            in_specs=[
                pl.BlockSpec((bt, 4, dc), lambda b, c: (b, 0, c)),        # ploc
                pl.BlockSpec((bt, num_cls, dc), lambda b, c: (b, 0, c)),  # plabel
                pl.BlockSpec((bt, 4, dc), lambda b, c: (b, 0, c)),        # gloc
                pl.BlockSpec((bt, dc), lambda b, c: (b, c)),              # glabel
                pl.BlockSpec((1, 4, dc), lambda b, c: (0, 0, c)),         # dboxes
            ],
            out_specs=pl.BlockSpec((1, 1, bt), lambda b, c: (b, 0, 0)),
            scratch_shapes=[
                pltpu.VMEM((n_chunks, bt, dc), jnp.float32),   # con
                pltpu.VMEM((n_chunks, bt, dc), jnp.float32),   # con_neg
                pltpu.VMEM((bt, 1), jnp.float32),              # pos_num acc
                pltpu.VMEM((bt, 1), jnp.float32),              # SmoothL1 acc
                pltpu.VMEM((bt, 1), jnp.float32),              # positive-CE acc
            ]),
        compiler_params=pltpu.CompilerParams(
            dimension_semantics=("parallel", "arbitrary"),
            vmem_limit_bytes=_vmem_limit_bytes()),
    )(ploc, plabel, gloc, glabel, db)

    return jnp.mean(per_sample.reshape(-1)[:n])


def ref_loss(ploc, plabel, gloc, glabel, dboxes, *, scale_xy, scale_wh):
    """Pure-JAX mirror of the PyTorch Loss.forward for verification."""
    mask = glabel > 0
    mask_f = mask.astype(jnp.float32)
    pos_num = jnp.sum(mask_f, axis=1)

    gxy = scale_xy * (gloc[:, :2, :] - dboxes[:, :2, :]) / dboxes[:, 2:, :]
    gwh = scale_wh * jnp.log(gloc[:, 2:, :] / dboxes[:, 2:, :])
    vec_gd = jnp.concatenate([gxy, gwh], axis=1)

    x = ploc - vec_gd
    ax = jnp.abs(x)
    sl1 = jnp.where(ax < 1.0, 0.5 * x * x, ax - 0.5).sum(axis=1)
    sl1 = (mask_f * sl1).sum(axis=1)

    mx = jnp.max(plabel, axis=1)
    lse = mx + jnp.log(jnp.sum(jnp.exp(plabel - mx[:, None, :]), axis=1))
    sel = jnp.take_along_axis(plabel, glabel[:, None, :], axis=1)[:, 0, :]
    con = lse - sel

    con_neg = jnp.where(mask, 0.0, con)
    con_idx = jnp.argsort(-con_neg, axis=1)          # descending, stable
    con_rank = jnp.argsort(con_idx, axis=1)
    neg_num = jnp.minimum(3 * pos_num, float(mask.shape[1]))[:, None]
    neg_mask_f = (con_rank < neg_num).astype(jnp.float32)

    closs = (con * (mask_f + neg_mask_f)).sum(axis=1)
    total = sl1 + closs
    num_mask = (pos_num > 0).astype(jnp.float32)
    pos_f = jnp.maximum(pos_num, 1e-6)
    return jnp.mean(total * num_mask / pos_f)


if __name__ == "__main__":
    key = jax.random.PRNGKey(0)
    N, L, D = 10, 8, 300            # small test shapes (real SSD: N>=32, L=81, D=8732)
    scale_xy, scale_wh = 10.0, 5.0  # 1/0.1, 1/0.2 (SSD defaults)

    k1, k2, k3, k4, k5, k6, k7 = jax.random.split(key, 7)
    ploc = jax.random.normal(k1, (N, 4, D), jnp.float32)
    plabel = jax.random.normal(k2, (N, L, D), jnp.float32)
    gloc_xy = jax.random.uniform(k3, (N, 2, D), jnp.float32, 0.0, 1.0)
    gloc_wh = jax.random.uniform(k4, (N, 2, D), jnp.float32, 0.05, 1.0)
    gloc = jnp.concatenate([gloc_xy, gloc_wh], axis=1)
    labels_raw = jax.random.randint(k5, (N, D), 1, L)
    is_pos = jax.random.uniform(k6, (N, D)) < 0.1
    glabel = jnp.where(is_pos, labels_raw, 0).astype(jnp.int32)
    dboxes = jax.random.uniform(k7, (1, 4, D), jnp.float32, 0.1, 1.0)

    # bf16 payload is the production default; quantize the test inputs once so
    # the kernel and the pure-JAX reference see identical data.
    ploc_q = ploc.astype(jnp.bfloat16).astype(jnp.float32)
    plabel_q = plabel.astype(jnp.bfloat16).astype(jnp.float32)
    gloc_q = gloc.astype(jnp.bfloat16).astype(jnp.float32)

    out = ssd_loss(ploc_q, plabel_q, gloc_q, glabel, dboxes,
                   scale_xy=scale_xy, scale_wh=scale_wh,
                   batch_block=8, anchor_block=128)   # 3 anchor chunks, D padded
    out = jax.block_until_ready(out)

    ref = ref_loss(ploc_q, plabel_q, gloc_q, glabel, dboxes,
                   scale_xy=scale_xy, scale_wh=scale_wh)
    ref = jax.block_until_ready(ref)

    assert abs(float(out) - float(ref)) <= 2e-3 * max(1.0, abs(float(ref))), (
        float(out), float(ref))
    print("KERNEL_OK")
</pallas_src>

<mosaic_0001>
module attributes {stable_mosaic.version = 11 : i64} {
  func.func @_loss_kernel(%arg0: i32, %arg1: i32, %arg2: memref<8x4x128xbf16, #tpu.memory_space<vmem>>, %arg3: memref<8x8x128xbf16, #tpu.memory_space<vmem>>, %arg4: memref<8x4x128xbf16, #tpu.memory_space<vmem>>, %arg5: memref<8x128xi32, #tpu.memory_space<vmem>>, %arg6: memref<1x4x128xf32, #tpu.memory_space<vmem>>, %arg7: memref<1x1x8xf32, #tpu.memory_space<vmem>>, %arg8: memref<3x8x128xf32, #tpu.memory_space<vmem>>, %arg9: memref<3x8x128xf32, #tpu.memory_space<vmem>>, %arg10: memref<8x1xf32, #tpu.memory_space<vmem>>, %arg11: memref<8x1xf32, #tpu.memory_space<vmem>>, %arg12: memref<8x1xf32, #tpu.memory_space<vmem>>) attributes {dimension_semantics = [#tpu.dimension_semantics<parallel>, #tpu.dimension_semantics<arbitrary>], iteration_bounds = array<i64: 2, 3>, scalar_prefetch = 0 : i64, scratch_operands = 5 : i64, tpu.core_type = #tpu.core_type<tc>, window_params = [{transform_indices = @transform_0, window_bounds = array<i64: 8, 4, 128>}, {transform_indices = @transform_1, window_bounds = array<i64: 8, 8, 128>}, {transform_indices = @transform_2, window_bounds = array<i64: 8, 4, 128>}, {transform_indices = @transform_3, window_bounds = array<i64: 8, 128>}, {transform_indices = @transform_4, window_bounds = array<i64: 1, 4, 128>}, {transform_indices = @transform_5, window_bounds = array<i64: 1, 1, 8>}]} {
    %c0_i32 = arith.constant 0 : i32
    %0 = arith.cmpi eq, %arg1, %c0_i32 : i32
    %1 = arith.extui %0 : i1 to i32
    %c0_i32_0 = arith.constant 0 : i32
    %2 = arith.cmpi ne, %1, %c0_i32_0 : i32
    scf.if %2 {
      %cst_50 = arith.constant 0.000000e+00 : f32
      %111 = vector.broadcast %cst_50 : f32 to vector<8x1xf32>
      %c0_51 = arith.constant 0 : index
      %c0_52 = arith.constant 0 : index
      %112 = vector.load %arg10[%c0_51, %c0_52] : memref<8x1xf32, #tpu.memory_space<vmem>>, vector<8x1xf32>
      tpu.vector_store %arg10[%c0_51, %c0_52], %111 {strides = array<i32>} : memref<8x1xf32, #tpu.memory_space<vmem>>, vector<8x1xf32>,
      %cst_53 = arith.constant 0.000000e+00 : f32
      %113 = vector.broadcast %cst_53 : f32 to vector<8x1xf32>
      %c0_54 = arith.constant 0 : index
      %c0_55 = arith.constant 0 : index
      %114 = vector.load %arg11[%c0_54, %c0_55] : memref<8x1xf32, #tpu.memory_space<vmem>>, vector<8x1xf32>
      tpu.vector_store %arg11[%c0_54, %c0_55], %113 {strides = array<i32>} : memref<8x1xf32, #tpu.memory_space<vmem>>, vector<8x1xf32>,
      %cst_56 = arith.constant 0.000000e+00 : f32
      %115 = vector.broadcast %cst_56 : f32 to vector<8x1xf32>
      %c0_57 = arith.constant 0 : index
      %c0_58 = arith.constant 0 : index
      %116 = vector.load %arg12[%c0_57, %c0_58] : memref<8x1xf32, #tpu.memory_space<vmem>>, vector<8x1xf32>
      tpu.vector_store %arg12[%c0_57, %c0_58], %115 {strides = array<i32>} : memref<8x1xf32, #tpu.memory_space<vmem>>, vector<8x1xf32>,
    } else {
    }
    %c0 = arith.constant 0 : index
    %c0_1 = arith.constant 0 : index
    %c0_2 = arith.constant 0 : index
    %3 = vector.load %arg2[%c0, %c0_1, %c0_2] : memref<8x4x128xbf16, #tpu.memory_space<vmem>>, vector<8x4x128xbf16>
    %4 = arith.extf %3 : vector<8x4x128xbf16> to vector<8x4x128xf32>
    %c0_3 = arith.constant 0 : index
    %c0_4 = arith.constant 0 : index
    %c0_5 = arith.constant 0 : index
    %5 = vector.load %arg4[%c0_3, %c0_4, %c0_5] : memref<8x4x128xbf16, #tpu.memory_space<vmem>>, vector<8x4x128xbf16>
    %6 = arith.extf %5 : vector<8x4x128xbf16> to vector<8x4x128xf32>
    %c0_6 = arith.constant 0 : index
    %c0_7 = arith.constant 0 : index
    %c0_8 = arith.constant 0 : index
    %7 = vector.load %arg6[%c0_6, %c0_7, %c0_8] : memref<1x4x128xf32, #tpu.memory_space<vmem>>, vector<1x4x128xf32>
    %c0_9 = arith.constant 0 : index
    %c0_10 = arith.constant 0 : index
    %c0_11 = arith.constant 0 : index
    %8 = vector.load %arg3[%c0_9, %c0_10, %c0_11] : memref<8x8x128xbf16, #tpu.memory_space<vmem>>, vector<8x8x128xbf16>
    %9 = arith.extf %8 : vector<8x8x128xbf16> to vector<8x8x128xf32>
    %c0_12 = arith.constant 0 : index
    %c0_13 = arith.constant 0 : index
    %10 = vector.load %arg5[%c0_12, %c0_13] : memref<8x128xi32, #tpu.memory_space<vmem>>, vector<8x128xi32>
    %c0_i32_14 = arith.constant 0 : i32
    %11 = vector.broadcast %c0_i32_14 : i32 to vector<8x128xi32>
    %12 = arith.cmpi sgt, %10, %11 : vector<8x128xi32>
    %13 = arith.extui %12 : vector<8x128xi1> to vector<8x128xi32>
    %14 = arith.sitofp %13 : vector<8x128xi32> to vector<8x128xf32>
    %c0_15 = arith.constant 0 : index
    %c0_16 = arith.constant 0 : index
    %15 = vector.load %arg10[%c0_15, %c0_16] : memref<8x1xf32, #tpu.memory_space<vmem>>, vector<8x1xf32>
    %cst = arith.constant dense<0.000000e+00> : vector<8xf32>
    %16 = vector.multi_reduction <add>, %14, %cst [1] : vector<8x128xf32> to vector<8xf32>
    %17 = vector.shape_cast %16 : vector<8xf32> to vector<8x1xf32>
    %18 = arith.addf %15, %17 : vector<8x1xf32>
    %c0_17 = arith.constant 0 : index
    %c0_18 = arith.constant 0 : index
    %19 = vector.load %arg10[%c0_17, %c0_18] : memref<8x1xf32, #tpu.memory_space<vmem>>, vector<8x1xf32>
    tpu.vector_store %arg10[%c0_17, %c0_18], %18 {strides = array<i32>} : memref<8x1xf32, #tpu.memory_space<vmem>>, vector<8x1xf32>,
    %20 = vector.extract_strided_slice %6 {offsets = [0, 0, 0], sizes = [8, 2, 128], strides = [1, 1, 1]} : vector<8x4x128xf32> to vector<8x2x128xf32>
    %21 = vector.extract_strided_slice %7 {offsets = [0, 0, 0], sizes = [1, 2, 128], strides = [1, 1, 1]} : vector<1x4x128xf32> to vector<1x2x128xf32>
    %22 = vector.broadcast %21 : vector<1x2x128xf32> to vector<8x2x128xf32>
    %23 = arith.subf %20, %22 : vector<8x2x128xf32>
    %cst_19 = arith.constant 1.000000e+01 : f32
    %24 = vector.broadcast %cst_19 : f32 to vector<8x2x128xf32>
    %25 = arith.mulf %24, %23 : vector<8x2x128xf32>
    %26 = vector.extract_strided_slice %7 {offsets = [0, 2, 0], sizes = [1, 2, 128], strides = [1, 1, 1]} : vector<1x4x128xf32> to vector<1x2x128xf32>
    %27 = vector.broadcast %26 : vector<1x2x128xf32> to vector<8x2x128xf32>
    %28 = arith.mulf %25, %27 : vector<8x2x128xf32>
    %29 = vector.extract_strided_slice %6 {offsets = [0, 2, 0], sizes = [8, 2, 128], strides = [1, 1, 1]} : vector<8x4x128xf32> to vector<8x2x128xf32>
    %30 = vector.extract_strided_slice %7 {offsets = [0, 2, 0], sizes = [1, 2, 128], strides = [1, 1, 1]} : vector<1x4x128xf32> to vector<1x2x128xf32>
    %31 = vector.broadcast %30 : vector<1x2x128xf32> to vector<8x2x128xf32>
    %32 = arith.mulf %29, %31 : vector<8x2x128xf32>
    %33 = math.log %32 : vector<8x2x128xf32>
    %cst_20 = arith.constant 5.000000e+00 : f32
    %34 = vector.broadcast %cst_20 : f32 to vector<8x2x128xf32>
    %35 = arith.mulf %34, %33 : vector<8x2x128xf32>
    %36 = vector.extract_strided_slice %4 {offsets = [0, 0, 0], sizes = [8, 2, 128], strides = [1, 1, 1]} : vector<8x4x128xf32> to vector<8x2x128xf32>
    %37 = arith.subf %36, %28 : vector<8x2x128xf32>
    %38 = math.absf %37 : vector<8x2x128xf32>
    %cst_21 = arith.constant 1.000000e+00 : f32
    %39 = vector.broadcast %cst_21 : f32 to vector<8x2x128xf32>
    %40 = arith.cmpf olt, %38, %39 : vector<8x2x128xf32>
    %cst_22 = arith.constant 5.000000e-01 : f32
    %41 = vector.broadcast %cst_22 : f32 to vector<8x2x128xf32>
    %42 = arith.mulf %41, %37 : vector<8x2x128xf32>
    %43 = arith.mulf %42, %37 : vector<8x2x128xf32>
    %cst_23 = arith.constant 5.000000e-01 : f32
    %44 = vector.broadcast %cst_23 : f32 to vector<8x2x128xf32>
    %45 = arith.subf %38, %44 : vector<8x2x128xf32>
    %46 = arith.select %40, %43, %45 : vector<8x2x128xi1>, vector<8x2x128xf32>
    %cst_24 = arith.constant dense<0.000000e+00> : vector<8x128xf32>
    %47 = vector.multi_reduction <add>, %46, %cst_24 [1] : vector<8x2x128xf32> to vector<8x128xf32>
    %48 = vector.extract_strided_slice %4 {offsets = [0, 2, 0], sizes = [8, 2, 128], strides = [1, 1, 1]} : vector<8x4x128xf32> to vector<8x2x128xf32>
    %49 = arith.subf %48, %35 : vector<8x2x128xf32>
    %50 = math.absf %49 : vector<8x2x128xf32>
    %cst_25 = arith.constant 1.000000e+00 : f32
    %51 = vector.broadcast %cst_25 : f32 to vector<8x2x128xf32>
    %52 = arith.cmpf olt, %50, %51 : vector<8x2x128xf32>
    %cst_26 = arith.constant 5.000000e-01 : f32
    %53 = vector.broadcast %cst_26 : f32 to vector<8x2x128xf32>
    %54 = arith.mulf %53, %49 : vector<8x2x128xf32>
    %55 = arith.mulf %54, %49 : vector<8x2x128xf32>
    %cst_27 = arith.constant 5.000000e-01 : f32
    %56 = vector.broadcast %cst_27 : f32 to vector<8x2x128xf32>
    %57 = arith.subf %50, %56 : vector<8x2x128xf32>
    %58 = arith.select %52, %55, %57 : vector<8x2x128xi1>, vector<8x2x128xf32>
    %cst_28 = arith.constant dense<0.000000e+00> : vector<8x128xf32>
    %59 = vector.multi_reduction <add>, %58, %cst_28 [1] : vector<8x2x128xf32> to vector<8x128xf32>
    %60 = arith.addf %47, %59 : vector<8x128xf32>
    %c0_29 = arith.constant 0 : index
    %c0_30 = arith.constant 0 : index
    %61 = vector.load %arg11[%c0_29, %c0_30] : memref<8x1xf32, #tpu.memory_space<vmem>>, vector<8x1xf32>
    %62 = arith.mulf %14, %60 : vector<8x128xf32>
    %cst_31 = arith.constant dense<0.000000e+00> : vector<8xf32>
    %63 = vector.multi_reduction <add>, %62, %cst_31 [1] : vector<8x128xf32> to vector<8xf32>
    %64 = vector.shape_cast %63 : vector<8xf32> to vector<8x1xf32>
    %65 = arith.addf %61, %64 : vector<8x1xf32>
    %c0_32 = arith.constant 0 : index
    %c0_33 = arith.constant 0 : index
    %66 = vector.load %arg11[%c0_32, %c0_33] : memref<8x1xf32, #tpu.memory_space<vmem>>, vector<8x1xf32>
    tpu.vector_store %arg11[%c0_32, %c0_33], %65 {strides = array<i32>} : memref<8x1xf32, #tpu.memory_space<vmem>>, vector<8x1xf32>,
    %cst_34 = arith.constant dense<0xFF800000> : vector<8x128xf32>
    %67 = vector.multi_reduction <maximumf>, %9, %cst_34 [1] : vector<8x8x128xf32> to vector<8x128xf32>
    %68 = vector.shape_cast %67 : vector<8x128xf32> to vector<8x1x128xf32>
    %69 = vector.broadcast %68 : vector<8x1x128xf32> to vector<8x8x128xf32>
    %70 = arith.subf %9, %69 : vector<8x8x128xf32>
    %71 = math.exp %70 : vector<8x8x128xf32>
    %cst_35 = arith.constant dense<0.000000e+00> : vector<8x128xf32>
    %72 = vector.multi_reduction <add>, %71, %cst_35 [1] : vector<8x8x128xf32> to vector<8x128xf32>
    %73 = math.log %72 : vector<8x128xf32>
    %74 = arith.addf %67, %73 : vector<8x128xf32>
    %75 = tpu.iota {dimensions = array<i32: 1>} : vector<8x8x128xi32>
    %76 = vector.shape_cast %10 : vector<8x128xi32> to vector<8x1x128xi32>
    %77 = vector.broadcast %76 : vector<8x1x128xi32> to vector<8x8x128xi32>
    %78 = arith.cmpi eq, %75, %77 : vector<8x8x128xi32>
    %cst_36 = arith.constant 0.000000e+00 : f32
    %79 = vector.broadcast %cst_36 : f32 to vector<8x8x128xf32>
    %80 = arith.select %78, %9, %79 : vector<8x8x128xi1>, vector<8x8x128xf32>
    %cst_37 = arith.constant dense<0.000000e+00> : vector<8x128xf32>
    %81 = vector.multi_reduction <add>, %80, %cst_37 [1] : vector<8x8x128xf32> to vector<8x128xf32>
    %82 = arith.subf %74, %81 : vector<8x128xf32>
    %c128_i32 = arith.constant 128 : i32
    %83 = arith.muli %arg1, %c128_i32 : i32
    %84 = tpu.iota {dimensions = array<i32: 1>} : vector<8x128xi32>
    %85 = vector.broadcast %83 : i32 to vector<8x128xi32>
    %86 = arith.addi %85, %84 : vector<8x128xi32>
    %c300_i32 = arith.constant 300 : i32
    %87 = vector.broadcast %c300_i32 : i32 to vector<8x128xi32>
    %88 = arith.cmpi slt, %86, %87 : vector<8x128xi32>
    %cst_38 = arith.constant 0.000000e+00 : f32
    %89 = vector.broadcast %cst_38 : f32 to vector<8x128xf32>
    %90 = arith.select %88, %82, %89 : vector<8x128xi1>, vector<8x128xf32>
    %cst_39 = arith.constant 0.000000e+00 : f32
    %91 = vector.broadcast %cst_39 : f32 to vector<8x128xf32>
    %92 = arith.select %12, %91, %90 : vector<8x128xi1>, vector<8x128xf32>
    %93 = math.absf %92 : vector<8x128xf32>
    %c0_40 = arith.constant 0 : index
    %c0_41 = arith.constant 0 : index
    %94 = vector.load %arg12[%c0_40, %c0_41] : memref<8x1xf32, #tpu.memory_space<vmem>>, vector<8x1xf32>
    %95 = arith.mulf %90, %14 : vector<8x128xf32>
    %cst_42 = arith.constant dense<0.000000e+00> : vector<8xf32>
    %96 = vector.multi_reduction <add>, %95, %cst_42 [1] : vector<8x128xf32> to vector<8xf32>
    %97 = vector.shape_cast %96 : vector<8xf32> to vector<8x1xf32>
    %98 = arith.addf %94, %97 : vector<8x1xf32>
    %c0_43 = arith.constant 0 : index
    %c0_44 = arith.constant 0 : index
    %99 = vector.load %arg12[%c0_43, %c0_44] : memref<8x1xf32, #tpu.memory_space<vmem>>, vector<8x1xf32>
    tpu.vector_store %arg12[%c0_43, %c0_44], %98 {strides = array<i32>} : memref<8x1xf32, #tpu.memory_space<vmem>>, vector<8x1xf32>,
    %100 = arith.index_cast %arg1 : i32 to index
    %c0_45 = arith.constant 0 : index
    %c0_46 = arith.constant 0 : index
    %101 = vector.load %arg8[%100, %c0_45, %c0_46] : memref<3x8x128xf32, #tpu.memory_space<vmem>>, vector<1x8x128xf32>
    %102 = vector.shape_cast %101 : vector<1x8x128xf32> to vector<8x128xf32>
    %103 = vector.shape_cast %90 : vector<8x128xf32> to vector<1x8x128xf32>
    tpu.vector_store %arg8[%100, %c0_45, %c0_46], %103 {strides = array<i32>} : memref<3x8x128xf32, #tpu.memory_space<vmem>>, vector<1x8x128xf32>,
    %104 = arith.index_cast %arg1 : i32 to index
    %c0_47 = arith.constant 0 : index
    %c0_48 = arith.constant 0 : index
    %105 = vector.load %arg9[%104, %c0_47, %c0_48] : memref<3x8x128xf32, #tpu.memory_space<vmem>>, vector<1x8x128xf32>
    %106 = vector.shape_cast %105 : vector<1x8x128xf32> to vector<8x128xf32>
    %107 = vector.shape_cast %93 : vector<8x128xf32> to vector<1x8x128xf32>
    tpu.vector_store %arg9[%104, %c0_47, %c0_48], %107 {strides = array<i32>} : memref<3x8x128xf32, #tpu.memory_space<vmem>>, vector<1x8x128xf32>,
    %c2_i32 = arith.constant 2 : i32
    %108 = arith.cmpi eq, %arg1, %c2_i32 : i32
    %109 = arith.extui %108 : i1 to i32
    %c0_i32_49 = arith.constant 0 : i32
    %110 = arith.cmpi ne, %109, %c0_i32_49 : i32
    scf.if %110 {
      %c0_50 = arith.constant 0 : index
      %c0_51 = arith.constant 0 : index
      %111 = vector.load %arg10[%c0_50, %c0_51] : memref<8x1xf32, #tpu.memory_space<vmem>>, vector<8x1xf32>
      %cst_52 = arith.constant 3.000000e+00 : f32
      %112 = vector.broadcast %cst_52 : f32 to vector<8x1xf32>
      %113 = arith.mulf %112, %111 : vector<8x1xf32>
      %cst_53 = arith.constant 3.000000e+02 : f32
      %114 = vector.broadcast %cst_53 : f32 to vector<8x1xf32>
      %115 = arith.minimumf %113, %114 : vector<8x1xf32>
      %c0_54 = arith.constant 0 : index
      %c0_55 = arith.constant 0 : index
      %c0_56 = arith.constant 0 : index
      %116 = vector.load %arg8[%c0_54, %c0_55, %c0_56] : memref<3x8x128xf32, #tpu.memory_space<vmem>>, vector<3x8x128xf32>
      %c0_57 = arith.constant 0 : index
      %c0_58 = arith.constant 0 : index
      %c0_59 = arith.constant 0 : index
      %117 = vector.load %arg9[%c0_57, %c0_58, %c0_59] : memref<3x8x128xf32, #tpu.memory_space<vmem>>, vector<3x8x128xf32>
      %118 = tpu.bitcast %117 : vector<3x8x128xf32> -> vector<3x8x128xi32>
      %c0_i32_60 = arith.constant 0 : i32
      %119 = vector.broadcast %c0_i32_60 : i32 to vector<8x1xi32>
      %c2139095039_i32 = arith.constant 2139095039 : i32
      %120 = vector.broadcast %c2139095039_i32 : i32 to vector<8x1xi32>
      %c0_i32_61 = arith.constant 0 : i32
      %121 = arith.subi %120, %119 : vector<8x1xi32>
      %c1_i32 = arith.constant 1 : i32
      %122 = vector.broadcast %c1_i32 : i32 to vector<8x1xi32>
      %123 = arith.addi %121, %122 : vector<8x1xi32>
      %c1_i32_62 = arith.constant 1 : i32
      %124 = vector.broadcast %c1_i32_62 : i32 to vector<8x1xi32>
      %125 = arith.shrsi %123, %124 : vector<8x1xi32>
      %126 = arith.addi %119, %125 : vector<8x1xi32>
      %127 = vector.shape_cast %126 : vector<8x1xi32> to vector<1x8x1xi32>
      %128 = vector.broadcast %127 : vector<1x8x1xi32> to vector<3x8x128xi32>
      %129 = arith.cmpi sge, %118, %128 : vector<3x8x128xi32>
      %cst_63 = arith.constant 1.000000e+00 : f32
      %cst_64 = arith.constant 0.000000e+00 : f32
      %130 = vector.broadcast %cst_63 : f32 to vector<3x8x128xf32>
      %131 = vector.broadcast %cst_64 : f32 to vector<3x8x128xf32>
      %132 = arith.select %129, %130, %131 : vector<3x8x128xi1>, vector<3x8x128xf32>
      %cst_65 = arith.constant dense<0.000000e+00> : vector<8x128xf32>
      %133 = vector.multi_reduction <add>, %132, %cst_65 [0] : vector<3x8x128xf32> to vector<8x128xf32>
      %cst_66 = arith.constant dense<0.000000e+00> : vector<8xf32>
      %134 = vector.multi_reduction <add>, %133, %cst_66 [1] : vector<8x128xf32> to vector<8xf32>
      %135 = vector.shape_cast %134 : vector<8xf32> to vector<8x1xf32>
      %136 = arith.cmpf oge, %135, %115 : vector<8x1xf32>
      %137 = arith.select %136, %126, %119 : vector<8x1xi1>, vector<8x1xi32>
      %c1_i32_67 = arith.constant 1 : i32
      %138 = vector.broadcast %c1_i32_67 : i32 to vector<8x1xi32>
      %139 = arith.subi %126, %138 : vector<8x1xi32>
      %140 = arith.select %136, %120, %139 : vector<8x1xi1>, vector<8x1xi32>
      %c1_i32_68 = arith.constant 1 : i32
      %141 = arith.subi %140, %137 : vector<8x1xi32>
      %c1_i32_69 = arith.constant 1 : i32
      %142 = vector.broadcast %c1_i32_69 : i32 to vector<8x1xi32>
      %143 = arith.addi %141, %142 : vector<8x1xi32>
      %c1_i32_70 = arith.constant 1 : i32
      %144 = vector.broadcast %c1_i32_70 : i32 to vector<8x1xi32>
      %145 = arith.shrsi %143, %144 : vector<8x1xi32>
      %146 = arith.addi %137, %145 : vector<8x1xi32>
      %147 = vector.shape_cast %146 : vector<8x1xi32> to vector<1x8x1xi32>
      %148 = vector.broadcast %147 : vector<1x8x1xi32> to vector<3x8x128xi32>
      %149 = arith.cmpi sge, %118, %148 : vector<3x8x128xi32>
      %cst_71 = arith.constant 1.000000e+00 : f32
      %cst_72 = arith.constant 0.000000e+00 : f32
      %150 = vector.broadcast %cst_71 : f32 to vector<3x8x128xf32>
      %151 = vector.broadcast %cst_72 : f32 to vector<3x8x128xf32>
      %152 = arith.select %149, %150, %151 : vector<3x8x128xi1>, vector<3x8x128xf32>
      %cst_73 = arith.constant dense<0.000000e+00> : vector<8x128xf32>
      %153 = vector.multi_reduction <add>, %152, %cst_73 [0] : vector<3x8x128xf32> to vector<8x128xf32>
      %cst_74 = arith.constant dense<0.000000e+00> : vector<8xf32>
      %154 = vector.multi_reduction <add>, %153, %cst_74 [1] : vector<8x128xf32> to vector<8xf32>
      %155 = vector.shape_cast %154 : vector<8xf32> to vector<8x1xf32>
      %156 = arith.cmpf oge, %155, %115 : vector<8x1xf32>
      %157 = arith.select %156, %146, %137 : vector<8x1xi1>, vector<8x1xi32>
      %c1_i32_75 = arith.constant 1 : i32
      %158 = vector.broadcast %c1_i32_75 : i32 to vector<8x1xi32>
      %159 = arith.subi %146, %158 : vector<8x1xi32>
      %160 = arith.select %156, %140, %159 : vector<8x1xi1>, vector<8x1xi32>
      %c2_i32_76 = arith.constant 2 : i32
      %161 = arith.subi %160, %157 : vector<8x1xi32>
      %c1_i32_77 = arith.constant 1 : i32
      %162 = vector.broadcast %c1_i32_77 : i32 to vector<8x1xi32>
      %163 = arith.addi %161, %162 : vector<8x1xi32>
      %c1_i32_78 = arith.constant 1 : i32
      %164 = vector.broadcast %c1_i32_78 : i32 to vector<8x1xi32>
      %165 = arith.shrsi %163, %164 : vector<8x1xi32>
      %166 = arith.addi %157, %165 : vector<8x1xi32>
      %167 = vector.shape_cast %166 : vector<8x1xi32> to vector<1x8x1xi32>
      %168 = vector.broadcast %167 : vector<1x8x1xi32> to vector<3x8x128xi32>
      %169 = arith.cmpi sge, %118, %168 : vector<3x8x128xi32>
      %cst_79 = arith.constant 1.000000e+00 : f32
      %cst_80 = arith.constant 0.000000e+00 : f32
      %170 = vector.broadcast %cst_79 : f32 to vector<3x8x128xf32>
      %171 = vector.broadcast %cst_80 : f32 to vector<3x8x128xf32>
      %172 = arith.select %169, %170, %171 : vector<3x8x128xi1>, vector<3x8x128xf32>
      %cst_81 = arith.constant dense<0.000000e+00> : vector<8x128xf32>
      %173 = vector.multi_reduction <add>, %172, %cst_81 [0] : vector<3x8x128xf32> to vector<8x128xf32>
      %cst_82 = arith.constant dense<0.000000e+00> : vector<8xf32>
      %174 = vector.multi_reduction <add>, %173, %cst_82 [1] : vector<8x128xf32> to vector<8xf32>
      %175 = vector.shape_cast %174 : vector<8xf32> to vector<8x1xf32>
      %176 = arith.cmpf oge, %175, %115 : vector<8x1xf32>
      %177 = arith.select %176, %166, %157 : vector<8x1xi1>, vector<8x1xi32>
      %c1_i32_83 = arith.constant 1 : i32
      %178 = vector.broadcast %c1_i32_83 : i32 to vector<8x1xi32>
      %179 = arith.subi %166, %178 : vector<8x1xi32>
      %180 = arith.select %176, %160, %179 : vector<8x1xi1>, vector<8x1xi32>
      %c3_i32 = arith.constant 3 : i32
      %181 = arith.subi %180, %177 : vector<8x1xi32>
      %c1_i32_84 = arith.constant 1 : i32
      %182 = vector.broadcast %c1_i32_84 : i32 to vector<8x1xi32>
      %183 = arith.addi %181, %182 : vector<8x1xi32>
      %c1_i32_85 = arith.constant 1 : i32
      %184 = vector.broadcast %c1_i32_85 : i32 to vector<8x1xi32>
      %185 = arith.shrsi %183, %184 : vector<8x1xi32>
      %186 = arith.addi %177, %185 : vector<8x1xi32>
      %187 = vector.shape_cast %186 : vector<8x1xi32> to vector<1x8x1xi32>
      %188 = vector.broadcast %187 : vector<1x8x1xi32> to vector<3x8x128xi32>
      %189 = arith.cmpi sge, %118, %188 : vector<3x8x128xi32>
      %cst_86 = arith.constant 1.000000e+00 : f32
      %cst_87 = arith.constant 0.000000e+00 : f32
      %190 = vector.broadcast %cst_86 : f32 to vector<3x8x128xf32>
      %191 = vector.broadcast %cst_87 : f32 to vector<3x8x128xf32>
      %192 = arith.select %189, %190, %191 : vector<3x8x128xi1>, vector<3x8x128xf32>
      %cst_88 = arith.constant dense<0.000000e+00> : vector<8x128xf32>
      %193 = vector.multi_reduction <add>, %192, %cst_88 [0] : vector<3x8x128xf32> to vector<8x128xf32>
      %cst_89 = arith.constant dense<0.000000e+00> : vector<8xf32>
      %194 = vector.multi_reduction <add>, %193, %cst_89 [1] : vector<8x128xf32> to vector<8xf32>
      %195 = vector.shape_cast %194 : vector<8xf32> to vector<8x1xf32>
      %196 = arith.cmpf oge, %195, %115 : vector<8x1xf32>
      %197 = arith.select %196, %186, %177 : vector<8x1xi1>, vector<8x1xi32>
      %c1_i32_90 = arith.constant 1 : i32
      %198 = vector.broadcast %c1_i32_90 : i32 to vector<8x1xi32>
      %199 = arith.subi %186, %198 : vector<8x1xi32>
      %200 = arith.select %196, %180, %199 : vector<8x1xi1>, vector<8x1xi32>
      %c4_i32 = arith.constant 4 : i32
      %201 = arith.subi %200, %197 : vector<8x1xi32>
      %c1_i32_91 = arith.constant 1 : i32
      %202 = vector.broadcast %c1_i32_91 : i32 to vector<8x1xi32>
      %203 = arith.addi %201, %202 : vector<8x1xi32>
      %c1_i32_92 = arith.constant 1 : i32
      %204 = vector.broadcast %c1_i32_92 : i32 to vector<8x1xi32>
      %205 = arith.shrsi %203, %204 : vector<8x1xi32>
      %206 = arith.addi %197, %205 : vector<8x1xi32>
      %207 = vector.shape_cast %206 : vector<8x1xi32> to vector<1x8x1xi32>
      %208 = vector.broadcast %207 : vector<1x8x1xi32> to vector<3x8x128xi32>
      %209 = arith.cmpi sge, %118, %208 : vector<3x8x128xi32>
      %cst_93 = arith.constant 1.000000e+00 : f32
      %cst_94 = arith.constant 0.000000e+00 : f32
      %210 = vector.broadcast %cst_93 : f32 to vector<3x8x128xf32>
      %211 = vector.broadcast %cst_94 : f32 to vector<3x8x128xf32>
      %212 = arith.select %209, %210, %211 : vector<3x8x128xi1>, vector<3x8x128xf32>
      %cst_95 = arith.constant dense<0.000000e+00> : vector<8x128xf32>
      %213 = vector.multi_reduction <add>, %212, %cst_95 [0] : vector<3x8x128xf32> to vector<8x128xf32>
      %cst_96 = arith.constant dense<0.000000e+00> : vector<8xf32>
      %214 = vector.multi_reduction <add>, %213, %cst_96 [1] : vector<8x128xf32> to vector<8xf32>
      %215 = vector.shape_cast %214 : vector<8xf32> to vector<8x1xf32>
      %216 = arith.cmpf oge, %215, %115 : vector<8x1xf32>
      %217 = arith.select %216, %206, %197 : vector<8x1xi1>, vector<8x1xi32>
      %c1_i32_97 = arith.constant 1 : i32
      %218 = vector.broadcast %c1_i32_97 : i32 to vector<8x1xi32>
      %219 = arith.subi %206, %218 : vector<8x1xi32>
      %220 = arith.select %216, %200, %219 : vector<8x1xi1>, vector<8x1xi32>
      %c5_i32 = arith.constant 5 : i32
      %221 = arith.subi %220, %217 : vector<8x1xi32>
      %c1_i32_98 = arith.constant 1 : i32
      %222 = vector.broadcast %c1_i32_98 : i32 to vector<8x1xi32>
      %223 = arith.addi %221, %222 : vector<8x1xi32>
      %c1_i32_99 = arith.constant 1 : i32
      %224 = vector.broadcast %c1_i32_99 : i32 to vector<8x1xi32>
      %225 = arith.shrsi %223, %224 : vector<8x1xi32>
      %226 = arith.addi %217, %225 : vector<8x1xi32>
      %227 = vector.shape_cast %226 : vector<8x1xi32> to vector<1x8x1xi32>
      %228 = vector.broadcast %227 : vector<1x8x1xi32> to vector<3x8x128xi32>
      %229 = arith.cmpi sge, %118, %228 : vector<3x8x128xi32>
      %cst_100 = arith.constant 1.000000e+00 : f32
      %cst_101 = arith.constant 0.000000e+00 : f32
      %230 = vector.broadcast %cst_100 : f32 to vector<3x8x128xf32>
      %231 = vector.broadcast %cst_101 : f32 to vector<3x8x128xf32>
      %232 = arith.select %229, %230, %231 : vector<3x8x128xi1>, vector<3x8x128xf32>
      %cst_102 = arith.constant dense<0.000000e+00> : vector<8x128xf32>
      %233 = vector.multi_reduction <add>, %232, %cst_102 [0] : vector<3x8x128xf32> to vector<8x128xf32>
      %cst_103 = arith.constant dense<0.000000e+00> : vector<8xf32>
      %234 = vector.multi_reduction <add>, %233, %cst_103 [1] : vector<8x128xf32> to vector<8xf32>
      %235 = vector.shape_cast %234 : vector<8xf32> to vector<8x1xf32>
      %236 = arith.cmpf oge, %235, %115 : vector<8x1xf32>
      %237 = arith.select %236, %226, %217 : vector<8x1xi1>, vector<8x1xi32>
      %c1_i32_104 = arith.constant 1 : i32
      %238 = vector.broadcast %c1_i32_104 : i32 to vector<8x1xi32>
      %239 = arith.subi %226, %238 : vector<8x1xi32>
      %240 = arith.select %236, %220, %239 : vector<8x1xi1>, vector<8x1xi32>
      %c6_i32 = arith.constant 6 : i32
      %241 = arith.subi %240, %237 : vector<8x1xi32>
      %c1_i32_105 = arith.constant 1 : i32
      %242 = vector.broadcast %c1_i32_105 : i32 to vector<8x1xi32>
      %243 = arith.addi %241, %242 : vector<8x1xi32>
      %c1_i32_106 = arith.constant 1 : i32
      %244 = vector.broadcast %c1_i32_106 : i32 to vector<8x1xi32>
      %245 = arith.shrsi %243, %244 : vector<8x1xi32>
      %246 = arith.addi %237, %245 : vector<8x1xi32>
      %247 = vector.shape_cast %246 : vector<8x1xi32> to vector<1x8x1xi32>
      %248 = vector.broadcast %247 : vector<1x8x1xi32> to vector<3x8x128xi32>
      %249 = arith.cmpi sge, %118, %248 : vector<3x8x128xi32>
      %cst_107 = arith.constant 1.000000e+00 : f32
      %cst_108 = arith.constant 0.000000e+00 : f32
      %250 = vector.broadcast %cst_107 : f32 to vector<3x8x128xf32>
      %251 = vector.broadcast %cst_108 : f32 to vector<3x8x128xf32>
      %252 = arith.select %249, %250, %251 : vector<3x8x128xi1>, vector<3x8x128xf32>
      %cst_109 = arith.constant dense<0.000000e+00> : vector<8x128xf32>
      %253 = vector.multi_reduction <add>, %252, %cst_109 [0] : vector<3x8x128xf32> to vector<8x128xf32>
      %cst_110 = arith.constant dense<0.000000e+00> : vector<8xf32>
      %254 = vector.multi_reduction <add>, %253, %cst_110 [1] : vector<8x128xf32> to vector<8xf32>
      %255 = vector.shape_cast %254 : vector<8xf32> to vector<8x1xf32>
      %256 = arith.cmpf oge, %255, %115 : vector<8x1xf32>
      %257 = arith.select %256, %246, %237 : vector<8x1xi1>, vector<8x1xi32>
      %c1_i32_111 = arith.constant 1 : i32
      %258 = vector.broadcast %c1_i32_111 : i32 to vector<8x1xi32>
      %259 = arith.subi %246, %258 : vector<8x1xi32>
      %260 = arith.select %256, %240, %259 : vector<8x1xi1>, vector<8x1xi32>
      %c7_i32 = arith.constant 7 : i32
      %261 = arith.subi %260, %257 : vector<8x1xi32>
      %c1_i32_112 = arith.constant 1 : i32
      %262 = vector.broadcast %c1_i32_112 : i32 to vector<8x1xi32>
      %263 = arith.addi %261, %262 : vector<8x1xi32>
      %c1_i32_113 = arith.constant 1 : i32
      %264 = vector.broadcast %c1_i32_113 : i32 to vector<8x1xi32>
      %265 = arith.shrsi %263, %264 : vector<8x1xi32>
      %266 = arith.addi %257, %265 : vector<8x1xi32>
      %267 = vector.shape_cast %266 : vector<8x1xi32> to vector<1x8x1xi32>
      %268 = vector.broadcast %267 : vector<1x8x1xi32> to vector<3x8x128xi32>
      %269 = arith.cmpi sge, %118, %268 : vector<3x8x128xi32>
      %cst_114 = arith.constant 1.000000e+00 : f32
      %cst_115 = arith.constant 0.000000e+00 : f32
      %270 = vector.broadcast %cst_114 : f32 to vector<3x8x128xf32>
      %271 = vector.broadcast %cst_115 : f32 to vector<3x8x128xf32>
      %272 = arith.select %269, %270, %271 : vector<3x8x128xi1>, vector<3x8x128xf32>
      %cst_116 = arith.constant dense<0.000000e+00> : vector<8x128xf32>
      %273 = vector.multi_reduction <add>, %272, %cst_116 [0] : vector<3x8x128xf32> to vector<8x128xf32>
      %cst_117 = arith.constant dense<0.000000e+00> : vector<8xf32>
      %274 = vector.multi_reduction <add>, %273, %cst_117 [1] : vector<8x128xf32> to vector<8xf32>
      %275 = vector.shape_cast %274 : vector<8xf32> to vector<8x1xf32>
      %276 = arith.cmpf oge, %275, %115 : vector<8x1xf32>
      %277 = arith.select %276, %266, %257 : vector<8x1xi1>, vector<8x1xi32>
      %c1_i32_118 = arith.constant 1 : i32
      %278 = vector.broadcast %c1_i32_118 : i32 to vector<8x1xi32>
      %279 = arith.subi %266, %278 : vector<8x1xi32>
      %280 = arith.select %276, %260, %279 : vector<8x1xi1>, vector<8x1xi32>
      %c8_i32 = arith.constant 8 : i32
      %281 = arith.subi %280, %277 : vector<8x1xi32>
      %c1_i32_119 = arith.constant 1 : i32
      %282 = vector.broadcast %c1_i32_119 : i32 to vector<8x1xi32>
      %283 = arith.addi %281, %282 : vector<8x1xi32>
      %c1_i32_120 = arith.constant 1 : i32
      %284 = vector.broadcast %c1_i32_120 : i32 to vector<8x1xi32>
      %285 = arith.shrsi %283, %284 : vector<8x1xi32>
      %286 = arith.addi %277, %285 : vector<8x1xi32>
      %287 = vector.shape_cast %286 : vector<8x1xi32> to vector<1x8x1xi32>
      %288 = vector.broadcast %287 : vector<1x8x1xi32> to vector<3x8x128xi32>
      %289 = arith.cmpi sge, %118, %288 : vector<3x8x128xi32>
      %cst_121 = arith.constant 1.000000e+00 : f32
      %cst_122 = arith.constant 0.000000e+00 : f32
      %290 = vector.broadcast %cst_121 : f32 to vector<3x8x128xf32>
      %291 = vector.broadcast %cst_122 : f32 to vector<3x8x128xf32>
      %292 = arith.select %289, %290, %291 : vector<3x8x128xi1>, vector<3x8x128xf32>
      %cst_123 = arith.constant dense<0.000000e+00> : vector<8x128xf32>
      %293 = vector.multi_reduction <add>, %292, %cst_123 [0] : vector<3x8x128xf32> to vector<8x128xf32>
      %cst_124 = arith.constant dense<0.000000e+00> : vector<8xf32>
      %294 = vector.multi_reduction <add>, %293, %cst_124 [1] : vector<8x128xf32> to vector<8xf32>
      %295 = vector.shape_cast %294 : vector<8xf32> to vector<8x1xf32>
      %296 = arith.cmpf oge, %295, %115 : vector<8x1xf32>
      %297 = arith.select %296, %286, %277 : vector<8x1xi1>, vector<8x1xi32>
      %c1_i32_125 = arith.constant 1 : i32
      %298 = vector.broadcast %c1_i32_125 : i32 to vector<8x1xi32>
      %299 = arith.subi %286, %298 : vector<8x1xi32>
      %300 = arith.select %296, %280, %299 : vector<8x1xi1>, vector<8x1xi32>
      %c9_i32 = arith.constant 9 : i32
      %301 = arith.subi %300, %297 : vector<8x1xi32>
      %c1_i32_126 = arith.constant 1 : i32
      %302 = vector.broadcast %c1_i32_126 : i32 to vector<8x1xi32>
      %303 = arith.addi %301, %302 : vector<8x1xi32>
      %c1_i32_127 = arith.constant 1 : i32
      %304 = vector.broadcast %c1_i32_127 : i32 to vector<8x1xi32>
      %305 = arith.shrsi %303, %304 : vector<8x1xi32>
      %306 = arith.addi %297, %305 : vector<8x1xi32>
      %307 = vector.shape_cast %306 : vector<8x1xi32> to vector<1x8x1xi32>
      %308 = vector.broadcast %307 : vector<1x8x1xi32> to vector<3x8x128xi32>
      %309 = arith.cmpi sge, %118, %308 : vector<3x8x128xi32>
      %cst_128 = arith.constant 1.000000e+00 : f32
      %cst_129 = arith.constant 0.000000e+00 : f32
      %310 = vector.broadcast %cst_128 : f32 to vector<3x8x128xf32>
      %311 = vector.broadcast %cst_129 : f32 to vector<3x8x128xf32>
      %312 = arith.select %309, %310, %311 : vector<3x8x128xi1>, vector<3x8x128xf32>
      %cst_130 = arith.constant dense<0.000000e+00> : vector<8x128xf32>
      %313 = vector.multi_reduction <add>, %312, %cst_130 [0] : vector<3x8x128xf32> to vector<8x128xf32>
      %cst_131 = arith.constant dense<0.000000e+00> : vector<8xf32>
      %314 = vector.multi_reduction <add>, %313, %cst_131 [1] : vector<8x128xf32> to vector<8xf32>
      %315 = vector.shape_cast %314 : vector<8xf32> to vector<8x1xf32>
      %316 = arith.cmpf oge, %315, %115 : vector<8x1xf32>
      %317 = arith.select %316, %306, %297 : vector<8x1xi1>, vector<8x1xi32>
      %c1_i32_132 = arith.constant 1 : i32
      %318 = vector.broadcast %c1_i32_132 : i32 to vector<8x1xi32>
      %319 = arith.subi %306, %318 : vector<8x1xi32>
      %320 = arith.select %316, %300, %319 : vector<8x1xi1>, vector<8x1xi32>
      %c10_i32 = arith.constant 10 : i32
      %321 = arith.subi %320, %317 : vector<8x1xi32>
      %c1_i32_133 = arith.constant 1 : i32
      %322 = vector.broadcast %c1_i32_133 : i32 to vector<8x1xi32>
      %323 = arith.addi %321, %322 : vector<8x1xi32>
      %c1_i32_134 = arith.constant 1 : i32
      %324 = vector.broadcast %c1_i32_134 : i32 to vector<8x1xi32>
      %325 = arith.shrsi %323, %324 : vector<8x1xi32>
      %326 = arith.addi %317, %325 : vector<8x1xi32>
      %327 = vector.shape_cast %326 : vector<8x1xi32> to vector<1x8x1xi32>
      %328 = vector.broadcast %327 : vector<1x8x1xi32> to vector<3x8x128xi32>
      %329 = arith.cmpi sge, %118, %328 : vector<3x8x128xi32>
      %cst_135 = arith.constant 1.000000e+00 : f32
      %cst_136 = arith.constant 0.000000e+00 : f32
      %330 = vector.broadcast %cst_135 : f32 to vector<3x8x128xf32>
      %331 = vector.broadcast %cst_136 : f32 to vector<3x8x128xf32>
      %332 = arith.select %329, %330, %331 : vector<3x8x128xi1>, vector<3x8x128xf32>
      %cst_137 = arith.constant dense<0.000000e+00> : vector<8x128xf32>
      %333 = vector.multi_reduction <add>, %332, %cst_137 [0] : vector<3x8x128xf32> to vector<8x128xf32>
      %cst_138 = arith.constant dense<0.000000e+00> : vector<8xf32>
      %334 = vector.multi_reduction <add>, %333, %cst_138 [1] : vector<8x128xf32> to vector<8xf32>
      %335 = vector.shape_cast %334 : vector<8xf32> to vector<8x1xf32>
      %336 = arith.cmpf oge, %335, %115 : vector<8x1xf32>
      %337 = arith.select %336, %326, %317 : vector<8x1xi1>, vector<8x1xi32>
      %c1_i32_139 = arith.constant 1 : i32
      %338 = vector.broadcast %c1_i32_139 : i32 to vector<8x1xi32>
      %339 = arith.subi %326, %338 : vector<8x1xi32>
      %340 = arith.select %336, %320, %339 : vector<8x1xi1>, vector<8x1xi32>
      %c11_i32 = arith.constant 11 : i32
      %341 = arith.subi %340, %337 : vector<8x1xi32>
      %c1_i32_140 = arith.constant 1 : i32
      %342 = vector.broadcast %c1_i32_140 : i32 to vector<8x1xi32>
      %343 = arith.addi %341, %342 : vector<8x1xi32>
      %c1_i32_141 = arith.constant 1 : i32
      %344 = vector.broadcast %c1_i32_141 : i32 to vector<8x1xi32>
      %345 = arith.shrsi %343, %344 : vector<8x1xi32>
      %346 = arith.addi %337, %345 : vector<8x1xi32>
      %347 = vector.shape_cast %346 : vector<8x1xi32> to vector<1x8x1xi32>
      %348 = vector.broadcast %347 : vector<1x8x1xi32> to vector<3x8x128xi32>
      %349 = arith.cmpi sge, %118, %348 : vector<3x8x128xi32>
      %cst_142 = arith.constant 1.000000e+00 : f32
      %cst_143 = arith.constant 0.000000e+00 : f32
      %350 = vector.broadcast %cst_142 : f32 to vector<3x8x128xf32>
      %351 = vector.broadcast %cst_143 : f32 to vector<3x8x128xf32>
      %352 = arith.select %349, %350, %351 : vector<3x8x128xi1>, vector<3x8x128xf32>
      %cst_144 = arith.constant dense<0.000000e+00> : vector<8x128xf32>
      %353 = vector.multi_reduction <add>, %352, %cst_144 [0] : vector<3x8x128xf32> to vector<8x128xf32>
      %cst_145 = arith.constant dense<0.000000e+00> : vector<8xf32>
      %354 = vector.multi_reduction <add>, %353, %cst_145 [1] : vector<8x128xf32> to vector<8xf32>
      %355 = vector.shape_cast %354 : vector<8xf32> to vector<8x1xf32>
      %356 = arith.cmpf oge, %355, %115 : vector<8x1xf32>
      %357 = arith.select %356, %346, %337 : vector<8x1xi1>, vector<8x1xi32>
      %c1_i32_146 = arith.constant 1 : i32
      %358 = vector.broadcast %c1_i32_146 : i32 to vector<8x1xi32>
      %359 = arith.subi %346, %358 : vector<8x1xi32>
      %360 = arith.select %356, %340, %359 : vector<8x1xi1>, vector<8x1xi32>
      %c12_i32 = arith.constant 12 : i32
      %361 = arith.subi %360, %357 : vector<8x1xi32>
      %c1_i32_147 = arith.constant 1 : i32
      %362 = vector.broadcast %c1_i32_147 : i32 to vector<8x1xi32>
      %363 = arith.addi %361, %362 : vector<8x1xi32>
      %c1_i32_148 = arith.constant 1 : i32
      %364 = vector.broadcast %c1_i32_148 : i32 to vector<8x1xi32>
      %365 = arith.shrsi %363, %364 : vector<8x1xi32>
      %366 = arith.addi %357, %365 : vector<8x1xi32>
      %367 = vector.shape_cast %366 : vector<8x1xi32> to vector<1x8x1xi32>
      %368 = vector.broadcast %367 : vector<1x8x1xi32> to vector<3x8x128xi32>
      %369 = arith.cmpi sge, %118, %368 : vector<3x8x128xi32>
      %cst_149 = arith.constant 1.000000e+00 : f32
      %cst_150 = arith.constant 0.000000e+00 : f32
      %370 = vector.broadcast %cst_149 : f32 to vector<3x8x128xf32>
      %371 = vector.broadcast %cst_150 : f32 to vector<3x8x128xf32>
      %372 = arith.select %369, %370, %371 : vector<3x8x128xi1>, vector<3x8x128xf32>
      %cst_151 = arith.constant dense<0.000000e+00> : vector<8x128xf32>
      %373 = vector.multi_reduction <add>, %372, %cst_151 [0] : vector<3x8x128xf32> to vector<8x128xf32>
      %cst_152 = arith.constant dense<0.000000e+00> : vector<8xf32>
      %374 = vector.multi_reduction <add>, %373, %cst_152 [1] : vector<8x128xf32> to vector<8xf32>
      %375 = vector.shape_cast %374 : vector<8xf32> to vector<8x1xf32>
      %376 = arith.cmpf oge, %375, %115 : vector<8x1xf32>
      %377 = arith.select %376, %366, %357 : vector<8x1xi1>, vector<8x1xi32>
      %c1_i32_153 = arith.constant 1 : i32
      %378 = vector.broadcast %c1_i32_153 : i32 to vector<8x1xi32>
      %379 = arith.subi %366, %378 : vector<8x1xi32>
      %380 = arith.select %376, %360, %379 : vector<8x1xi1>, vector<8x1xi32>
      %c13_i32 = arith.constant 13 : i32
      %381 = arith.subi %380, %377 : vector<8x1xi32>
      %c1_i32_154 = arith.constant 1 : i32
      %382 = vector.broadcast %c1_i32_154 : i32 to vector<8x1xi32>
      %383 = arith.addi %381, %382 : vector<8x1xi32>
      %c1_i32_155 = arith.constant 1 : i32
      %384 = vector.broadcast %c1_i32_155 : i32 to vector<8x1xi32>
      %385 = arith.shrsi %383, %384 : vector<8x1xi32>
      %386 = arith.addi %377, %385 : vector<8x1xi32>
      %387 = vector.shape_cast %386 : vector<8x1xi32> to vector<1x8x1xi32>
      %388 = vector.broadcast %387 : vector<1x8x1xi32> to vector<3x8x128xi32>
      %389 = arith.cmpi sge, %118, %388 : vector<3x8x128xi32>
      %cst_156 = arith.constant 1.000000e+00 : f32
      %cst_157 = arith.constant 0.000000e+00 : f32
      %390 = vector.broadcast %cst_156 : f32 to vector<3x8x128xf32>
      %391 = vector.broadcast %cst_157 : f32 to vector<3x8x128xf32>
      %392 = arith.select %389, %390, %391 : vector<3x8x128xi1>, vector<3x8x128xf32>
      %cst_158 = arith.constant dense<0.000000e+00> : vector<8x128xf32>
      %393 = vector.multi_reduction <add>, %392, %cst_158 [0] : vector<3x8x128xf32> to vector<8x128xf32>
      %cst_159 = arith.constant dense<0.000000e+00> : vector<8xf32>
      %394 = vector.multi_reduction <add>, %393, %cst_159 [1] : vector<8x128xf32> to vector<8xf32>
      %395 = vector.shape_cast %394 : vector<8xf32> to vector<8x1xf32>
      %396 = arith.cmpf oge, %395, %115 : vector<8x1xf32>
      %397 = arith.select %396, %386, %377 : vector<8x1xi1>, vector<8x1xi32>
      %c1_i32_160 = arith.constant 1 : i32
      %398 = vector.broadcast %c1_i32_160 : i32 to vector<8x1xi32>
      %399 = arith.subi %386, %398 : vector<8x1xi32>
      %400 = arith.select %396, %380, %399 : vector<8x1xi1>, vector<8x1xi32>
      %c14_i32 = arith.constant 14 : i32
      %401 = arith.subi %400, %397 : vector<8x1xi32>
      %c1_i32_161 = arith.constant 1 : i32
      %402 = vector.broadcast %c1_i32_161 : i32 to vector<8x1xi32>
      %403 = arith.addi %401, %402 : vector<8x1xi32>
      %c1_i32_162 = arith.constant 1 : i32
      %404 = vector.broadcast %c1_i32_162 : i32 to vector<8x1xi32>
      %405 = arith.shrsi %403, %404 : vector<8x1xi32>
      %406 = arith.addi %397, %405 : vector<8x1xi32>
      %407 = vector.shape_cast %406 : vector<8x1xi32> to vector<1x8x1xi32>
      %408 = vector.broadcast %407 : vector<1x8x1xi32> to vector<3x8x128xi32>
      %409 = arith.cmpi sge, %118, %408 : vector<3x8x128xi32>
      %cst_163 = arith.constant 1.000000e+00 : f32
      %cst_164 = arith.constant 0.000000e+00 : f32
      %410 = vector.broadcast %cst_163 : f32 to vector<3x8x128xf32>
      %411 = vector.broadcast %cst_164 : f32 to vector<3x8x128xf32>
      %412 = arith.select %409, %410, %411 : vector<3x8x128xi1>, vector<3x8x128xf32>
      %cst_165 = arith.constant dense<0.000000e+00> : vector<8x128xf32>
      %413 = vector.multi_reduction <add>, %412, %cst_165 [0] : vector<3x8x128xf32> to vector<8x128xf32>
      %cst_166 = arith.constant dense<0.000000e+00> : vector<8xf32>
      %414 = vector.multi_reduction <add>, %413, %cst_166 [1] : vector<8x128xf32> to vector<8xf32>
      %415 = vector.shape_cast %414 : vector<8xf32> to vector<8x1xf32>
      %416 = arith.cmpf oge, %415, %115 : vector<8x1xf32>
      %417 = arith.select %416, %406, %397 : vector<8x1xi1>, vector<8x1xi32>
      %c1_i32_167 = arith.constant 1 : i32
      %418 = vector.broadcast %c1_i32_167 : i32 to vector<8x1xi32>
      %419 = arith.subi %406, %418 : vector<8x1xi32>
      %420 = arith.select %416, %400, %419 : vector<8x1xi1>, vector<8x1xi32>
      %c15_i32 = arith.constant 15 : i32
      %421 = arith.subi %420, %417 : vector<8x1xi32>
      %c1_i32_168 = arith.constant 1 : i32
      %422 = vector.broadcast %c1_i32_168 : i32 to vector<8x1xi32>
      %423 = arith.addi %421, %422 : vector<8x1xi32>
      %c1_i32_169 = arith.constant 1 : i32
      %424 = vector.broadcast %c1_i32_169 : i32 to vector<8x1xi32>
      %425 = arith.shrsi %423, %424 : vector<8x1xi32>
      %426 = arith.addi %417, %425 : vector<8x1xi32>
      %427 = vector.shape_cast %426 : vector<8x1xi32> to vector<1x8x1xi32>
      %428 = vector.broadcast %427 : vector<1x8x1xi32> to vector<3x8x128xi32>
      %429 = arith.cmpi sge, %118, %428 : vector<3x8x128xi32>
      %cst_170 = arith.constant 1.000000e+00 : f32
      %cst_171 = arith.constant 0.000000e+00 : f32
      %430 = vector.broadcast %cst_170 : f32 to vector<3x8x128xf32>
      %431 = vector.broadcast %cst_171 : f32 to vector<3x8x128xf32>
      %432 = arith.select %429, %430, %431 : vector<3x8x128xi1>, vector<3x8x128xf32>
      %cst_172 = arith.constant dense<0.000000e+00> : vector<8x128xf32>
      %433 = vector.multi_reduction <add>, %432, %cst_172 [0] : vector<3x8x128xf32> to vector<8x128xf32>
      %cst_173 = arith.constant dense<0.000000e+00> : vector<8xf32>
      %434 = vector.multi_reduction <add>, %433, %cst_173 [1] : vector<8x128xf32> to vector<8xf32>
      %435 = vector.shape_cast %434 : vector<8xf32> to vector<8x1xf32>
      %436 = arith.cmpf oge, %435, %115 : vector<8x1xf32>
      %437 = arith.select %436, %426, %417 : vector<8x1xi1>, vector<8x1xi32>
      %c1_i32_174 = arith.constant 1 : i32
      %438 = vector.broadcast %c1_i32_174 : i32 to vector<8x1xi32>
      %439 = arith.subi %426, %438 : vector<8x1xi32>
      %440 = arith.select %436, %420, %439 : vector<8x1xi1>, vector<8x1xi32>
      %c16_i32 = arith.constant 16 : i32
      %441 = arith.subi %440, %437 : vector<8x1xi32>
      %c1_i32_175 = arith.constant 1 : i32
      %442 = vector.broadcast %c1_i32_175 : i32 to vector<8x1xi32>
      %443 = arith.addi %441, %442 : vector<8x1xi32>
      %c1_i32_176 = arith.constant 1 : i32
      %444 = vector.broadcast %c1_i32_176 : i32 to vector<8x1xi32>
      %445 = arith.shrsi %443, %444 : vector<8x1xi32>
      %446 = arith.addi %437, %445 : vector<8x1xi32>
      %447 = vector.shape_cast %446 : vector<8x1xi32> to vector<1x8x1xi32>
      %448 = vector.broadcast %447 : vector<1x8x1xi32> to vector<3x8x128xi32>
      %449 = arith.cmpi sge, %118, %448 : vector<3x8x128xi32>
      %cst_177 = arith.constant 1.000000e+00 : f32
      %cst_178 = arith.constant 0.000000e+00 : f32
      %450 = vector.broadcast %cst_177 : f32 to vector<3x8x128xf32>
      %451 = vector.broadcast %cst_178 : f32 to vector<3x8x128xf32>
      %452 = arith.select %449, %450, %451 : vector<3x8x128xi1>, vector<3x8x128xf32>
      %cst_179 = arith.constant dense<0.000000e+00> : vector<8x128xf32>
      %453 = vector.multi_reduction <add>, %452, %cst_179 [0] : vector<3x8x128xf32> to vector<8x128xf32>
      %cst_180 = arith.constant dense<0.000000e+00> : vector<8xf32>
      %454 = vector.multi_reduction <add>, %453, %cst_180 [1] : vector<8x128xf32> to vector<8xf32>
      %455 = vector.shape_cast %454 : vector<8xf32> to vector<8x1xf32>
      %456 = arith.cmpf oge, %455, %115 : vector<8x1xf32>
      %457 = arith.select %456, %446, %437 : vector<8x1xi1>, vector<8x1xi32>
      %c1_i32_181 = arith.constant 1 : i32
      %458 = vector.broadcast %c1_i32_181 : i32 to vector<8x1xi32>
      %459 = arith.subi %446, %458 : vector<8x1xi32>
      %460 = arith.select %456, %440, %459 : vector<8x1xi1>, vector<8x1xi32>
      %c17_i32 = arith.constant 17 : i32
      %461 = arith.subi %460, %457 : vector<8x1xi32>
      %c1_i32_182 = arith.constant 1 : i32
      %462 = vector.broadcast %c1_i32_182 : i32 to vector<8x1xi32>
      %463 = arith.addi %461, %462 : vector<8x1xi32>
      %c1_i32_183 = arith.constant 1 : i32
      %464 = vector.broadcast %c1_i32_183 : i32 to vector<8x1xi32>
      %465 = arith.shrsi %463, %464 : vector<8x1xi32>
      %466 = arith.addi %457, %465 : vector<8x1xi32>
      %467 = vector.shape_cast %466 : vector<8x1xi32> to vector<1x8x1xi32>
      %468 = vector.broadcast %467 : vector<1x8x1xi32> to vector<3x8x128xi32>
      %469 = arith.cmpi sge, %118, %468 : vector<3x8x128xi32>
      %cst_184 = arith.constant 1.000000e+00 : f32
      %cst_185 = arith.constant 0.000000e+00 : f32
      %470 = vector.broadcast %cst_184 : f32 to vector<3x8x128xf32>
      %471 = vector.broadcast %cst_185 : f32 to vector<3x8x128xf32>
      %472 = arith.select %469, %470, %471 : vector<3x8x128xi1>, vector<3x8x128xf32>
      %cst_186 = arith.constant dense<0.000000e+00> : vector<8x128xf32>
      %473 = vector.multi_reduction <add>, %472, %cst_186 [0] : vector<3x8x128xf32> to vector<8x128xf32>
      %cst_187 = arith.constant dense<0.000000e+00> : vector<8xf32>
      %474 = vector.multi_reduction <add>, %473, %cst_187 [1] : vector<8x128xf32> to vector<8xf32>
      %475 = vector.shape_cast %474 : vector<8xf32> to vector<8x1xf32>
      %476 = arith.cmpf oge, %475, %115 : vector<8x1xf32>
      %477 = arith.select %476, %466, %457 : vector<8x1xi1>, vector<8x1xi32>
      %c1_i32_188 = arith.constant 1 : i32
      %478 = vector.broadcast %c1_i32_188 : i32 to vector<8x1xi32>
      %479 = arith.subi %466, %478 : vector<8x1xi32>
      %480 = arith.select %476, %460, %479 : vector<8x1xi1>, vector<8x1xi32>
      %c18_i32 = arith.constant 18 : i32
      %481 = arith.subi %480, %477 : vector<8x1xi32>
      %c1_i32_189 = arith.constant 1 : i32
      %482 = vector.broadcast %c1_i32_189 : i32 to vector<8x1xi32>
      %483 = arith.addi %481, %482 : vector<8x1xi32>
      %c1_i32_190 = arith.constant 1 : i32
      %484 = vector.broadcast %c1_i32_190 : i32 to vector<8x1xi32>
      %485 = arith.shrsi %483, %484 : vector<8x1xi32>
      %486 = arith.addi %477, %485 : vector<8x1xi32>
      %487 = vector.shape_cast %486 : vector<8x1xi32> to vector<1x8x1xi32>
      %488 = vector.broadcast %487 : vector<1x8x1xi32> to vector<3x8x128xi32>
      %489 = arith.cmpi sge, %118, %488 : vector<3x8x128xi32>
      %cst_191 = arith.constant 1.000000e+00 : f32
      %cst_192 = arith.constant 0.000000e+00 : f32
      %490 = vector.broadcast %cst_191 : f32 to vector<3x8x128xf32>
      %491 = vector.broadcast %cst_192 : f32 to vector<3x8x128xf32>
      %492 = arith.select %489, %490, %491 : vector<3x8x128xi1>, vector<3x8x128xf32>
      %cst_193 = arith.constant dense<0.000000e+00> : vector<8x128xf32>
      %493 = vector.multi_reduction <add>, %492, %cst_193 [0] : vector<3x8x128xf32> to vector<8x128xf32>
      %cst_194 = arith.constant dense<0.000000e+00> : vector<8xf32>
      %494 = vector.multi_reduction <add>, %493, %cst_194 [1] : vector<8x128xf32> to vector<8xf32>
      %495 = vector.shape_cast %494 : vector<8xf32> to vector<8x1xf32>
      %496 = arith.cmpf oge, %495, %115 : vector<8x1xf32>
      %497 = arith.select %496, %486, %477 : vector<8x1xi1>, vector<8x1xi32>
      %c1_i32_195 = arith.constant 1 : i32
      %498 = vector.broadcast %c1_i32_195 : i32 to vector<8x1xi32>
      %499 = arith.subi %486, %498 : vector<8x1xi32>
      %500 = arith.select %496, %480, %499 : vector<8x1xi1>, vector<8x1xi32>
      %c19_i32 = arith.constant 19 : i32
      %501 = arith.subi %500, %497 : vector<8x1xi32>
      %c1_i32_196 = arith.constant 1 : i32
      %502 = vector.broadcast %c1_i32_196 : i32 to vector<8x1xi32>
      %503 = arith.addi %501, %502 : vector<8x1xi32>
      %c1_i32_197 = arith.constant 1 : i32
      %504 = vector.broadcast %c1_i32_197 : i32 to vector<8x1xi32>
      %505 = arith.shrsi %503, %504 : vector<8x1xi32>
      %506 = arith.addi %497, %505 : vector<8x1xi32>
      %507 = vector.shape_cast %506 : vector<8x1xi32> to vector<1x8x1xi32>
      %508 = vector.broadcast %507 : vector<1x8x1xi32> to vector<3x8x128xi32>
      %509 = arith.cmpi sge, %118, %508 : vector<3x8x128xi32>
      %cst_198 = arith.constant 1.000000e+00 : f32
      %cst_199 = arith.constant 0.000000e+00 : f32
      %510 = vector.broadcast %cst_198 : f32 to vector<3x8x128xf32>
      %511 = vector.broadcast %cst_199 : f32 to vector<3x8x128xf32>
      %512 = arith.select %509, %510, %511 : vector<3x8x128xi1>, vector<3x8x128xf32>
      %cst_200 = arith.constant dense<0.000000e+00> : vector<8x128xf32>
      %513 = vector.multi_reduction <add>, %512, %cst_200 [0] : vector<3x8x128xf32> to vector<8x128xf32>
      %cst_201 = arith.constant dense<0.000000e+00> : vector<8xf32>
      %514 = vector.multi_reduction <add>, %513, %cst_201 [1] : vector<8x128xf32> to vector<8xf32>
      %515 = vector.shape_cast %514 : vector<8xf32> to vector<8x1xf32>
      %516 = arith.cmpf oge, %515, %115 : vector<8x1xf32>
      %517 = arith.select %516, %506, %497 : vector<8x1xi1>, vector<8x1xi32>
      %c1_i32_202 = arith.constant 1 : i32
      %518 = vector.broadcast %c1_i32_202 : i32 to vector<8x1xi32>
      %519 = arith.subi %506, %518 : vector<8x1xi32>
      %520 = arith.select %516, %500, %519 : vector<8x1xi1>, vector<8x1xi32>
      %c20_i32 = arith.constant 20 : i32
      %521 = arith.subi %520, %517 : vector<8x1xi32>
      %c1_i32_203 = arith.constant 1 : i32
      %522 = vector.broadcast %c1_i32_203 : i32 to vector<8x1xi32>
      %523 = arith.addi %521, %522 : vector<8x1xi32>
      %c1_i32_204 = arith.constant 1 : i32
      %524 = vector.broadcast %c1_i32_204 : i32 to vector<8x1xi32>
      %525 = arith.shrsi %523, %524 : vector<8x1xi32>
      %526 = arith.addi %517, %525 : vector<8x1xi32>
      %527 = vector.shape_cast %526 : vector<8x1xi32> to vector<1x8x1xi32>
      %528 = vector.broadcast %527 : vector<1x8x1xi32> to vector<3x8x128xi32>
      %529 = arith.cmpi sge, %118, %528 : vector<3x8x128xi32>
      %cst_205 = arith.constant 1.000000e+00 : f32
      %cst_206 = arith.constant 0.000000e+00 : f32
      %530 = vector.broadcast %cst_205 : f32 to vector<3x8x128xf32>
      %531 = vector.broadcast %cst_206 : f32 to vector<3x8x128xf32>
      %532 = arith.select %529, %530, %531 : vector<3x8x128xi1>, vector<3x8x128xf32>
      %cst_207 = arith.constant dense<0.000000e+00> : vector<8x128xf32>
      %533 = vector.multi_reduction <add>, %532, %cst_207 [0] : vector<3x8x128xf32> to vector<8x128xf32>
      %cst_208 = arith.constant dense<0.000000e+00> : vector<8xf32>
      %534 = vector.multi_reduction <add>, %533, %cst_208 [1] : vector<8x128xf32> to vector<8xf32>
      %535 = vector.shape_cast %534 : vector<8xf32> to vector<8x1xf32>
      %536 = arith.cmpf oge, %535, %115 : vector<8x1xf32>
      %537 = arith.select %536, %526, %517 : vector<8x1xi1>, vector<8x1xi32>
      %c1_i32_209 = arith.constant 1 : i32
      %538 = vector.broadcast %c1_i32_209 : i32 to vector<8x1xi32>
      %539 = arith.subi %526, %538 : vector<8x1xi32>
      %540 = arith.select %536, %520, %539 : vector<8x1xi1>, vector<8x1xi32>
      %c21_i32 = arith.constant 21 : i32
      %541 = arith.subi %540, %537 : vector<8x1xi32>
      %c1_i32_210 = arith.constant 1 : i32
      %542 = vector.broadcast %c1_i32_210 : i32 to vector<8x1xi32>
      %543 = arith.addi %541, %542 : vector<8x1xi32>
      %c1_i32_211 = arith.constant 1 : i32
      %544 = vector.broadcast %c1_i32_211 : i32 to vector<8x1xi32>
      %545 = arith.shrsi %543, %544 : vector<8x1xi32>
      %546 = arith.addi %537, %545 : vector<8x1xi32>
      %547 = vector.shape_cast %546 : vector<8x1xi32> to vector<1x8x1xi32>
      %548 = vector.broadcast %547 : vector<1x8x1xi32> to vector<3x8x128xi32>
      %549 = arith.cmpi sge, %118, %548 : vector<3x8x128xi32>
      %cst_212 = arith.constant 1.000000e+00 : f32
      %cst_213 = arith.constant 0.000000e+00 : f32
      %550 = vector.broadcast %cst_212 : f32 to vector<3x8x128xf32>
      %551 = vector.broadcast %cst_213 : f32 to vector<3x8x128xf32>
      %552 = arith.select %549, %550, %551 : vector<3x8x128xi1>, vector<3x8x128xf32>
      %cst_214 = arith.constant dense<0.000000e+00> : vector<8x128xf32>
      %553 = vector.multi_reduction <add>, %552, %cst_214 [0] : vector<3x8x128xf32> to vector<8x128xf32>
      %cst_215 = arith.constant dense<0.000000e+00> : vector<8xf32>
      %554 = vector.multi_reduction <add>, %553, %cst_215 [1] : vector<8x128xf32> to vector<8xf32>
      %555 = vector.shape_cast %554 : vector<8xf32> to vector<8x1xf32>
      %556 = arith.cmpf oge, %555, %115 : vector<8x1xf32>
      %557 = arith.select %556, %546, %537 : vector<8x1xi1>, vector<8x1xi32>
      %c1_i32_216 = arith.constant 1 : i32
      %558 = vector.broadcast %c1_i32_216 : i32 to vector<8x1xi32>
      %559 = arith.subi %546, %558 : vector<8x1xi32>
      %560 = arith.select %556, %540, %559 : vector<8x1xi1>, vector<8x1xi32>
      %c22_i32 = arith.constant 22 : i32
      %561 = arith.subi %560, %557 : vector<8x1xi32>
      %c1_i32_217 = arith.constant 1 : i32
      %562 = vector.broadcast %c1_i32_217 : i32 to vector<8x1xi32>
      %563 = arith.addi %561, %562 : vector<8x1xi32>
      %c1_i32_218 = arith.constant 1 : i32
      %564 = vector.broadcast %c1_i32_218 : i32 to vector<8x1xi32>
      %565 = arith.shrsi %563, %564 : vector<8x1xi32>
      %566 = arith.addi %557, %565 : vector<8x1xi32>
      %567 = vector.shape_cast %566 : vector<8x1xi32> to vector<1x8x1xi32>
      %568 = vector.broadcast %567 : vector<1x8x1xi32> to vector<3x8x128xi32>
      %569 = arith.cmpi sge, %118, %568 : vector<3x8x128xi32>
      %cst_219 = arith.constant 1.000000e+00 : f32
      %cst_220 = arith.constant 0.000000e+00 : f32
      %570 = vector.broadcast %cst_219 : f32 to vector<3x8x128xf32>
      %571 = vector.broadcast %cst_220 : f32 to vector<3x8x128xf32>
      %572 = arith.select %569, %570, %571 : vector<3x8x128xi1>, vector<3x8x128xf32>
      %cst_221 = arith.constant dense<0.000000e+00> : vector<8x128xf32>
      %573 = vector.multi_reduction <add>, %572, %cst_221 [0] : vector<3x8x128xf32> to vector<8x128xf32>
      %cst_222 = arith.constant dense<0.000000e+00> : vector<8xf32>
      %574 = vector.multi_reduction <add>, %573, %cst_222 [1] : vector<8x128xf32> to vector<8xf32>
      %575 = vector.shape_cast %574 : vector<8xf32> to vector<8x1xf32>
      %576 = arith.cmpf oge, %575, %115 : vector<8x1xf32>
      %577 = arith.select %576, %566, %557 : vector<8x1xi1>, vector<8x1xi32>
      %c1_i32_223 = arith.constant 1 : i32
      %578 = vector.broadcast %c1_i32_223 : i32 to vector<8x1xi32>
      %579 = arith.subi %566, %578 : vector<8x1xi32>
      %580 = arith.select %576, %560, %579 : vector<8x1xi1>, vector<8x1xi32>
      %c23_i32 = arith.constant 23 : i32
      %581 = arith.subi %580, %577 : vector<8x1xi32>
      %c1_i32_224 = arith.constant 1 : i32
      %582 = vector.broadcast %c1_i32_224 : i32 to vector<8x1xi32>
      %583 = arith.addi %581, %582 : vector<8x1xi32>
      %c1_i32_225 = arith.constant 1 : i32
      %584 = vector.broadcast %c1_i32_225 : i32 to vector<8x1xi32>
      %585 = arith.shrsi %583, %584 : vector<8x1xi32>
      %586 = arith.addi %577, %585 : vector<8x1xi32>
      %587 = vector.shape_cast %586 : vector<8x1xi32> to vector<1x8x1xi32>
      %588 = vector.broadcast %587 : vector<1x8x1xi32> to vector<3x8x128xi32>
      %589 = arith.cmpi sge, %118, %588 : vector<3x8x128xi32>
      %cst_226 = arith.constant 1.000000e+00 : f32
      %cst_227 = arith.constant 0.000000e+00 : f32
      %590 = vector.broadcast %cst_226 : f32 to vector<3x8x128xf32>
      %591 = vector.broadcast %cst_227 : f32 to vector<3x8x128xf32>
      %592 = arith.select %589, %590, %591 : vector<3x8x128xi1>, vector<3x8x128xf32>
      %cst_228 = arith.constant dense<0.000000e+00> : vector<8x128xf32>
      %593 = vector.multi_reduction <add>, %592, %cst_228 [0] : vector<3x8x128xf32> to vector<8x128xf32>
      %cst_229 = arith.constant dense<0.000000e+00> : vector<8xf32>
      %594 = vector.multi_reduction <add>, %593, %cst_229 [1] : vector<8x128xf32> to vector<8xf32>
      %595 = vector.shape_cast %594 : vector<8xf32> to vector<8x1xf32>
      %596 = arith.cmpf oge, %595, %115 : vector<8x1xf32>
      %597 = arith.select %596, %586, %577 : vector<8x1xi1>, vector<8x1xi32>
      %c1_i32_230 = arith.constant 1 : i32
      %598 = vector.broadcast %c1_i32_230 : i32 to vector<8x1xi32>
      %599 = arith.subi %586, %598 : vector<8x1xi32>
      %600 = arith.select %596, %580, %599 : vector<8x1xi1>, vector<8x1xi32>
      %c24_i32 = arith.constant 24 : i32
      %601 = arith.subi %600, %597 : vector<8x1xi32>
      %c1_i32_231 = arith.constant 1 : i32
      %602 = vector.broadcast %c1_i32_231 : i32 to vector<8x1xi32>
      %603 = arith.addi %601, %602 : vector<8x1xi32>
      %c1_i32_232 = arith.constant 1 : i32
      %604 = vector.broadcast %c1_i32_232 : i32 to vector<8x1xi32>
      %605 = arith.shrsi %603, %604 : vector<8x1xi32>
      %606 = arith.addi %597, %605 : vector<8x1xi32>
      %607 = vector.shape_cast %606 : vector<8x1xi32> to vector<1x8x1xi32>
      %608 = vector.broadcast %607 : vector<1x8x1xi32> to vector<3x8x128xi32>
      %609 = arith.cmpi sge, %118, %608 : vector<3x8x128xi32>
      %cst_233 = arith.constant 1.000000e+00 : f32
      %cst_234 = arith.constant 0.000000e+00 : f32
      %610 = vector.broadcast %cst_233 : f32 to vector<3x8x128xf32>
      %611 = vector.broadcast %cst_234 : f32 to vector<3x8x128xf32>
      %612 = arith.select %609, %610, %611 : vector<3x8x128xi1>, vector<3x8x128xf32>
      %cst_235 = arith.constant dense<0.000000e+00> : vector<8x128xf32>
      %613 = vector.multi_reduction <add>, %612, %cst_235 [0] : vector<3x8x128xf32> to vector<8x128xf32>
      %cst_236 = arith.constant dense<0.000000e+00> : vector<8xf32>
      %614 = vector.multi_reduction <add>, %613, %cst_236 [1] : vector<8x128xf32> to vector<8xf32>
      %615 = vector.shape_cast %614 : vector<8xf32> to vector<8x1xf32>
      %616 = arith.cmpf oge, %615, %115 : vector<8x1xf32>
      %617 = arith.select %616, %606, %597 : vector<8x1xi1>, vector<8x1xi32>
      %c1_i32_237 = arith.constant 1 : i32
      %618 = vector.broadcast %c1_i32_237 : i32 to vector<8x1xi32>
      %619 = arith.subi %606, %618 : vector<8x1xi32>
      %620 = arith.select %616, %600, %619 : vector<8x1xi1>, vector<8x1xi32>
      %c25_i32 = arith.constant 25 : i32
      %621 = arith.subi %620, %617 : vector<8x1xi32>
      %c1_i32_238 = arith.constant 1 : i32
      %622 = vector.broadcast %c1_i32_238 : i32 to vector<8x1xi32>
      %623 = arith.addi %621, %622 : vector<8x1xi32>
      %c1_i32_239 = arith.constant 1 : i32
      %624 = vector.broadcast %c1_i32_239 : i32 to vector<8x1xi32>
      %625 = arith.shrsi %623, %624 : vector<8x1xi32>
      %626 = arith.addi %617, %625 : vector<8x1xi32>
      %627 = vector.shape_cast %626 : vector<8x1xi32> to vector<1x8x1xi32>
      %628 = vector.broadcast %627 : vector<1x8x1xi32> to vector<3x8x128xi32>
      %629 = arith.cmpi sge, %118, %628 : vector<3x8x128xi32>
      %cst_240 = arith.constant 1.000000e+00 : f32
      %cst_241 = arith.constant 0.000000e+00 : f32
      %630 = vector.broadcast %cst_240 : f32 to vector<3x8x128xf32>
      %631 = vector.broadcast %cst_241 : f32 to vector<3x8x128xf32>
      %632 = arith.select %629, %630, %631 : vector<3x8x128xi1>, vector<3x8x128xf32>
      %cst_242 = arith.constant dense<0.000000e+00> : vector<8x128xf32>
      %633 = vector.multi_reduction <add>, %632, %cst_242 [0] : vector<3x8x128xf32> to vector<8x128xf32>
      %cst_243 = arith.constant dense<0.000000e+00> : vector<8xf32>
      %634 = vector.multi_reduction <add>, %633, %cst_243 [1] : vector<8x128xf32> to vector<8xf32>
      %635 = vector.shape_cast %634 : vector<8xf32> to vector<8x1xf32>
      %636 = arith.cmpf oge, %635, %115 : vector<8x1xf32>
      %637 = arith.select %636, %626, %617 : vector<8x1xi1>, vector<8x1xi32>
      %c1_i32_244 = arith.constant 1 : i32
      %638 = vector.broadcast %c1_i32_244 : i32 to vector<8x1xi32>
      %639 = arith.subi %626, %638 : vector<8x1xi32>
      %640 = arith.select %636, %620, %639 : vector<8x1xi1>, vector<8x1xi32>
      %c26_i32 = arith.constant 26 : i32
      %641 = arith.subi %640, %637 : vector<8x1xi32>
      %c1_i32_245 = arith.constant 1 : i32
      %642 = vector.broadcast %c1_i32_245 : i32 to vector<8x1xi32>
      %643 = arith.addi %641, %642 : vector<8x1xi32>
      %c1_i32_246 = arith.constant 1 : i32
      %644 = vector.broadcast %c1_i32_246 : i32 to vector<8x1xi32>
      %645 = arith.shrsi %643, %644 : vector<8x1xi32>
      %646 = arith.addi %637, %645 : vector<8x1xi32>
      %647 = vector.shape_cast %646 : vector<8x1xi32> to vector<1x8x1xi32>
      %648 = vector.broadcast %647 : vector<1x8x1xi32> to vector<3x8x128xi32>
      %649 = arith.cmpi sge, %118, %648 : vector<3x8x128xi32>
      %cst_247 = arith.constant 1.000000e+00 : f32
      %cst_248 = arith.constant 0.000000e+00 : f32
      %650 = vector.broadcast %cst_247 : f32 to vector<3x8x128xf32>
      %651 = vector.broadcast %cst_248 : f32 to vector<3x8x128xf32>
      %652 = arith.select %649, %650, %651 : vector<3x8x128xi1>, vector<3x8x128xf32>
      %cst_249 = arith.constant dense<0.000000e+00> : vector<8x128xf32>
      %653 = vector.multi_reduction <add>, %652, %cst_249 [0] : vector<3x8x128xf32> to vector<8x128xf32>
      %cst_250 = arith.constant dense<0.000000e+00> : vector<8xf32>
      %654 = vector.multi_reduction <add>, %653, %cst_250 [1] : vector<8x128xf32> to vector<8xf32>
      %655 = vector.shape_cast %654 : vector<8xf32> to vector<8x1xf32>
      %656 = arith.cmpf oge, %655, %115 : vector<8x1xf32>
      %657 = arith.select %656, %646, %637 : vector<8x1xi1>, vector<8x1xi32>
      %c1_i32_251 = arith.constant 1 : i32
      %658 = vector.broadcast %c1_i32_251 : i32 to vector<8x1xi32>
      %659 = arith.subi %646, %658 : vector<8x1xi32>
      %660 = arith.select %656, %640, %659 : vector<8x1xi1>, vector<8x1xi32>
      %c27_i32 = arith.constant 27 : i32
      %661 = arith.subi %660, %657 : vector<8x1xi32>
      %c1_i32_252 = arith.constant 1 : i32
      %662 = vector.broadcast %c1_i32_252 : i32 to vector<8x1xi32>
      %663 = arith.addi %661, %662 : vector<8x1xi32>
      %c1_i32_253 = arith.constant 1 : i32
      %664 = vector.broadcast %c1_i32_253 : i32 to vector<8x1xi32>
      %665 = arith.shrsi %663, %664 : vector<8x1xi32>
      %666 = arith.addi %657, %665 : vector<8x1xi32>
      %667 = vector.shape_cast %666 : vector<8x1xi32> to vector<1x8x1xi32>
      %668 = vector.broadcast %667 : vector<1x8x1xi32> to vector<3x8x128xi32>
      %669 = arith.cmpi sge, %118, %668 : vector<3x8x128xi32>
      %cst_254 = arith.constant 1.000000e+00 : f32
      %cst_255 = arith.constant 0.000000e+00 : f32
      %670 = vector.broadcast %cst_254 : f32 to vector<3x8x128xf32>
      %671 = vector.broadcast %cst_255 : f32 to vector<3x8x128xf32>
      %672 = arith.select %669, %670, %671 : vector<3x8x128xi1>, vector<3x8x128xf32>
      %cst_256 = arith.constant dense<0.000000e+00> : vector<8x128xf32>
      %673 = vector.multi_reduction <add>, %672, %cst_256 [0] : vector<3x8x128xf32> to vector<8x128xf32>
      %cst_257 = arith.constant dense<0.000000e+00> : vector<8xf32>
      %674 = vector.multi_reduction <add>, %673, %cst_257 [1] : vector<8x128xf32> to vector<8xf32>
      %675 = vector.shape_cast %674 : vector<8xf32> to vector<8x1xf32>
      %676 = arith.cmpf oge, %675, %115 : vector<8x1xf32>
      %677 = arith.select %676, %666, %657 : vector<8x1xi1>, vector<8x1xi32>
      %c1_i32_258 = arith.constant 1 : i32
      %678 = vector.broadcast %c1_i32_258 : i32 to vector<8x1xi32>
      %679 = arith.subi %666, %678 : vector<8x1xi32>
      %680 = arith.select %676, %660, %679 : vector<8x1xi1>, vector<8x1xi32>
      %c28_i32 = arith.constant 28 : i32
      %681 = arith.subi %680, %677 : vector<8x1xi32>
      %c1_i32_259 = arith.constant 1 : i32
      %682 = vector.broadcast %c1_i32_259 : i32 to vector<8x1xi32>
      %683 = arith.addi %681, %682 : vector<8x1xi32>
      %c1_i32_260 = arith.constant 1 : i32
      %684 = vector.broadcast %c1_i32_260 : i32 to vector<8x1xi32>
      %685 = arith.shrsi %683, %684 : vector<8x1xi32>
      %686 = arith.addi %677, %685 : vector<8x1xi32>
      %687 = vector.shape_cast %686 : vector<8x1xi32> to vector<1x8x1xi32>
      %688 = vector.broadcast %687 : vector<1x8x1xi32> to vector<3x8x128xi32>
      %689 = arith.cmpi sge, %118, %688 : vector<3x8x128xi32>
      %cst_261 = arith.constant 1.000000e+00 : f32
      %cst_262 = arith.constant 0.000000e+00 : f32
      %690 = vector.broadcast %cst_261 : f32 to vector<3x8x128xf32>
      %691 = vector.broadcast %cst_262 : f32 to vector<3x8x128xf32>
      %692 = arith.select %689, %690, %691 : vector<3x8x128xi1>, vector<3x8x128xf32>
      %cst_263 = arith.constant dense<0.000000e+00> : vector<8x128xf32>
      %693 = vector.multi_reduction <add>, %692, %cst_263 [0] : vector<3x8x128xf32> to vector<8x128xf32>
      %cst_264 = arith.constant dense<0.000000e+00> : vector<8xf32>
      %694 = vector.multi_reduction <add>, %693, %cst_264 [1] : vector<8x128xf32> to vector<8xf32>
      %695 = vector.shape_cast %694 : vector<8xf32> to vector<8x1xf32>
      %696 = arith.cmpf oge, %695, %115 : vector<8x1xf32>
      %697 = arith.select %696, %686, %677 : vector<8x1xi1>, vector<8x1xi32>
      %c1_i32_265 = arith.constant 1 : i32
      %698 = vector.broadcast %c1_i32_265 : i32 to vector<8x1xi32>
      %699 = arith.subi %686, %698 : vector<8x1xi32>
      %700 = arith.select %696, %680, %699 : vector<8x1xi1>, vector<8x1xi32>
      %c29_i32 = arith.constant 29 : i32
      %701 = arith.subi %700, %697 : vector<8x1xi32>
      %c1_i32_266 = arith.constant 1 : i32
      %702 = vector.broadcast %c1_i32_266 : i32 to vector<8x1xi32>
      %703 = arith.addi %701, %702 : vector<8x1xi32>
      %c1_i32_267 = arith.constant 1 : i32
      %704 = vector.broadcast %c1_i32_267 : i32 to vector<8x1xi32>
      %705 = arith.shrsi %703, %704 : vector<8x1xi32>
      %706 = arith.addi %697, %705 : vector<8x1xi32>
      %707 = vector.shape_cast %706 : vector<8x1xi32> to vector<1x8x1xi32>
      %708 = vector.broadcast %707 : vector<1x8x1xi32> to vector<3x8x128xi32>
      %709 = arith.cmpi sge, %118, %708 : vector<3x8x128xi32>
      %cst_268 = arith.constant 1.000000e+00 : f32
      %cst_269 = arith.constant 0.000000e+00 : f32
      %710 = vector.broadcast %cst_268 : f32 to vector<3x8x128xf32>
      %711 = vector.broadcast %cst_269 : f32 to vector<3x8x128xf32>
      %712 = arith.select %709, %710, %711 : vector<3x8x128xi1>, vector<3x8x128xf32>
      %cst_270 = arith.constant dense<0.000000e+00> : vector<8x128xf32>
      %713 = vector.multi_reduction <add>, %712, %cst_270 [0] : vector<3x8x128xf32> to vector<8x128xf32>
      %cst_271 = arith.constant dense<0.000000e+00> : vector<8xf32>
      %714 = vector.multi_reduction <add>, %713, %cst_271 [1] : vector<8x128xf32> to vector<8xf32>
      %715 = vector.shape_cast %714 : vector<8xf32> to vector<8x1xf32>
      %716 = arith.cmpf oge, %715, %115 : vector<8x1xf32>
      %717 = arith.select %716, %706, %697 : vector<8x1xi1>, vector<8x1xi32>
      %c1_i32_272 = arith.constant 1 : i32
      %718 = vector.broadcast %c1_i32_272 : i32 to vector<8x1xi32>
      %719 = arith.subi %706, %718 : vector<8x1xi32>
      %720 = arith.select %716, %700, %719 : vector<8x1xi1>, vector<8x1xi32>
      %c30_i32 = arith.constant 30 : i32
      %721 = arith.subi %720, %717 : vector<8x1xi32>
      %c1_i32_273 = arith.constant 1 : i32
      %722 = vector.broadcast %c1_i32_273 : i32 to vector<8x1xi32>
      %723 = arith.addi %721, %722 : vector<8x1xi32>
      %c1_i32_274 = arith.constant 1 : i32
      %724 = vector.broadcast %c1_i32_274 : i32 to vector<8x1xi32>
      %725 = arith.shrsi %723, %724 : vector<8x1xi32>
      %726 = arith.addi %717, %725 : vector<8x1xi32>
      %727 = vector.shape_cast %726 : vector<8x1xi32> to vector<1x8x1xi32>
      %728 = vector.broadcast %727 : vector<1x8x1xi32> to vector<3x8x128xi32>
      %729 = arith.cmpi sge, %118, %728 : vector<3x8x128xi32>
      %cst_275 = arith.constant 1.000000e+00 : f32
      %cst_276 = arith.constant 0.000000e+00 : f32
      %730 = vector.broadcast %cst_275 : f32 to vector<3x8x128xf32>
      %731 = vector.broadcast %cst_276 : f32 to vector<3x8x128xf32>
      %732 = arith.select %729, %730, %731 : vector<3x8x128xi1>, vector<3x8x128xf32>
      %cst_277 = arith.constant dense<0.000000e+00> : vector<8x128xf32>
      %733 = vector.multi_reduction <add>, %732, %cst_277 [0] : vector<3x8x128xf32> to vector<8x128xf32>
      %cst_278 = arith.constant dense<0.000000e+00> : vector<8xf32>
      %734 = vector.multi_reduction <add>, %733, %cst_278 [1] : vector<8x128xf32> to vector<8xf32>
      %735 = vector.shape_cast %734 : vector<8xf32> to vector<8x1xf32>
      %736 = arith.cmpf oge, %735, %115 : vector<8x1xf32>
      %737 = arith.select %736, %726, %717 : vector<8x1xi1>, vector<8x1xi32>
      %c1_i32_279 = arith.constant 1 : i32
      %738 = vector.broadcast %c1_i32_279 : i32 to vector<8x1xi32>
      %739 = arith.subi %726, %738 : vector<8x1xi32>
      %740 = arith.select %736, %720, %739 : vector<8x1xi1>, vector<8x1xi32>
      %741 = vector.shape_cast %737 : vector<8x1xi32> to vector<1x8x1xi32>
      %742 = vector.broadcast %741 : vector<1x8x1xi32> to vector<3x8x128xi32>
      %743 = arith.cmpi sgt, %118, %742 : vector<3x8x128xi32>
      %cst_280 = arith.constant 1.000000e+00 : f32
      %cst_281 = arith.constant 0.000000e+00 : f32
      %744 = vector.broadcast %cst_280 : f32 to vector<3x8x128xf32>
      %745 = vector.broadcast %cst_281 : f32 to vector<3x8x128xf32>
      %746 = arith.select %743, %744, %745 : vector<3x8x128xi1>, vector<3x8x128xf32>
      %cst_282 = arith.constant dense<0.000000e+00> : vector<8x128xf32>
      %747 = vector.multi_reduction <add>, %746, %cst_282 [0] : vector<3x8x128xf32> to vector<8x128xf32>
      %cst_283 = arith.constant dense<0.000000e+00> : vector<8xf32>
      %748 = vector.multi_reduction <add>, %747, %cst_283 [1] : vector<8x128xf32> to vector<8xf32>
      %749 = vector.shape_cast %748 : vector<8xf32> to vector<8x1xf32>
      %750 = arith.subf %115, %749 : vector<8x1xf32>
      %751 = vector.shape_cast %737 : vector<8x1xi32> to vector<1x8x1xi32>
      %752 = vector.broadcast %751 : vector<1x8x1xi32> to vector<3x8x128xi32>
      %753 = arith.cmpi eq, %118, %752 : vector<3x8x128xi32>
      %754 = tpu.iota {dimensions = array<i32: 0>} : vector<3x8x128xi32>
      %c128_i32_284 = arith.constant 128 : i32
      %755 = vector.broadcast %c128_i32_284 : i32 to vector<3x8x128xi32>
      %756 = arith.muli %755, %754 : vector<3x8x128xi32>
      %757 = tpu.iota {dimensions = array<i32: 2>} : vector<3x8x128xi32>
      %758 = arith.addi %756, %757 : vector<3x8x128xi32>
      %c0_i32_285 = arith.constant 0 : i32
      %759 = vector.broadcast %c0_i32_285 : i32 to vector<8x1xi32>
      %c383_i32 = arith.constant 383 : i32
      %760 = vector.broadcast %c383_i32 : i32 to vector<8x1xi32>
      %c0_i32_286 = arith.constant 0 : i32
      %761 = arith.addi %759, %760 : vector<8x1xi32>
      %c1_i32_287 = arith.constant 1 : i32
      %762 = vector.broadcast %c1_i32_287 : i32 to vector<8x1xi32>
      %763 = arith.shrsi %761, %762 : vector<8x1xi32>
      %764 = vector.shape_cast %763 : vector<8x1xi32> to vector<1x8x1xi32>
      %765 = vector.broadcast %764 : vector<1x8x1xi32> to vector<3x8x128xi32>
      %766 = arith.cmpi sle, %758, %765 : vector<3x8x128xi32>
      %767 = arith.andi %753, %766 : vector<3x8x128xi1>
      %cst_288 = arith.constant 1.000000e+00 : f32
      %cst_289 = arith.constant 0.000000e+00 : f32
      %768 = vector.broadcast %cst_288 : f32 to vector<3x8x128xf32>
      %769 = vector.broadcast %cst_289 : f32 to vector<3x8x128xf32>
      %770 = arith.select %767, %768, %769 : vector<3x8x128xi1>, vector<3x8x128xf32>
      %cst_290 = arith.constant dense<0.000000e+00> : vector<8x128xf32>
      %771 = vector.multi_reduction <add>, %770, %cst_290 [0] : vector<3x8x128xf32> to vector<8x128xf32>
      %cst_291 = arith.constant dense<0.000000e+00> : vector<8xf32>
      %772 = vector.multi_reduction <add>, %771, %cst_291 [1] : vector<8x128xf32> to vector<8xf32>
      %773 = vector.shape_cast %772 : vector<8xf32> to vector<8x1xf32>
      %774 = arith.cmpf oge, %773, %750 : vector<8x1xf32>
      %c1_i32_292 = arith.constant 1 : i32
      %775 = vector.broadcast %c1_i32_292 : i32 to vector<8x1xi32>
      %776 = arith.addi %763, %775 : vector<8x1xi32>
      %777 = arith.select %774, %759, %776 : vector<8x1xi1>, vector<8x1xi32>
      %778 = arith.select %774, %763, %760 : vector<8x1xi1>, vector<8x1xi32>
      %c1_i32_293 = arith.constant 1 : i32
      %779 = arith.addi %777, %778 : vector<8x1xi32>
      %c1_i32_294 = arith.constant 1 : i32
      %780 = vector.broadcast %c1_i32_294 : i32 to vector<8x1xi32>
      %781 = arith.shrsi %779, %780 : vector<8x1xi32>
      %782 = vector.shape_cast %781 : vector<8x1xi32> to vector<1x8x1xi32>
      %783 = vector.broadcast %782 : vector<1x8x1xi32> to vector<3x8x128xi32>
      %784 = arith.cmpi sle, %758, %783 : vector<3x8x128xi32>
      %785 = arith.andi %753, %784 : vector<3x8x128xi1>
      %cst_295 = arith.constant 1.000000e+00 : f32
      %cst_296 = arith.constant 0.000000e+00 : f32
      %786 = vector.broadcast %cst_295 : f32 to vector<3x8x128xf32>
      %787 = vector.broadcast %cst_296 : f32 to vector<3x8x128xf32>
      %788 = arith.select %785, %786, %787 : vector<3x8x128xi1>, vector<3x8x128xf32>
      %cst_297 = arith.constant dense<0.000000e+00> : vector<8x128xf32>
      %789 = vector.multi_reduction <add>, %788, %cst_297 [0] : vector<3x8x128xf32> to vector<8x128xf32>
      %cst_298 = arith.constant dense<0.000000e+00> : vector<8xf32>
      %790 = vector.multi_reduction <add>, %789, %cst_298 [1] : vector<8x128xf32> to vector<8xf32>
      %791 = vector.shape_cast %790 : vector<8xf32> to vector<8x1xf32>
      %792 = arith.cmpf oge, %791, %750 : vector<8x1xf32>
      %c1_i32_299 = arith.constant 1 : i32
      %793 = vector.broadcast %c1_i32_299 : i32 to vector<8x1xi32>
      %794 = arith.addi %781, %793 : vector<8x1xi32>
      %795 = arith.select %792, %777, %794 : vector<8x1xi1>, vector<8x1xi32>
      %796 = arith.select %792, %781, %778 : vector<8x1xi1>, vector<8x1xi32>
      %c2_i32_300 = arith.constant 2 : i32
      %797 = arith.addi %795, %796 : vector<8x1xi32>
      %c1_i32_301 = arith.constant 1 : i32
      %798 = vector.broadcast %c1_i32_301 : i32 to vector<8x1xi32>
      %799 = arith.shrsi %797, %798 : vector<8x1xi32>
      %800 = vector.shape_cast %799 : vector<8x1xi32> to vector<1x8x1xi32>
      %801 = vector.broadcast %800 : vector<1x8x1xi32> to vector<3x8x128xi32>
      %802 = arith.cmpi sle, %758, %801 : vector<3x8x128xi32>
      %803 = arith.andi %753, %802 : vector<3x8x128xi1>
      %cst_302 = arith.constant 1.000000e+00 : f32
      %cst_303 = arith.constant 0.000000e+00 : f32
      %804 = vector.broadcast %cst_302 : f32 to vector<3x8x128xf32>
      %805 = vector.broadcast %cst_303 : f32 to vector<3x8x128xf32>
      %806 = arith.select %803, %804, %805 : vector<3x8x128xi1>, vector<3x8x128xf32>
      %cst_304 = arith.constant dense<0.000000e+00> : vector<8x128xf32>
      %807 = vector.multi_reduction <add>, %806, %cst_304 [0] : vector<3x8x128xf32> to vector<8x128xf32>
      %cst_305 = arith.constant dense<0.000000e+00> : vector<8xf32>
      %808 = vector.multi_reduction <add>, %807, %cst_305 [1] : vector<8x128xf32> to vector<8xf32>
      %809 = vector.shape_cast %808 : vector<8xf32> to vector<8x1xf32>
      %810 = arith.cmpf oge, %809, %750 : vector<8x1xf32>
      %c1_i32_306 = arith.constant 1 : i32
      %811 = vector.broadcast %c1_i32_306 : i32 to vector<8x1xi32>
      %812 = arith.addi %799, %811 : vector<8x1xi32>
      %813 = arith.select %810, %795, %812 : vector<8x1xi1>, vector<8x1xi32>
      %814 = arith.select %810, %799, %796 : vector<8x1xi1>, vector<8x1xi32>
      %c3_i32_307 = arith.constant 3 : i32
      %815 = arith.addi %813, %814 : vector<8x1xi32>
      %c1_i32_308 = arith.constant 1 : i32
      %816 = vector.broadcast %c1_i32_308 : i32 to vector<8x1xi32>
      %817 = arith.shrsi %815, %816 : vector<8x1xi32>
      %818 = vector.shape_cast %817 : vector<8x1xi32> to vector<1x8x1xi32>
      %819 = vector.broadcast %818 : vector<1x8x1xi32> to vector<3x8x128xi32>
      %820 = arith.cmpi sle, %758, %819 : vector<3x8x128xi32>
      %821 = arith.andi %753, %820 : vector<3x8x128xi1>
      %cst_309 = arith.constant 1.000000e+00 : f32
      %cst_310 = arith.constant 0.000000e+00 : f32
      %822 = vector.broadcast %cst_309 : f32 to vector<3x8x128xf32>
      %823 = vector.broadcast %cst_310 : f32 to vector<3x8x128xf32>
      %824 = arith.select %821, %822, %823 : vector<3x8x128xi1>, vector<3x8x128xf32>
      %cst_311 = arith.constant dense<0.000000e+00> : vector<8x128xf32>
      %825 = vector.multi_reduction <add>, %824, %cst_311 [0] : vector<3x8x128xf32> to vector<8x128xf32>
      %cst_312 = arith.constant dense<0.000000e+00> : vector<8xf32>
      %826 = vector.multi_reduction <add>, %825, %cst_312 [1] : vector<8x128xf32> to vector<8xf32>
      %827 = vector.shape_cast %826 : vector<8xf32> to vector<8x1xf32>
      %828 = arith.cmpf oge, %827, %750 : vector<8x1xf32>
      %c1_i32_313 = arith.constant 1 : i32
      %829 = vector.broadcast %c1_i32_313 : i32 to vector<8x1xi32>
      %830 = arith.addi %817, %829 : vector<8x1xi32>
      %831 = arith.select %828, %813, %830 : vector<8x1xi1>, vector<8x1xi32>
      %832 = arith.select %828, %817, %814 : vector<8x1xi1>, vector<8x1xi32>
      %c4_i32_314 = arith.constant 4 : i32
      %833 = arith.addi %831, %832 : vector<8x1xi32>
      %c1_i32_315 = arith.constant 1 : i32
      %834 = vector.broadcast %c1_i32_315 : i32 to vector<8x1xi32>
      %835 = arith.shrsi %833, %834 : vector<8x1xi32>
      %836 = vector.shape_cast %835 : vector<8x1xi32> to vector<1x8x1xi32>
      %837 = vector.broadcast %836 : vector<1x8x1xi32> to vector<3x8x128xi32>
      %838 = arith.cmpi sle, %758, %837 : vector<3x8x128xi32>
      %839 = arith.andi %753, %838 : vector<3x8x128xi1>
      %cst_316 = arith.constant 1.000000e+00 : f32
      %cst_317 = arith.constant 0.000000e+00 : f32
      %840 = vector.broadcast %cst_316 : f32 to vector<3x8x128xf32>
      %841 = vector.broadcast %cst_317 : f32 to vector<3x8x128xf32>
      %842 = arith.select %839, %840, %841 : vector<3x8x128xi1>, vector<3x8x128xf32>
      %cst_318 = arith.constant dense<0.000000e+00> : vector<8x128xf32>
      %843 = vector.multi_reduction <add>, %842, %cst_318 [0] : vector<3x8x128xf32> to vector<8x128xf32>
      %cst_319 = arith.constant dense<0.000000e+00> : vector<8xf32>
      %844 = vector.multi_reduction <add>, %843, %cst_319 [1] : vector<8x128xf32> to vector<8xf32>
      %845 = vector.shape_cast %844 : vector<8xf32> to vector<8x1xf32>
      %846 = arith.cmpf oge, %845, %750 : vector<8x1xf32>
      %c1_i32_320 = arith.constant 1 : i32
      %847 = vector.broadcast %c1_i32_320 : i32 to vector<8x1xi32>
      %848 = arith.addi %835, %847 : vector<8x1xi32>
      %849 = arith.select %846, %831, %848 : vector<8x1xi1>, vector<8x1xi32>
      %850 = arith.select %846, %835, %832 : vector<8x1xi1>, vector<8x1xi32>
      %c5_i32_321 = arith.constant 5 : i32
      %851 = arith.addi %849, %850 : vector<8x1xi32>
      %c1_i32_322 = arith.constant 1 : i32
      %852 = vector.broadcast %c1_i32_322 : i32 to vector<8x1xi32>
      %853 = arith.shrsi %851, %852 : vector<8x1xi32>
      %854 = vector.shape_cast %853 : vector<8x1xi32> to vector<1x8x1xi32>
      %855 = vector.broadcast %854 : vector<1x8x1xi32> to vector<3x8x128xi32>
      %856 = arith.cmpi sle, %758, %855 : vector<3x8x128xi32>
      %857 = arith.andi %753, %856 : vector<3x8x128xi1>
      %cst_323 = arith.constant 1.000000e+00 : f32
      %cst_324 = arith.constant 0.000000e+00 : f32
      %858 = vector.broadcast %cst_323 : f32 to vector<3x8x128xf32>
      %859 = vector.broadcast %cst_324 : f32 to vector<3x8x128xf32>
      %860 = arith.select %857, %858, %859 : vector<3x8x128xi1>, vector<3x8x128xf32>
      %cst_325 = arith.constant dense<0.000000e+00> : vector<8x128xf32>
      %861 = vector.multi_reduction <add>, %860, %cst_325 [0] : vector<3x8x128xf32> to vector<8x128xf32>
      %cst_326 = arith.constant dense<0.000000e+00> : vector<8xf32>
      %862 = vector.multi_reduction <add>, %861, %cst_326 [1] : vector<8x128xf32> to vector<8xf32>
      %863 = vector.shape_cast %862 : vector<8xf32> to vector<8x1xf32>
      %864 = arith.cmpf oge, %863, %750 : vector<8x1xf32>
      %c1_i32_327 = arith.constant 1 : i32
      %865 = vector.broadcast %c1_i32_327 : i32 to vector<8x1xi32>
      %866 = arith.addi %853, %865 : vector<8x1xi32>
      %867 = arith.select %864, %849, %866 : vector<8x1xi1>, vector<8x1xi32>
      %868 = arith.select %864, %853, %850 : vector<8x1xi1>, vector<8x1xi32>
      %c6_i32_328 = arith.constant 6 : i32
      %869 = arith.addi %867, %868 : vector<8x1xi32>
      %c1_i32_329 = arith.constant 1 : i32
      %870 = vector.broadcast %c1_i32_329 : i32 to vector<8x1xi32>
      %871 = arith.shrsi %869, %870 : vector<8x1xi32>
      %872 = vector.shape_cast %871 : vector<8x1xi32> to vector<1x8x1xi32>
      %873 = vector.broadcast %872 : vector<1x8x1xi32> to vector<3x8x128xi32>
      %874 = arith.cmpi sle, %758, %873 : vector<3x8x128xi32>
      %875 = arith.andi %753, %874 : vector<3x8x128xi1>
      %cst_330 = arith.constant 1.000000e+00 : f32
      %cst_331 = arith.constant 0.000000e+00 : f32
      %876 = vector.broadcast %cst_330 : f32 to vector<3x8x128xf32>
      %877 = vector.broadcast %cst_331 : f32 to vector<3x8x128xf32>
      %878 = arith.select %875, %876, %877 : vector<3x8x128xi1>, vector<3x8x128xf32>
      %cst_332 = arith.constant dense<0.000000e+00> : vector<8x128xf32>
      %879 = vector.multi_reduction <add>, %878, %cst_332 [0] : vector<3x8x128xf32> to vector<8x128xf32>
      %cst_333 = arith.constant dense<0.000000e+00> : vector<8xf32>
      %880 = vector.multi_reduction <add>, %879, %cst_333 [1] : vector<8x128xf32> to vector<8xf32>
      %881 = vector.shape_cast %880 : vector<8xf32> to vector<8x1xf32>
      %882 = arith.cmpf oge, %881, %750 : vector<8x1xf32>
      %c1_i32_334 = arith.constant 1 : i32
      %883 = vector.broadcast %c1_i32_334 : i32 to vector<8x1xi32>
      %884 = arith.addi %871, %883 : vector<8x1xi32>
      %885 = arith.select %882, %867, %884 : vector<8x1xi1>, vector<8x1xi32>
      %886 = arith.select %882, %871, %868 : vector<8x1xi1>, vector<8x1xi32>
      %c7_i32_335 = arith.constant 7 : i32
      %887 = arith.addi %885, %886 : vector<8x1xi32>
      %c1_i32_336 = arith.constant 1 : i32
      %888 = vector.broadcast %c1_i32_336 : i32 to vector<8x1xi32>
      %889 = arith.shrsi %887, %888 : vector<8x1xi32>
      %890 = vector.shape_cast %889 : vector<8x1xi32> to vector<1x8x1xi32>
      %891 = vector.broadcast %890 : vector<1x8x1xi32> to vector<3x8x128xi32>
      %892 = arith.cmpi sle, %758, %891 : vector<3x8x128xi32>
      %893 = arith.andi %753, %892 : vector<3x8x128xi1>
      %cst_337 = arith.constant 1.000000e+00 : f32
      %cst_338 = arith.constant 0.000000e+00 : f32
      %894 = vector.broadcast %cst_337 : f32 to vector<3x8x128xf32>
      %895 = vector.broadcast %cst_338 : f32 to vector<3x8x128xf32>
      %896 = arith.select %893, %894, %895 : vector<3x8x128xi1>, vector<3x8x128xf32>
      %cst_339 = arith.constant dense<0.000000e+00> : vector<8x128xf32>
      %897 = vector.multi_reduction <add>, %896, %cst_339 [0] : vector<3x8x128xf32> to vector<8x128xf32>
      %cst_340 = arith.constant dense<0.000000e+00> : vector<8xf32>
      %898 = vector.multi_reduction <add>, %897, %cst_340 [1] : vector<8x128xf32> to vector<8xf32>
      %899 = vector.shape_cast %898 : vector<8xf32> to vector<8x1xf32>
      %900 = arith.cmpf oge, %899, %750 : vector<8x1xf32>
      %c1_i32_341 = arith.constant 1 : i32
      %901 = vector.broadcast %c1_i32_341 : i32 to vector<8x1xi32>
      %902 = arith.addi %889, %901 : vector<8x1xi32>
      %903 = arith.select %900, %885, %902 : vector<8x1xi1>, vector<8x1xi32>
      %904 = arith.select %900, %889, %886 : vector<8x1xi1>, vector<8x1xi32>
      %c8_i32_342 = arith.constant 8 : i32
      %905 = arith.addi %903, %904 : vector<8x1xi32>
      %c1_i32_343 = arith.constant 1 : i32
      %906 = vector.broadcast %c1_i32_343 : i32 to vector<8x1xi32>
      %907 = arith.shrsi %905, %906 : vector<8x1xi32>
      %908 = vector.shape_cast %907 : vector<8x1xi32> to vector<1x8x1xi32>
      %909 = vector.broadcast %908 : vector<1x8x1xi32> to vector<3x8x128xi32>
      %910 = arith.cmpi sle, %758, %909 : vector<3x8x128xi32>
      %911 = arith.andi %753, %910 : vector<3x8x128xi1>
      %cst_344 = arith.constant 1.000000e+00 : f32
      %cst_345 = arith.constant 0.000000e+00 : f32
      %912 = vector.broadcast %cst_344 : f32 to vector<3x8x128xf32>
      %913 = vector.broadcast %cst_345 : f32 to vector<3x8x128xf32>
      %914 = arith.select %911, %912, %913 : vector<3x8x128xi1>, vector<3x8x128xf32>
      %cst_346 = arith.constant dense<0.000000e+00> : vector<8x128xf32>
      %915 = vector.multi_reduction <add>, %914, %cst_346 [0] : vector<3x8x128xf32> to vector<8x128xf32>
      %cst_347 = arith.constant dense<0.000000e+00> : vector<8xf32>
      %916 = vector.multi_reduction <add>, %915, %cst_347 [1] : vector<8x128xf32> to vector<8xf32>
      %917 = vector.shape_cast %916 : vector<8xf32> to vector<8x1xf32>
      %918 = arith.cmpf oge, %917, %750 : vector<8x1xf32>
      %c1_i32_348 = arith.constant 1 : i32
      %919 = vector.broadcast %c1_i32_348 : i32 to vector<8x1xi32>
      %920 = arith.addi %907, %919 : vector<8x1xi32>
      %921 = arith.select %918, %903, %920 : vector<8x1xi1>, vector<8x1xi32>
      %922 = arith.select %918, %907, %904 : vector<8x1xi1>, vector<8x1xi32>
      %923 = vector.shape_cast %921 : vector<8x1xi32> to vector<1x8x1xi32>
      %924 = vector.broadcast %923 : vector<1x8x1xi32> to vector<3x8x128xi32>
      %925 = arith.cmpi sle, %758, %924 : vector<3x8x128xi32>
      %926 = arith.andi %753, %925 : vector<3x8x128xi1>
      %927 = vector.shape_cast %750 : vector<8x1xf32> to vector<1x8x1xf32>
      %cst_349 = arith.constant 1.000000e+00 : f32
      %928 = vector.broadcast %cst_349 : f32 to vector<1x8x1xf32>
      %929 = arith.cmpf oge, %927, %928 : vector<1x8x1xf32>
      %930 = vector.broadcast %929 : vector<1x8x1xi1> to vector<3x8x128xi1>
      %931 = arith.andi %926, %930 : vector<3x8x128xi1>
      %932 = arith.ori %743, %931 : vector<3x8x128xi1>
      %cst_350 = arith.constant 1.000000e+00 : f32
      %cst_351 = arith.constant 0.000000e+00 : f32
      %933 = vector.broadcast %cst_350 : f32 to vector<3x8x128xf32>
      %934 = vector.broadcast %cst_351 : f32 to vector<3x8x128xf32>
      %935 = arith.select %932, %933, %934 : vector<3x8x128xi1>, vector<3x8x128xf32>
      %936 = arith.mulf %116, %935 : vector<3x8x128xf32>
      %cst_352 = arith.constant dense<0.000000e+00> : vector<8x128xf32>
      %937 = vector.multi_reduction <add>, %936, %cst_352 [0] : vector<3x8x128xf32> to vector<8x128xf32>
      %cst_353 = arith.constant dense<0.000000e+00> : vector<8xf32>
      %938 = vector.multi_reduction <add>, %937, %cst_353 [1] : vector<8x128xf32> to vector<8xf32>
      %939 = vector.shape_cast %938 : vector<8xf32> to vector<8x1xf32>
      %c0_354 = arith.constant 0 : index
      %c0_355 = arith.constant 0 : index
      %940 = vector.load %arg11[%c0_354, %c0_355] : memref<8x1xf32, #tpu.memory_space<vmem>>, vector<8x1xf32>
      %c0_356 = arith.constant 0 : index
      %c0_357 = arith.constant 0 : index
      %941 = vector.load %arg12[%c0_356, %c0_357] : memref<8x1xf32, #tpu.memory_space<vmem>>, vector<8x1xf32>
      %942 = arith.addf %940, %941 : vector<8x1xf32>
      %943 = arith.addf %942, %939 : vector<8x1xf32>
      %cst_358 = arith.constant 0.000000e+00 : f32
      %944 = vector.broadcast %cst_358 : f32 to vector<8x1xf32>
      %945 = arith.cmpf ogt, %111, %944 : vector<8x1xf32>
      %946 = arith.extui %945 : vector<8x1xi1> to vector<8x1xi32>
      %947 = arith.sitofp %946 : vector<8x1xi32> to vector<8x1xf32>
      %948 = arith.mulf %943, %947 : vector<8x1xf32>
      %cst_359 = arith.constant 9.99999997E-7 : f32
      %949 = vector.broadcast %cst_359 : f32 to vector<8x1xf32>
      %950 = arith.maximumf %111, %949 : vector<8x1xf32>
      %951 = arith.divf %948, %950 : vector<8x1xf32>
      %952 = tpu.iota {dimensions = array<i32: 0>} : vector<8x8xi32>
      %953 = tpu.iota {dimensions = array<i32: 1>} : vector<8x8xi32>
      %954 = arith.cmpi eq, %952, %953 : vector<8x8xi32>
      %cst_360 = arith.constant 0.000000e+00 : f32
      %955 = vector.shape_cast %951 : vector<8x1xf32> to vector<8x1xf32>
      %956 = vector.broadcast %955 : vector<8x1xf32> to vector<8x8xf32>
      %957 = vector.broadcast %cst_360 : f32 to vector<8x8xf32>
      %958 = arith.select %954, %956, %957 : vector<8x8xi1>, vector<8x8xf32>
      %cst_361 = arith.constant dense<0.000000e+00> : vector<8xf32>
      %959 = vector.multi_reduction <add>, %958, %cst_361 [0] : vector<8x8xf32> to vector<8xf32>
      %960 = vector.shape_cast %959 : vector<8xf32> to vector<1x8xf32>
      %961 = vector.shape_cast %960 : vector<1x8xf32> to vector<1x1x8xf32>
      %c0_362 = arith.constant 0 : index
      %c0_363 = arith.constant 0 : index
      %c0_364 = arith.constant 0 : index
      %962 = vector.load %arg7[%c0_362, %c0_363, %c0_364] : memref<1x1x8xf32, #tpu.memory_space<vmem>>, vector<1x1x8xf32>
      tpu.vector_store %arg7[%c0_362, %c0_363, %c0_364], %961 {strides = array<i32>} : memref<1x1x8xf32, #tpu.memory_space<vmem>>, vector<1x1x8xf32>,
    } else {
    }
    return
  }
  func.func @transform_0(%arg0: i32, %arg1: i32) -> (i32, i32, i32) {
    %c0_i32 = arith.constant 0 : i32
    %c0_i32_0 = arith.constant 0 : i32
    return %arg0, %c0_i32, %arg1 : i32, i32, i32
  }
  func.func @transform_1(%arg0: i32, %arg1: i32) -> (i32, i32, i32) {
    %c0_i32 = arith.constant 0 : i32
    %c0_i32_0 = arith.constant 0 : i32
    return %arg0, %c0_i32, %arg1 : i32, i32, i32
  }
  func.func @transform_2(%arg0: i32, %arg1: i32) -> (i32, i32, i32) {
    %c0_i32 = arith.constant 0 : i32
    %c0_i32_0 = arith.constant 0 : i32
    return %arg0, %c0_i32, %arg1 : i32, i32, i32
  }
  func.func @transform_3(%arg0: i32, %arg1: i32) -> (i32, i32) {
    %c0_i32 = arith.constant 0 : i32
    return %arg0, %arg1 : i32, i32
  }
  func.func @transform_4(%arg0: i32, %arg1: i32) -> (i32, i32, i32) {
    %c0_i32 = arith.constant 0 : i32
    %c0_i32_0 = arith.constant 0 : i32
    %c0_i32_1 = arith.constant 0 : i32
    return %c0_i32, %c0_i32_0, %arg1 : i32, i32, i32
  }
  func.func @transform_5(%arg0: i32, %arg1: i32) -> (i32, i32, i32) {
    %c0_i32 = arith.constant 0 : i32
    %c0_i32_0 = arith.constant 0 : i32
    %c0_i32_1 = arith.constant 0 : i32
    return %arg0, %c0_i32, %c0_i32_0 : i32, i32, i32
  }
}

</mosaic_0001>

<llo_original>
// kernel: tpu_custom_call.1
$region0: #{tpu_custom_call.1}
  #allocation0 [shape = 'u32[]', space=smem, size = 0x4, offset = 0x4, fixed_abs, tag = 'smem constant byte address 0x4 - core index']
  #allocation1 [shape = 'u32[144,128]{1,0:T(1,128)}', space=vmem, size = 0x12000, scoped, tag = 'internal scratch']
  #allocation2 [shape = 'f32[3,8,128]{2,1,0:T(8,128)}', space=vmem, size = 0x3000, scoped, tag = 'scratch operand']
  #allocation3 [shape = 'f32[3,8,128]{2,1,0:T(8,128)}', space=vmem, size = 0x3000, scoped, tag = 'scratch operand']
  #allocation4 [shape = 'f32[8,1]{1,0:T(8,128)}', space=vmem, size = 0x1000, scoped, tag = 'scratch operand']
  #allocation5 [shape = 'f32[8,1]{1,0:T(8,128)}', space=vmem, size = 0x1000, scoped, tag = 'scratch operand']
  #allocation6 [shape = 'f32[8,1]{1,0:T(8,128)}', space=vmem, size = 0x1000, scoped, tag = 'scratch operand']
  %s0 = inlined_call_operand.hbm [shape: bf16[16,4,384], index: 0, kind: input, shape index: {}]
  %s1 = inlined_call_operand.hbm [shape: bf16[16,8,384], index: 1, kind: input, shape index: {}]
  %s2 = inlined_call_operand.hbm [shape: bf16[16,4,384], index: 2, kind: input, shape index: {}]
  %s3 = inlined_call_operand.hbm [shape: s32[16,384], index: 3, kind: input, shape index: {}]
  %s4 = inlined_call_operand.hbm [shape: f32[1,4,384], index: 4, kind: input, shape index: {}]
  %s5 = inlined_call_operand.hbm [shape: f32[2,1,8], index: 5, kind: output, shape index: {}]
  %s6 = sld [smem:[#allocation0]]
  $region81: #{tpu_custom_call.1} parent=0
    _
  %s8 = ssub.s32 1, %s6
  %s9 = scalar_select 0, %s8, %s6
  $region1: #{tpu_custom_call.1} parent=0
    #allocation7 [shape = 'u8[16384]{0}', space=vmem, size = 0x4000, scoped, tag = 'input window, operand 0']
    #allocation8 [shape = 's32[2]{0}', space=sflag, size = 0x8, scoped, tag = 'scoped memory for tpu_custom_call.1']
    #allocation9 [shape = 's32[2]{0}', space=sflag, size = 0x8, scoped, tag = 'scoped memory for tpu_custom_call.1']
    #allocation10 [shape = 'u8[32768]{0}', space=vmem, size = 0x8000, scoped, tag = 'input window, operand 1']
    #allocation11 [shape = 's32[2]{0}', space=sflag, size = 0x8, scoped, tag = 'scoped memory for tpu_custom_call.1']
    #allocation12 [shape = 'u8[16384]{0}', space=vmem, size = 0x4000, scoped, tag = 'input window, operand 2']
    #allocation13 [shape = 'u8[8192]{0}', space=vmem, size = 0x2000, scoped, tag = 'input window, operand 3']
    #allocation14 [shape = 's32[2]{0}', space=sflag, size = 0x8, scoped, tag = 'scoped memory for tpu_custom_call.1']
    #allocation15 [shape = 'u8[4096]{0}', space=vmem, size = 0x1000, scoped, tag = 'input window, operand 4']
    #allocation16 [shape = 'u8[1024]{0}', space=vmem, size = 0x400, scoped, tag = 'output window, operand 0']
    %10 = vsyncpa [#allocation8], 0
    %s11 = scalar_lea.sflag [#allocation8], 1
    %12 = vsyncpa %s11, 0
    %13 = vsyncpa [#allocation11], 0
    %s14 = scalar_lea.sflag [#allocation11], 1
    %15 = vsyncpa %s14, 0
    %16 = vsyncpa [#allocation14], 0
    %s17 = scalar_lea.sflag [#allocation14], 1
    %18 = vsyncpa %s17, 0
    %19 = vsyncpa [#allocation9], 0
    %s20 = scalar_lea.sflag [#allocation9], 1
    %21 = vsyncpa %s20, 0
    loop: start=0, step=1, limit=8
    $region2: #{tpu_custom_call.1} parent=1 // loop_pre_header
      _
    $region3: #{tpu_custom_call.1} parent=1 // loop_header
      %s23 = sphi 0, %s27
      %p24 = scmp.ge.s32.totalorder %s23, 8
      %s30 = sphi 0, %s42
      %s31 = sphi 0, %s38
      %s32 = sphi 0, %s30
      %s33 = sphi 0, %s31
      %s34 = sphi 0, %s32
      %s35 = sphi 0, %s33
      %s47 = sphi 0, %s49
      %s50 = sphi 0, %s47
      %s51 = sphi 0, %s50
      %s67 = sphi 0, %s51
      %s75 = sphi 0, %s77
      %s78 = sphi 0, %s75
      %s79 = sphi 0, %s78
      %s95 = sphi 0, %s79
      %s103 = sphi 0, %s105
      %s106 = sphi 0, %s103
      %s107 = sphi 0, %s106
      %s123 = sphi 0, %s107
      %s131 = sphi 0, %s133
      %s134 = sphi 0, %s131
      %s135 = sphi 0, %s134
      %s151 = sphi 0, %s135
      %s157 = sphi 0, %s159
      %s160 = sphi 0, %s157
      %s161 = sphi 0, %s160
      %s177 = sphi 0, %s161
      %s183 = sphi 0, %s185
      %s186 = sphi 0, %s183
      %s187 = sphi 0, %s186
      %s203 = sphi 0, %s187
    $region4: #{tpu_custom_call.1} parent=1 // loop_header_branch
      %26 = sbr.rel (%p24) target = $region8
    $region5: #{tpu_custom_call.1} parent=1 // loop_body
      %s28 = ssub.s32 %s23, 1
      %s29 = ssub.s32 %s23, 2
      %s36 = sadd.s32 1, %s31
      %p37 = scmp.ge.s32.totalorder %s36, 3
      %s38 = scalar_select %p37, 0, %s36
      %s39 = sadd.s32 1, %s30
      %s40 = scalar_select %p37, %s39, %s30
      %p41 = scmp.ge.s32.totalorder %s40, 2
      %s42 = scalar_select %p41, 0, %s40
      %s43 = ssub.s32 %s30, %s42
      %s44 = ssub.s32 %s31, %s38
      %s45 = sor.u32 %s43, %s44
      %p46 = scmp.eq.s32.totalorder %s45, 0
      %s48 = sadd.s32 %s47, 1
      %s49 = scalar_select %p46, %s47, %s48
      %p52 = pneg %p46
      %p53 = scmp.eq.s32.totalorder %s23, 5
      %p54 = por %p52, %p53
      %p55 = scmp.ne.s32.totalorder %s47, %s50
      %p56 = scmp.eq.s32.totalorder %s23, 0
      %p57 = por %p55, %p56
      %p58 = scmp.ne.s32.totalorder %s47, %s50
      %p59 = scmp.eq.s32.totalorder %s28, 5
      %p60 = por %p58, %p59
      %p61 = scmp.ne.s32.totalorder %s50, %s51
      %p62 = scmp.eq.s32.totalorder %s28, 0
      %p63 = por %p61, %p62
      %p64 = scmp.ne.s32.totalorder %s50, %s51
      %p65 = scmp.eq.s32.totalorder %s29, 5
      %p66 = por %p64, %p65
      %p68 = scmp.ne.s32.totalorder %s51, %s67
      %p69 = scmp.eq.s32.totalorder %s29, 0
      %p70 = por %p68, %p69
      %s71 = ssub.s32 %s30, %s42
      %s72 = ssub.s32 %s31, %s38
      %s73 = sor.u32 %s71, %s72
      %p74 = scmp.eq.s32.totalorder %s73, 0
      %s76 = sadd.s32 %s75, 1
      %s77 = scalar_select %p74, %s75, %s76
      %p80 = pneg %p74
      %p81 = scmp.eq.s32.totalorder %s23, 5
      %p82 = por %p80, %p81
      %p83 = scmp.ne.s32.totalorder %s75, %s78
      %p84 = scmp.eq.s32.totalorder %s23, 0
      %p85 = por %p83, %p84
      %p86 = scmp.ne.s32.totalorder %s75, %s78
      %p87 = scmp.eq.s32.totalorder %s28, 5
      %p88 = por %p86, %p87
      %p89 = scmp.ne.s32.totalorder %s78, %s79
      %p90 = scmp.eq.s32.totalorder %s28, 0
      %p91 = por %p89, %p90
      %p92 = scmp.ne.s32.totalorder %s78, %s79
      %p93 = scmp.eq.s32.totalorder %s29, 5
      %p94 = por %p92, %p93
      %p96 = scmp.ne.s32.totalorder %s79, %s95
      %p97 = scmp.eq.s32.totalorder %s29, 0
      %p98 = por %p96, %p97
      %s99 = ssub.s32 %s30, %s42
      %s100 = ssub.s32 %s31, %s38
      %s101 = sor.u32 %s99, %s100
      %p102 = scmp.eq.s32.totalorder %s101, 0
      %s104 = sadd.s32 %s103, 1
      %s105 = scalar_select %p102, %s103, %s104
      %p108 = pneg %p102
      %p109 = scmp.eq.s32.totalorder %s23, 5
      %p110 = por %p108, %p109
      %p111 = scmp.ne.s32.totalorder %s103, %s106
      %p112 = scmp.eq.s32.totalorder %s23, 0
      %p113 = por %p111, %p112
      %p114 = scmp.ne.s32.totalorder %s103, %s106
      %p115 = scmp.eq.s32.totalorder %s28, 5
      %p116 = por %p114, %p115
      %p117 = scmp.ne.s32.totalorder %s106, %s107
      %p118 = scmp.eq.s32.totalorder %s28, 0
      %p119 = por %p117, %p118
      %p120 = scmp.ne.s32.totalorder %s106, %s107
      %p121 = scmp.eq.s32.totalorder %s29, 5
      %p122 = por %p120, %p121
      %p124 = scmp.ne.s32.totalorder %s107, %s123
      %p125 = scmp.eq.s32.totalorder %s29, 0
      %p126 = por %p124, %p125
      %s127 = ssub.s32 %s30, %s42
      %s128 = ssub.s32 %s31, %s38
      %s129 = sor.u32 %s127, %s128
      %p130 = scmp.eq.s32.totalorder %s129, 0
      %s132 = sadd.s32 %s131, 1
      %s133 = scalar_select %p130, %s131, %s132
      %p136 = pneg %p130
      %p137 = scmp.eq.s32.totalorder %s23, 5
      %p138 = por %p136, %p137
      %p139 = scmp.ne.s32.totalorder %s131, %s134
      %p140 = scmp.eq.s32.totalorder %s23, 0
      %p141 = por %p139, %p140
      %p142 = scmp.ne.s32.totalorder %s131, %s134
      %p143 = scmp.eq.s32.totalorder %s28, 5
      %p144 = por %p142, %p143
      %p145 = scmp.ne.s32.totalorder %s134, %s135
      %p146 = scmp.eq.s32.totalorder %s28, 0
      %p147 = por %p145, %p146
      %p148 = scmp.ne.s32.totalorder %s134, %s135
      %p149 = scmp.eq.s32.totalorder %s29, 5
      %p150 = por %p148, %p149
      %p152 = scmp.ne.s32.totalorder %s135, %s151
      %p153 = scmp.eq.s32.totalorder %s29, 0
      %p154 = por %p152, %p153
      %s155 = ssub.s32 %s31, %s38
      %p156 = scmp.eq.s32.totalorder %s155, 0
      %s158 = sadd.s32 %s157, 1
      %s159 = scalar_select %p156, %s157, %s158
      %p162 = pneg %p156
      %p163 = scmp.eq.s32.totalorder %s23, 5
      %p164 = por %p162, %p163
      %p165 = scmp.ne.s32.totalorder %s157, %s160
      %p166 = scmp.eq.s32.totalorder %s23, 0
      %p167 = por %p165, %p166
      %p168 = scmp.ne.s32.totalorder %s157, %s160
      %p169 = scmp.eq.s32.totalorder %s28, 5
      %p170 = por %p168, %p169
      %p171 = scmp.ne.s32.totalorder %s160, %s161
      %p172 = scmp.eq.s32.totalorder %s28, 0
      %p173 = por %p171, %p172
      %p174 = scmp.ne.s32.totalorder %s160, %s161
      %p175 = scmp.eq.s32.totalorder %s29, 5
      %p176 = por %p174, %p175
      %p178 = scmp.ne.s32.totalorder %s161, %s177
      %p179 = scmp.eq.s32.totalorder %s29, 0
      %p180 = por %p178, %p179
      %s181 = ssub.s32 %s30, %s42
      %p182 = scmp.eq.s32.totalorder %s181, 0
      %s184 = sadd.s32 %s183, 1
      %s185 = scalar_select %p182, %s183, %s184
      %p188 = pneg %p182
      %p189 = scmp.eq.s32.totalorder %s23, 5
      %p190 = por %p188, %p189
      %p191 = scmp.ne.s32.totalorder %s183, %s186
      %p192 = scmp.eq.s32.totalorder %s23, 0
      %p193 = por %p191, %p192
      %p194 = scmp.ne.s32.totalorder %s183, %s186
      %p195 = scmp.eq.s32.totalorder %s28, 5
      %p196 = por %p194, %p195
      %p197 = scmp.ne.s32.totalorder %s186, %s187
      %p198 = scmp.eq.s32.totalorder %s28, 0
      %p199 = por %p197, %p198
      %p200 = scmp.ne.s32.totalorder %s186, %s187
      %p201 = scmp.eq.s32.totalorder %s29, 5
      %p202 = por %p200, %p201
      %p204 = scmp.ne.s32.totalorder %s187, %s203
      %p205 = scmp.eq.s32.totalorder %s29, 0
      %p206 = por %p204, %p205
      %p207 = scmp.le.s32.totalorder 1, %s23
      %p208 = scmp.lt.s32.totalorder %s23, 7
      %p209 = pnand %p207, %p208
      %p210 = pneg %p209
      // Predicated region
      $region9: #{tpu_custom_call.1} parent=5 // pred_check
        _
      $region10: #{tpu_custom_call.1} parent=5 // pred_check_branch
        %212 = sbr.rel (%p209) target = $region12
      $region11: #{tpu_custom_call.1} parent=5 // pred_region
        %s213 = ssub.s32 %s23, 1
      $region12: #{tpu_custom_call.1} parent=5 // pred_fallthru
        _
      %p214 = scmp.lt.s32.totalorder %s23, 6
      // Predicated region
      $region13: #{tpu_custom_call.1} parent=5 // pred_check
        %p215 = pneg %p214
      $region14: #{tpu_custom_call.1} parent=5 // pred_check_branch
        %217 = sbr.rel (%p215) target = $region16
      $region15: #{tpu_custom_call.1} parent=5 // pred_region
        // Predicated region
        $region17: #{tpu_custom_call.1} parent=15 // pred_check
          %p218 = pneg %p57
        $region18: #{tpu_custom_call.1} parent=15 // pred_check_branch
          %220 = sbr.rel (%p218) target = $region20
        $region19: #{tpu_custom_call.1} parent=15 // pred_region
          %s221 = sand.u32 %s47, 1
          %s222 = scalar_lea.sflag [#allocation8], %s221
          %s223 = sand.u32 %s47, 1
          %s224 = smul.addr %s223, 16
          %s225 = scalar_lea.vmem [#allocation7], %s224
          %s226 = smul.u32 8, %s30
          %s228 = ssub.s32 256, 256
          %229 = vsyncadd %s222, %s228
          %s230 = smul.addr %s226, 3
          %s231 = sadd.s32 %s31, %s230
          %s232 = smul.addr %s231, 32
          %s233 = scalar_lea.hbm %s0, %s232
          %s234 = sshll.u32 %s225, 4
          %s235 = int_to_ptr.vmem [resolvable:$true] %s234
          %240 = dma.hbm_to_vmem [thread:$0]  %s233, 256, %s235, %s222, 96, 32, 2
        $region20: #{tpu_custom_call.1} parent=15 // pred_fallthru
          _
        // Predicated region
        $region21: #{tpu_custom_call.1} parent=15 // pred_check
          %p241 = pneg %p85
        $region22: #{tpu_custom_call.1} parent=15 // pred_check_branch
          %243 = sbr.rel (%p241) target = $region24
        $region23: #{tpu_custom_call.1} parent=15 // pred_region
          %s244 = sand.u32 %s23, 1
          %s245 = scalar_lea.sflag [#allocation11], %s244
          %s246 = sand.u32 %s75, 1
          %s247 = smul.addr %s246, 32
          %s248 = scalar_lea.vmem [#allocation10], %s247
          %s249 = smul.u32 8, %s30
          %s251 = ssub.s32 512, 512
          %252 = vsyncadd %s245, %s251
          %s253 = smul.addr %s249, 3
          %s254 = sadd.s32 %s31, %s253
          %s255 = smul.addr %s254, 64
          %s256 = scalar_lea.hbm %s1, %s255
          %s257 = sshll.u32 %s248, 4
          %s258 = int_to_ptr.vmem [resolvable:$true] %s257
          %263 = dma.hbm_to_vmem [thread:$0]  %s256, 512, %s258, %s245, 192, 64, 4
        $region24: #{tpu_custom_call.1} parent=15 // pred_fallthru
          _
        // Predicated region
        $region25: #{tpu_custom_call.1} parent=15 // pred_check
          %p264 = pneg %p113
        $region26: #{tpu_custom_call.1} parent=15 // pred_check_branch
          %266 = sbr.rel (%p264) target = $region28
        $region27: #{tpu_custom_call.1} parent=15 // pred_region
          %s267 = sand.u32 %s23, 1
          %s268 = scalar_lea.sflag [#allocation11], %s267
          %s269 = sand.u32 %s103, 1
          %s270 = smul.addr %s269, 16
          %s271 = scalar_lea.vmem [#allocation12], %s270
          %s272 = smul.u32 8, %s30
          %s274 = ssub.s32 256, 256
          %275 = vsyncadd %s268, %s274
          %s276 = smul.addr %s272, 3
          %s277 = sadd.s32 %s31, %s276
          %s278 = smul.addr %s277, 32
          %s279 = scalar_lea.hbm %s2, %s278
          %s280 = sshll.u32 %s271, 4
          %s281 = int_to_ptr.vmem [resolvable:$true] %s280
          %286 = dma.hbm_to_vmem [thread:$0]  %s279, 256, %s281, %s268, 96, 32, 2
        $region28: #{tpu_custom_call.1} parent=15 // pred_fallthru
          _
        // Predicated region
        $region29: #{tpu_custom_call.1} parent=15 // pred_check
          %p287 = pneg %p141
        $region30: #{tpu_custom_call.1} parent=15 // pred_check_branch
          %289 = sbr.rel (%p287) target = $region32
        $region31: #{tpu_custom_call.1} parent=15 // pred_region
          %s290 = sand.u32 %s23, 1
          %s291 = scalar_lea.sflag [#allocation14], %s290
          %s292 = sand.u32 %s131, 1
          %s293 = smul.addr %s292, 8
          %s294 = scalar_lea.vmem [#allocation13], %s293
          %s296 = ssub.s32 128, 128
          %297 = vsyncadd %s291, %s296
          %s298 = smul.addr %s30, 3
          %s299 = sadd.s32 %s31, %s298
          %s300 = smul.addr %s299, 128
          %s301 = scalar_lea.hbm %s3, %s300
          %s303 = sshll.u32 %s294, 4
          %s304 = int_to_ptr.vmem [resolvable:$true] %s303
          %306 = dma.hbm_to_vmem [thread:$0]  %s301, 128, %s304, %s291
        $region32: #{tpu_custom_call.1} parent=15 // pred_fallthru
          _
        // Predicated region
        $region33: #{tpu_custom_call.1} parent=15 // pred_check
          %p307 = pneg %p167
        $region34: #{tpu_custom_call.1} parent=15 // pred_check_branch
          %309 = sbr.rel (%p307) target = $region36
        $region35: #{tpu_custom_call.1} parent=15 // pred_region
          %s310 = sand.u32 %s23, 1
          %s311 = scalar_lea.sflag [#allocation14], %s310
          %s312 = sand.u32 %s157, 1
          %s313 = smul.addr %s312, 4
          %s314 = scalar_lea.vmem [#allocation15], %s313
          %s316 = ssub.s32 64, 64
          %317 = vsyncadd %s311, %s316
          %s318 = smul.addr %s31, 64
          %s319 = scalar_lea.hbm %s4, %s318
          %s321 = sshll.u32 %s314, 4
          %s322 = int_to_ptr.vmem [resolvable:$true] %s321
          %324 = dma.hbm_to_vmem [thread:$0]  %s319, 64, %s322, %s311
        $region36: #{tpu_custom_call.1} parent=15 // pred_fallthru
          _
      $region16: #{tpu_custom_call.1} parent=5 // pred_fallthru
        _
      %p325 = scmp.le.s32.totalorder 1, %s23
      %p326 = scmp.lt.s32.totalorder %s23, 7
      %p327 = pnand %p325, %p326
      %p328 = pneg %p327
      // Predicated region
      $region37: #{tpu_custom_call.1} parent=5 // pred_check
        _
      $region38: #{tpu_custom_call.1} parent=5 // pred_check_branch
        %330 = sbr.rel (%p327) target = $region40
      $region39: #{tpu_custom_call.1} parent=5 // pred_region
        %s331 = ssub.s32 %s23, 1
        %s332 = sand.u32 %s50, 1
        %s333 = scalar_lea.sflag [#allocation8], %s332
        %s334 = sand.u32 %s50, 1
        %s335 = smul.addr %s334, 16
        %s336 = scalar_lea.vmem [#allocation7], %s335
        // Predicated region
        $region41: #{tpu_custom_call.1} parent=39 // pred_check
          %p337 = pneg %p63
        $region42: #{tpu_custom_call.1} parent=39 // pred_check_branch
          %339 = sbr.rel (%p337) target = $region44
        $region43: #{tpu_custom_call.1} parent=39 // pred_region
          %340 = dma.done %s333, 256
        $region44: #{tpu_custom_call.1} parent=39 // pred_fallthru
          _
        %s341 = sand.u32 %s28, 1
        %s342 = scalar_lea.sflag [#allocation11], %s341
        %s343 = sand.u32 %s78, 1
        %s344 = smul.addr %s343, 32
        %s345 = scalar_lea.vmem [#allocation10], %s344
        // Predicated region
        $region45: #{tpu_custom_call.1} parent=39 // pred_check
          %p346 = pneg %p91
        $region46: #{tpu_custom_call.1} parent=39 // pred_check_branch
          %348 = sbr.rel (%p346) target = $region48
        $region47: #{tpu_custom_call.1} parent=39 // pred_region
          %349 = dma.done %s342, 512
        $region48: #{tpu_custom_call.1} parent=39 // pred_fallthru
          _
        %s350 = sand.u32 %s28, 1
        %s351 = scalar_lea.sflag [#allocation11], %s350
        %s352 = sand.u32 %s106, 1
        %s353 = smul.addr %s352, 16
        %s354 = scalar_lea.vmem [#allocation12], %s353
        // Predicated region
        $region49: #{tpu_custom_call.1} parent=39 // pred_check
          %p355 = pneg %p119
        $region50: #{tpu_custom_call.1} parent=39 // pred_check_branch
          %357 = sbr.rel (%p355) target = $region52
        $region51: #{tpu_custom_call.1} parent=39 // pred_region
          %358 = dma.done %s351, 256
        $region52: #{tpu_custom_call.1} parent=39 // pred_fallthru
          _
        %s359 = sand.u32 %s28, 1
        %s360 = scalar_lea.sflag [#allocation14], %s359
        %s361 = sand.u32 %s134, 1
        %s362 = smul.addr %s361, 8
        %s363 = scalar_lea.vmem [#allocation13], %s362
        // Predicated region
        $region53: #{tpu_custom_call.1} parent=39 // pred_check
          %p364 = pneg %p147
        $region54: #{tpu_custom_call.1} parent=39 // pred_check_branch
          %366 = sbr.rel (%p364) target = $region56
        $region55: #{tpu_custom_call.1} parent=39 // pred_region
          %367 = dma.done %s360, 128
        $region56: #{tpu_custom_call.1} parent=39 // pred_fallthru
          _
        %s368 = sand.u32 %s28, 1
        %s369 = scalar_lea.sflag [#allocation14], %s368
        %s370 = sand.u32 %s160, 1
        %s371 = smul.addr %s370, 4
        %s372 = scalar_lea.vmem [#allocation15], %s371
        // Predicated region
        $region57: #{tpu_custom_call.1} parent=39 // pred_check
          %p373 = pneg %p173
        $region58: #{tpu_custom_call.1} parent=39 // pred_check_branch
          %375 = sbr.rel (%p373) target = $region60
        $region59: #{tpu_custom_call.1} parent=39 // pred_region
          %376 = dma.done %s369, 64
        $region60: #{tpu_custom_call.1} parent=39 // pred_fallthru
          _
        %s377 = sand.u32 %s50, 1
        %s378 = scalar_lea.sflag [#allocation8], %s377
        %s379 = sand.u32 %s50, 1
        %s380 = smul.addr %s379, 16
        %s381 = scalar_lea.vmem [#allocation7], %s380
        %p382 = pneg %p63
        %p383 = pneg %p60
        %s384 = sand.u32 %s28, 1
        %s385 = scalar_lea.sflag [#allocation11], %s384
        %s386 = sand.u32 %s78, 1
        %s387 = smul.addr %s386, 32
        %s388 = scalar_lea.vmem [#allocation10], %s387
        %p389 = pneg %p91
        %p390 = pneg %p88
        %s391 = sand.u32 %s28, 1
        %s392 = scalar_lea.sflag [#allocation11], %s391
        %s393 = sand.u32 %s106, 1
        %s394 = smul.addr %s393, 16
        %s395 = scalar_lea.vmem [#allocation12], %s394
        %p396 = pneg %p119
        %p397 = pneg %p116
        %s398 = sand.u32 %s28, 1
        %s399 = scalar_lea.sflag [#allocation14], %s398
        %s400 = sand.u32 %s134, 1
        %s401 = smul.addr %s400, 8
        %s402 = scalar_lea.vmem [#allocation13], %s401
        %p403 = pneg %p147
        %p404 = pneg %p144
        %s405 = sand.u32 %s28, 1
        %s406 = scalar_lea.sflag [#allocation14], %s405
        %s407 = sand.u32 %s160, 1
        %s408 = smul.addr %s407, 4
        %s409 = scalar_lea.vmem [#allocation15], %s408
        %p410 = pneg %p173
        %p411 = pneg %p170
        %p412 = pneg %p199
        %p413 = pneg %p196
        %s414 = sand.u32 %s186, 1
        %s415 = scalar_lea.sflag [#allocation9], %s414
        %s416 = sand.u32 %s186, 1
        %s417 = scalar_lea.vmem [#allocation16], %s416
        %s418 = smul.u32 8, %s32
        %s419 = smul.u32 8, %s32
        %s420 = smul.u32 8, %s32
        %p421 = scmp.eq.s32.totalorder %s33, 0
        // Predicated region
        $region61: #{tpu_custom_call.1} parent=39 // pred_check
          %p422 = pneg %p421
        $region62: #{tpu_custom_call.1} parent=39 // pred_check_branch
          %424 = sbr.rel (%p422) target = $region64
        $region63: #{tpu_custom_call.1} parent=39 // pred_region
          %vm425 = vcmask 7168
          %426 = vst.msk [vmem:[#allocation4] sm:$0xff] %vm425, 0.0
          %427 = vst.msk [vmem:[#allocation5] sm:$0xff] %vm425, 0.0
          %428 = vst.msk [vmem:[#allocation6] sm:$0xff] %vm425, 0.0
        $region64: #{tpu_custom_call.1} parent=39 // pred_fallthru
          _
        %v429 = vld [vmem:[%s336] sm:$0x3]
        %v430 = vld [vmem:[%s336 + $0x2] sm:$0x3]
        %v431 = vld [vmem:[%s336 + $0x4] sm:$0x3]
        %v432 = vld [vmem:[%s336 + $0x6] sm:$0x3]
        %v433 = vld [vmem:[%s336 + $0x8] sm:$0x3]
        %v434 = vld [vmem:[%s336 + $0xa] sm:$0x3]
        %v435 = vld [vmem:[%s336 + $0xc] sm:$0x3]
        %v436 = vld [vmem:[%s336 + $0xe] sm:$0x3]
        %v437 = vunpack.c.l.bf16 %v429
        %v438 = vunpack.c.l.bf16 %v430
        %v439 = vunpack.c.l.bf16 %v431
        %v440 = vunpack.c.l.bf16 %v432
        %v441 = vunpack.c.l.bf16 %v433
        %v442 = vunpack.c.l.bf16 %v434
        %v443 = vunpack.c.l.bf16 %v435
        %v444 = vunpack.c.l.bf16 %v436
        %v445 = vld [vmem:[%s354] sm:$0x3]
        %v446 = vld [vmem:[%s354 + $0x2] sm:$0x3]
        %v447 = vld [vmem:[%s354 + $0x4] sm:$0x3]
        %v448 = vld [vmem:[%s354 + $0x6] sm:$0x3]
        %v449 = vld [vmem:[%s354 + $0x8] sm:$0x3]
        %v450 = vld [vmem:[%s354 + $0xa] sm:$0x3]
        %v451 = vld [vmem:[%s354 + $0xc] sm:$0x3]
        %v452 = vld [vmem:[%s354 + $0xe] sm:$0x3]
        %v453 = vunpack.c.l.bf16 %v445
        %v454 = vunpack.c.l.bf16 %v446
        %v455 = vunpack.c.l.bf16 %v447
        %v456 = vunpack.c.l.bf16 %v448
        %v457 = vunpack.c.l.bf16 %v449
        %v458 = vunpack.c.l.bf16 %v450
        %v459 = vunpack.c.l.bf16 %v451
        %v460 = vunpack.c.l.bf16 %v452
        %v461 = vld [vmem:[%s372] sm:$0xf]
        %v462 = vld [vmem:[%s345] sm:$0xf]
        %v463 = vld [vmem:[%s345 + $0x4] sm:$0xf]
        %v464 = vld [vmem:[%s345 + $0x8] sm:$0xf]
        %v465 = vld [vmem:[%s345 + $0xc] sm:$0xf]
        %v466 = vld [vmem:[%s345 + $0x10] sm:$0xf]
        %v467 = vld [vmem:[%s345 + $0x14] sm:$0xf]
        %v468 = vld [vmem:[%s345 + $0x18] sm:$0xf]
        %v469 = vld [vmem:[%s345 + $0x1c] sm:$0xf]
        %v470 = vunpack.c.l.bf16 %v462
        %v471 = vunpack.c.l.bf16 %v463
        %v472 = vunpack.c.l.bf16 %v464
        %v473 = vunpack.c.l.bf16 %v465
        %v474 = vunpack.c.l.bf16 %v466
        %v475 = vunpack.c.l.bf16 %v467
        %v476 = vunpack.c.l.bf16 %v468
        %v477 = vunpack.c.l.bf16 %v469
        %v478 = vld [vmem:[%s363] sm:$0xff]
        %vm479 = vcmp.gt.s32.totalorder %v478, 0
        %v480 = vsel %vm479, 1, 0
        %v481 = vcvt.s32.f32 %v480
        %v482 = vld [vmem:[#allocation4] sm:$0xff]
        %483 = vadd.xlane.f32.xlu0 %v481
        %v484 = vpop.xlane.xlu0 %483
        %v485 = vadd.f32 %v482, %v484
        %vm486 = vcmask 7168
        %487 = vst.msk [vmem:[#allocation4] sm:$0xff] %vm486, %v485
        %v488 = vsub.f32 %v453, %v461
        %v489 = vsub.f32 %v454, %v461
        %v490 = vsub.f32 %v455, %v461
        %v491 = vsub.f32 %v456, %v461
        %v492 = vsub.f32 %v457, %v461
        %v493 = vsub.f32 %v458, %v461
        %v494 = vsub.f32 %v459, %v461
        %v495 = vsub.f32 %v460, %v461
        %v496 = vmul.f32 %v488, 10.0
        %v497 = vmul.f32 %v489, 10.0
        %v498 = vmul.f32 %v490, 10.0
        %v499 = vmul.f32 %v491, 10.0
        %v500 = vmul.f32 %v492, 10.0
        %v501 = vmul.f32 %v493, 10.0
        %v502 = vmul.f32 %v494, 10.0
        %v503 = vmul.f32 %v495, 10.0
        %v505 = vrot.slane %v461, 6
        %v506 = vrot.slane %v505, 4
        %v508 = vmul.f32 %v496, %v506
        %v509 = vmul.f32 %v497, %v506
        %v510 = vmul.f32 %v498, %v506
        %v511 = vmul.f32 %v499, %v506
        %v512 = vmul.f32 %v500, %v506
        %v513 = vmul.f32 %v501, %v506
        %v514 = vmul.f32 %v502, %v506
        %v515 = vmul.f32 %v503, %v506
        %v516 = vmul.f32 %v453, %v461
        %v517 = vmul.f32 %v454, %v461
        %v518 = vmul.f32 %v455, %v461
        %v519 = vmul.f32 %v456, %v461
        %v520 = vmul.f32 %v457, %v461
        %v521 = vmul.f32 %v458, %v461
        %v522 = vmul.f32 %v459, %v461
        %v523 = vmul.f32 %v460, %v461
        %v524 = vlog2.pop %v516
        %v525 = vmul.f32 %v524, 0.6931472
        %v526 = vlog2.pop %v517
        %v527 = vmul.f32 %v526, 0.6931472
        %v528 = vlog2.pop %v518
        %v529 = vmul.f32 %v528, 0.6931472
        %v530 = vlog2.pop %v519
        %v531 = vmul.f32 %v530, 0.6931472
        %v532 = vlog2.pop %v520
        %v533 = vmul.f32 %v532, 0.6931472
        %v534 = vlog2.pop %v521
        %v535 = vmul.f32 %v534, 0.6931472
        %v536 = vlog2.pop %v522
        %v537 = vmul.f32 %v536, 0.6931472
        %v538 = vlog2.pop %v523
        %v539 = vmul.f32 %v538, 0.6931472
        %v540 = vmul.f32 %v525, 5.0
        %v541 = vmul.f32 %v527, 5.0
        %v542 = vmul.f32 %v529, 5.0
        %v543 = vmul.f32 %v531, 5.0
        %v544 = vmul.f32 %v533, 5.0
        %v545 = vmul.f32 %v535, 5.0
        %v546 = vmul.f32 %v537, 5.0
        %v547 = vmul.f32 %v539, 5.0
        %v548 = vsub.f32 %v437, %v508
        %v549 = vsub.f32 %v438, %v509
        %v550 = vsub.f32 %v439, %v510
        %v551 = vsub.f32 %v440, %v511
        %v552 = vsub.f32 %v441, %v512
        %v553 = vsub.f32 %v442, %v513
        %v554 = vsub.f32 %v443, %v514
        %v555 = vsub.f32 %v444, %v515
        %v556 = vand.u32 2147483647, %v548
        %v557 = vand.u32 2147483647, %v549
        %v558 = vand.u32 2147483647, %v550
        %v559 = vand.u32 2147483647, %v551
        %v560 = vand.u32 2147483647, %v552
        %v561 = vand.u32 2147483647, %v553
        %v562 = vand.u32 2147483647, %v554
        %v563 = vand.u32 2147483647, %v555
        %vm564 = vcmp.lt.f32.partialorder %v556, 1.0
        %vm565 = vcmp.lt.f32.partialorder %v557, 1.0
        %vm566 = vcmp.lt.f32.partialorder %v558, 1.0
        %vm567 = vcmp.lt.f32.partialorder %v559, 1.0
        %vm568 = vcmp.lt.f32.partialorder %v560, 1.0
        %vm569 = vcmp.lt.f32.partialorder %v561, 1.0
        %vm570 = vcmp.lt.f32.partialorder %v562, 1.0
        %vm571 = vcmp.lt.f32.partialorder %v563, 1.0
        %v572 = vmul.f32 %v548, 0.5
        %v573 = vmul.f32 %v549, 0.5
        %v574 = vmul.f32 %v550, 0.5
        %v575 = vmul.f32 %v551, 0.5
        %v576 = vmul.f32 %v552, 0.5
        %v577 = vmul.f32 %v553, 0.5
        %v578 = vmul.f32 %v554, 0.5
        %v579 = vmul.f32 %v555, 0.5
        %v580 = vmul.f32 %v572, %v548
        %v581 = vmul.f32 %v573, %v549
        %v582 = vmul.f32 %v574, %v550
        %v583 = vmul.f32 %v575, %v551
        %v584 = vmul.f32 %v576, %v552
        %v585 = vmul.f32 %v577, %v553
        %v586 = vmul.f32 %v578, %v554
        %v587 = vmul.f32 %v579, %v555
        %v588 = vsub.f32 %v556, 0.5
        %v589 = vsub.f32 %v557, 0.5
        %v590 = vsub.f32 %v558, 0.5
        %v591 = vsub.f32 %v559, 0.5
        %v592 = vsub.f32 %v560, 0.5
        %v593 = vsub.f32 %v561, 0.5
        %v594 = vsub.f32 %v562, 0.5
        %v595 = vsub.f32 %v563, 0.5
        %v596 = vsel %vm564, %v580, %v588
        %v597 = vsel %vm565, %v581, %v589
        %v598 = vsel %vm566, %v582, %v590
        %v599 = vsel %vm567, %v583, %v591
        %v600 = vsel %vm568, %v584, %v592
        %v601 = vsel %vm569, %v585, %v593
        %v602 = vsel %vm570, %v586, %v594
        %v603 = vsel %vm571, %v587, %v595
        %vm604 = vcmask 1041408
        %v605 = vsel %vm604, %v596, 0.0
        %v606 = vrot.slane %v605, 4
        %v607 = vadd.f32 %v605, %v606
        %v608 = vrot.slane %v607, 2
        %v609 = vadd.f32 %v607, %v608
        %v610 = vrot.slane %v609, 1
        %v611 = vadd.f32 %v609, %v610
        %v612 = vsel %vm604, %v597, 0.0
        %v613 = vrot.slane %v612, 4
        %v614 = vadd.f32 %v612, %v613
        %v615 = vrot.slane %v614, 2
        %v616 = vadd.f32 %v614, %v615
        %v617 = vrot.slane %v616, 1
        %v618 = vadd.f32 %v616, %v617
        %v619 = vsel %vm604, %v598, 0.0
        %v620 = vrot.slane %v619, 4
        %v621 = vadd.f32 %v619, %v620
        %v622 = vrot.slane %v621, 2
        %v623 = vadd.f32 %v621, %v622
        %v624 = vrot.slane %v623, 1
        %v625 = vadd.f32 %v623, %v624
        %v626 = vsel %vm604, %v599, 0.0
        %v627 = vrot.slane %v626, 4
        %v628 = vadd.f32 %v626, %v627
        %v629 = vrot.slane %v628, 2
        %v630 = vadd.f32 %v628, %v629
        %v631 = vrot.slane %v630, 1
        %v632 = vadd.f32 %v630, %v631
        %v633 = vsel %vm604, %v600, 0.0
        %v634 = vrot.slane %v633, 4
        %v635 = vadd.f32 %v633, %v634
        %v636 = vrot.slane %v635, 2
        %v637 = vadd.f32 %v635, %v636
        %v638 = vrot.slane %v637, 1
        %v639 = vadd.f32 %v637, %v638
        %v640 = vsel %vm604, %v601, 0.0
        %v641 = vrot.slane %v640, 4
        %v642 = vadd.f32 %v640, %v641
        %v643 = vrot.slane %v642, 2
        %v644 = vadd.f32 %v642, %v643
        %v645 = vrot.slane %v644, 1
        %v646 = vadd.f32 %v644, %v645
        %v647 = vsel %vm604, %v602, 0.0
        %v648 = vrot.slane %v647, 4
        %v649 = vadd.f32 %v647, %v648
        %v650 = vrot.slane %v649, 2
        %v651 = vadd.f32 %v649, %v650
        %v652 = vrot.slane %v651, 1
        %v653 = vadd.f32 %v651, %v652
        %v654 = vsel %vm604, %v603, 0.0
        %v655 = vrot.slane %v654, 4
        %v656 = vadd.f32 %v654, %v655
        %v657 = vrot.slane %v656, 2
        %v658 = vadd.f32 %v656, %v657
        %v659 = vrot.slane %v658, 1
        %v660 = vadd.f32 %v658, %v659
        %v661 = vsub.f32 %v437, %v540
        %v662 = vsub.f32 %v438, %v541
        %v663 = vsub.f32 %v439, %v542
        %v664 = vsub.f32 %v440, %v543
        %v665 = vsub.f32 %v441, %v544
        %v666 = vsub.f32 %v442, %v545
        %v667 = vsub.f32 %v443, %v546
        %v668 = vsub.f32 %v444, %v547
        %v669 = vand.u32 2147483647, %v661
        %v670 = vand.u32 2147483647, %v662
        %v671 = vand.u32 2147483647, %v663
        %v672 = vand.u32 2147483647, %v664
        %v673 = vand.u32 2147483647, %v665
        %v674 = vand.u32 2147483647, %v666
        %v675 = vand.u32 2147483647, %v667
        %v676 = vand.u32 2147483647, %v668
        %vm677 = vcmp.lt.f32.partialorder %v669, 1.0
        %vm678 = vcmp.lt.f32.partialorder %v670, 1.0
        %vm679 = vcmp.lt.f32.partialorder %v671, 1.0
        %vm680 = vcmp.lt.f32.partialorder %v672, 1.0
        %vm681 = vcmp.lt.f32.partialorder %v673, 1.0
        %vm682 = vcmp.lt.f32.partialorder %v674, 1.0
        %vm683 = vcmp.lt.f32.partialorder %v675, 1.0
        %vm684 = vcmp.lt.f32.partialorder %v676, 1.0
        %v685 = vmul.f32 %v661, 0.5
        %v686 = vmul.f32 %v662, 0.5
        %v687 = vmul.f32 %v663, 0.5
        %v688 = vmul.f32 %v664, 0.5
        %v689 = vmul.f32 %v665, 0.5
        %v690 = vmul.f32 %v666, 0.5
        %v691 = vmul.f32 %v667, 0.5
        %v692 = vmul.f32 %v668, 0.5
        %v693 = vmul.f32 %v685, %v661
        %v694 = vmul.f32 %v686, %v662
        %v695 = vmul.f32 %v687, %v663
        %v696 = vmul.f32 %v688, %v664
        %v697 = vmul.f32 %v689, %v665
        %v698 = vmul.f32 %v690, %v666
        %v699 = vmul.f32 %v691, %v667
        %v700 = vmul.f32 %v692, %v668
        %v701 = vsub.f32 %v669, 0.5
        %v702 = vsub.f32 %v670, 0.5
        %v703 = vsub.f32 %v671, 0.5
        %v704 = vsub.f32 %v672, 0.5
        %v705 = vsub.f32 %v673, 0.5
        %v706 = vsub.f32 %v674, 0.5
        %v707 = vsub.f32 %v675, 0.5
        %v708 = vsub.f32 %v676, 0.5
        %v709 = vsel %vm677, %v693, %v701
        %v710 = vsel %vm678, %v694, %v702
        %v711 = vsel %vm679, %v695, %v703
        %v712 = vsel %vm680, %v696, %v704
        %v713 = vsel %vm681, %v697, %v705
        %v714 = vsel %vm682, %v698, %v706
        %v715 = vsel %vm683, %v699, %v707
        %v716 = vsel %vm684, %v700, %v708
        %v725 = vrot.slane %v709, 2
        %v726 = vrot.slane %v710, 2
        %v727 = vrot.slane %v711, 2
        %v728 = vrot.slane %v712, 2
        %v729 = vrot.slane %v713, 2
        %v730 = vrot.slane %v714, 2
        %v731 = vrot.slane %v715, 2
        %v732 = vrot.slane %v716, 2
        %v741 = vsel %vm604, %v725, 0.0
        %v742 = vrot.slane %v741, 4
        %v743 = vadd.f32 %v741, %v742
        %v744 = vrot.slane %v743, 2
        %v745 = vadd.f32 %v743, %v744
        %v746 = vrot.slane %v745, 1
        %v747 = vadd.f32 %v745, %v746
        %v748 = vsel %vm604, %v726, 0.0
        %v749 = vrot.slane %v748, 4
        %v750 = vadd.f32 %v748, %v749
        %v751 = vrot.slane %v750, 2
        %v752 = vadd.f32 %v750, %v751
        %v753 = vrot.slane %v752, 1
        %v754 = vadd.f32 %v752, %v753
        %v755 = vsel %vm604, %v727, 0.0
        %v756 = vrot.slane %v755, 4
        %v757 = vadd.f32 %v755, %v756
        %v758 = vrot.slane %v757, 2
        %v759 = vadd.f32 %v757, %v758
        %v760 = vrot.slane %v759, 1
        %v761 = vadd.f32 %v759, %v760
        %v762 = vsel %vm604, %v728, 0.0
        %v763 = vrot.slane %v762, 4
        %v764 = vadd.f32 %v762, %v763
        %v765 = vrot.slane %v764, 2
        %v766 = vadd.f32 %v764, %v765
        %v767 = vrot.slane %v766, 1
        %v768 = vadd.f32 %v766, %v767
        %v769 = vsel %vm604, %v729, 0.0
        %v770 = vrot.slane %v769, 4
        %v771 = vadd.f32 %v769, %v770
        %v772 = vrot.slane %v771, 2
        %v773 = vadd.f32 %v771, %v772
        %v774 = vrot.slane %v773, 1
        %v775 = vadd.f32 %v773, %v774
        %v776 = vsel %vm604, %v730, 0.0
        %v777 = vrot.slane %v776, 4
        %v778 = vadd.f32 %v776, %v777
        %v779 = vrot.slane %v778, 2
        %v780 = vadd.f32 %v778, %v779
        %v781 = vrot.slane %v780, 1
        %v782 = vadd.f32 %v780, %v781
        %v783 = vsel %vm604, %v731, 0.0
        %v784 = vrot.slane %v783, 4
        %v785 = vadd.f32 %v783, %v784
        %v786 = vrot.slane %v785, 2
        %v787 = vadd.f32 %v785, %v786
        %v788 = vrot.slane %v787, 1
        %v789 = vadd.f32 %v787, %v788
        %v790 = vsel %vm604, %v732, 0.0
        %v791 = vrot.slane %v790, 4
        %v792 = vadd.f32 %v790, %v791
        %v793 = vrot.slane %v792, 2
        %v794 = vadd.f32 %v792, %v793
        %v795 = vrot.slane %v794, 1
        %v796 = vadd.f32 %v794, %v795
        %v797 = vadd.f32 %v611, %v747
        %v798 = vadd.f32 %v618, %v754
        %v799 = vadd.f32 %v625, %v761
        %v800 = vadd.f32 %v632, %v768
        %v801 = vadd.f32 %v639, %v775
        %v802 = vadd.f32 %v646, %v782
        %v803 = vadd.f32 %v653, %v789
        %v804 = vadd.f32 %v660, %v796
        %v805 = vld [vmem:[#allocation5] sm:$0xff]
        %vm814 = vcmask 1041409
        %v815 = vsel %vm814, %v798, %v797
        %vm816 = vcmask 1042434
        %v817 = vsel %vm816, %v799, %v815
        %vm818 = vcmask 1043459
        %v819 = vsel %vm818, %v800, %v817
        %vm820 = vcmask 1044484
        %v821 = vsel %vm820, %v801, %v819
        %vm822 = vcmask 1045509
        %v823 = vsel %vm822, %v802, %v821
        %vm824 = vcmask 1046534
        %v825 = vsel %vm824, %v803, %v823
        %vm826 = vcmask 1047559
        %v827 = vsel %vm826, %v804, %v825
        %v829 = vmul.f32 %v481, %v827
        %830 = vadd.xlane.f32.xlu0 %v829
        %v831 = vpop.xlane.xlu0 %830
        %v832 = vadd.f32 %v805, %v831
        %833 = vst.msk [vmem:[#allocation5] sm:$0xff] %vm486, %v832
        %v834 = vrot.slane %v470, 4
        %v835 = vmax.f32 %v470, %v834
        %v836 = vrot.slane %v835, 2
        %v837 = vmax.f32 %v835, %v836
        %v838 = vrot.slane %v837, 1
        %v839 = vmax.f32 %v837, %v838
        %v840 = vrot.slane %v471, 4
        %v841 = vmax.f32 %v471, %v840
        %v842 = vrot.slane %v841, 2
        %v843 = vmax.f32 %v841, %v842
        %v844 = vrot.slane %v843, 1
        %v845 = vmax.f32 %v843, %v844
        %v846 = vrot.slane %v472, 4
        %v847 = vmax.f32 %v472, %v846
        %v848 = vrot.slane %v847, 2
        %v849 = vmax.f32 %v847, %v848
        %v850 = vrot.slane %v849, 1
        %v851 = vmax.f32 %v849, %v850
        %v852 = vrot.slane %v473, 4
        %v853 = vmax.f32 %v473, %v852
        %v854 = vrot.slane %v853, 2
        %v855 = vmax.f32 %v853, %v854
        %v856 = vrot.slane %v855, 1
        %v857 = vmax.f32 %v855, %v856
        %v858 = vrot.slane %v474, 4
        %v859 = vmax.f32 %v474, %v858
        %v860 = vrot.slane %v859, 2
        %v861 = vmax.f32 %v859, %v860
        %v862 = vrot.slane %v861, 1
        %v863 = vmax.f32 %v861, %v862
        %v864 = vrot.slane %v475, 4
        %v865 = vmax.f32 %v475, %v864
        %v866 = vrot.slane %v865, 2
        %v867 = vmax.f32 %v865, %v866
        %v868 = vrot.slane %v867, 1
        %v869 = vmax.f32 %v867, %v868
        %v870 = vrot.slane %v476, 4
        %v871 = vmax.f32 %v476, %v870
        %v872 = vrot.slane %v871, 2
        %v873 = vmax.f32 %v871, %v872
        %v874 = vrot.slane %v873, 1
        %v875 = vmax.f32 %v873, %v874
        %v876 = vrot.slane %v477, 4
        %v877 = vmax.f32 %v477, %v876
        %v878 = vrot.slane %v877, 2
        %v879 = vmax.f32 %v877, %v878
        %v880 = vrot.slane %v879, 1
        %v881 = vmax.f32 %v879, %v880
        %v882 = vsub.f32 %v470, %v839
        %v883 = vsub.f32 %v471, %v845
        %v884 = vsub.f32 %v472, %v851
        %v885 = vsub.f32 %v473, %v857
        %v886 = vsub.f32 %v474, %v863
        %v887 = vsub.f32 %v475, %v869
        %v888 = vsub.f32 %v476, %v875
        %v889 = vsub.f32 %v477, %v881
        %v890 = vmul.f32 %v882, 1.442695
        %v891 = vpow.pop %v890
        %v892 = vmul.f32 %v883, 1.442695
        %v893 = vpow.pop %v892
        %v894 = vmul.f32 %v884, 1.442695
        %v895 = vpow.pop %v894
        %v896 = vmul.f32 %v885, 1.442695
        %v897 = vpow.pop %v896
        %v898 = vmul.f32 %v886, 1.442695
        %v899 = vpow.pop %v898
        %v900 = vmul.f32 %v887, 1.442695
        %v901 = vpow.pop %v900
        %v902 = vmul.f32 %v888, 1.442695
        %v903 = vpow.pop %v902
        %v904 = vmul.f32 %v889, 1.442695
        %v905 = vpow.pop %v904
        %v906 = vrot.slane %v891, 4
        %v907 = vadd.f32 %v891, %v906
        %v908 = vrot.slane %v907, 2
        %v909 = vadd.f32 %v907, %v908
        %v910 = vrot.slane %v909, 1
        %v911 = vadd.f32 %v909, %v910
        %v912 = vrot.slane %v893, 4
        %v913 = vadd.f32 %v893, %v912
        %v914 = vrot.slane %v913, 2
        %v915 = vadd.f32 %v913, %v914
        %v916 = vrot.slane %v915, 1
        %v917 = vadd.f32 %v915, %v916
        %v918 = vrot.slane %v895, 4
        %v919 = vadd.f32 %v895, %v918
        %v920 = vrot.slane %v919, 2
        %v921 = vadd.f32 %v919, %v920
        %v922 = vrot.slane %v921, 1
        %v923 = vadd.f32 %v921, %v922
        %v924 = vrot.slane %v897, 4
        %v925 = vadd.f32 %v897, %v924
        %v926 = vrot.slane %v925, 2
        %v927 = vadd.f32 %v925, %v926
        %v928 = vrot.slane %v927, 1
        %v929 = vadd.f32 %v927, %v928
        %v930 = vrot.slane %v899, 4
        %v931 = vadd.f32 %v899, %v930
        %v932 = vrot.slane %v931, 2
        %v933 = vadd.f32 %v931, %v932
        %v934 = vrot.slane %v933, 1
        %v935 = vadd.f32 %v933, %v934
        %v936 = vrot.slane %v901, 4
        %v937 = vadd.f32 %v901, %v936
        %v938 = vrot.slane %v937, 2
        %v939 = vadd.f32 %v937, %v938
        %v940 = vrot.slane %v939, 1
        %v941 = vadd.f32 %v939, %v940
        %v942 = vrot.slane %v903, 4
        %v943 = vadd.f32 %v903, %v942
        %v944 = vrot.slane %v943, 2
        %v945 = vadd.f32 %v943, %v944
        %v946 = vrot.slane %v945, 1
        %v947 = vadd.f32 %v945, %v946
        %v948 = vrot.slane %v905, 4
        %v949 = vadd.f32 %v905, %v948
        %v950 = vrot.slane %v949, 2
        %v951 = vadd.f32 %v949, %v950
        %v952 = vrot.slane %v951, 1
        %v953 = vadd.f32 %v951, %v952
        %v954 = vlog2.pop %v911
        %v955 = vmul.f32 %v954, 0.6931472
        %v956 = vlog2.pop %v917
        %v957 = vmul.f32 %v956, 0.6931472
        %v958 = vlog2.pop %v923
        %v959 = vmul.f32 %v958, 0.6931472
        %v960 = vlog2.pop %v929
        %v961 = vmul.f32 %v960, 0.6931472
        %v962 = vlog2.pop %v935
        %v963 = vmul.f32 %v962, 0.6931472
        %v964 = vlog2.pop %v941
        %v965 = vmul.f32 %v964, 0.6931472
        %v966 = vlog2.pop %v947
        %v967 = vmul.f32 %v966, 0.6931472
        %v968 = vlog2.pop %v953
        %v969 = vmul.f32 %v968, 0.6931472
        %v970 = vadd.f32 %v839, %v955
        %v971 = vadd.f32 %v845, %v957
        %v972 = vadd.f32 %v851, %v959
        %v973 = vadd.f32 %v857, %v961
        %v974 = vadd.f32 %v863, %v963
        %v975 = vadd.f32 %v869, %v965
        %v976 = vadd.f32 %v875, %v967
        %v977 = vadd.f32 %v881, %v969
        %v978 = vlaneseq
        %v979 = vshrl.u32 %v978, 7
        %v980 = vcombine.high %v478, %v478
        %v982 = vunpack.c.l.s4 1966171168
        %v983 = vunpack.c.0.s8 %v982
        %v984 = vlaneseq
        %v985 = vshrl.u32 %v984, 7
        %v986 = vsub.s32 %v983, %v985
        %v987 = vrot.slane %v478, %v986
        %v989 = vunpack.c.l.s4 1966171168
        %v990 = vunpack.c.0.s8 %v989
        %v991 = vlaneseq
        %v992 = vshrl.u32 %v991, 7
        %v993 = vsub.s32 %v990, %v992
        %v994 = vrot.slane %v980, %v993
        %v995 = vcombine.high %v987, %v987
        %v996 = vcombine.high %v994, %v994
        %v998 = vunpack.c.l.s4 1966171168
        %v999 = vunpack.c.0.s8 %v998
        %v1000 = vlaneseq
        %v1001 = vshrl.u32 %v1000, 7
        %v1002 = vsub.s32 %v999, %v1001
        %v1003 = vrot.slane %v987, %v1002
        %v1005 = vunpack.c.l.s4 1966171168
        %v1006 = vunpack.c.0.s8 %v1005
        %v1007 = vlaneseq
        %v1008 = vshrl.u32 %v1007, 7
        %v1009 = vsub.s32 %v1006, %v1008
        %v1010 = vrot.slane %v994, %v1009
        %v1012 = vunpack.c.l.s4 1966171168
        %v1013 = vunpack.c.0.s8 %v1012
        %v1014 = vlaneseq
        %v1015 = vshrl.u32 %v1014, 7
        %v1016 = vsub.s32 %v1013, %v1015
        %v1017 = vrot.slane %v995, %v1016
        %v1019 = vunpack.c.l.s4 1966171168
        %v1020 = vunpack.c.0.s8 %v1019
        %v1021 = vlaneseq
        %v1022 = vshrl.u32 %v1021, 7
        %v1023 = vsub.s32 %v1020, %v1022
        %v1024 = vrot.slane %v996, %v1023
        %v1025 = vcombine.high %v1003, %v1003
        %v1026 = vcombine.high %v1010, %v1010
        %v1027 = vcombine.high %v1017, %v1017
        %v1028 = vcombine.high %v1024, %v1024
        %v1029 = vlaneseq
        %v1030 = vshrl.u32 %v1029, 7
        %v1031 = vsub.s32 0, %v1030
        %v1032 = vrot.slane %v1003, %v1031
        %v1033 = vlaneseq
        %v1034 = vshrl.u32 %v1033, 7
        %v1035 = vsub.s32 0, %v1034
        %v1036 = vrot.slane %v1017, %v1035
        %v1037 = vlaneseq
        %v1038 = vshrl.u32 %v1037, 7
        %v1039 = vsub.s32 0, %v1038
        %v1040 = vrot.slane %v1025, %v1039
        %v1041 = vlaneseq
        %v1042 = vshrl.u32 %v1041, 7
        %v1043 = vsub.s32 0, %v1042
        %v1044 = vrot.slane %v1027, %v1043
        %v1045 = vlaneseq
        %v1046 = vshrl.u32 %v1045, 7
        %v1047 = vsub.s32 0, %v1046
        %v1048 = vrot.slane %v1010, %v1047
        %v1049 = vlaneseq
        %v1050 = vshrl.u32 %v1049, 7
        %v1051 = vsub.s32 0, %v1050
        %v1052 = vrot.slane %v1024, %v1051
        %v1053 = vlaneseq
        %v1054 = vshrl.u32 %v1053, 7
        %v1055 = vsub.s32 0, %v1054
        %v1056 = vrot.slane %v1026, %v1055
        %v1057 = vlaneseq
        %v1058 = vshrl.u32 %v1057, 7
        %v1059 = vsub.s32 0, %v1058
        %v1060 = vrot.slane %v1028, %v1059
        %vm1061 = vcmp.eq.s32.totalorder %v979, %v1032
        %vm1062 = vcmp.eq.s32.totalorder %v979, %v1036
        %vm1063 = vcmp.eq.s32.totalorder %v979, %v1040
        %vm1064 = vcmp.eq.s32.totalorder %v979, %v1044
        %vm1065 = vcmp.eq.s32.totalorder %v979, %v1048
        %vm1066 = vcmp.eq.s32.totalorder %v979, %v1052
        %vm1067 = vcmp.eq.s32.totalorder %v979, %v1056
        %vm1068 = vcmp.eq.s32.totalorder %v979, %v1060
        %v1069 = vsel %vm1061, %v470, 0.0
        %v1070 = vsel %vm1062, %v471, 0.0
        %v1071 = vsel %vm1063, %v472, 0.0
        %v1072 = vsel %vm1064, %v473, 0.0
        %v1073 = vsel %vm1065, %v474, 0.0
        %v1074 = vsel %vm1066, %v475, 0.0
        %v1075 = vsel %vm1067, %v476, 0.0
        %v1076 = vsel %vm1068, %v477, 0.0
        %v1077 = vrot.slane %v1069, 4
        %v1078 = vadd.f32 %v1069, %v1077
        %v1079 = vrot.slane %v1078, 2
        %v1080 = vadd.f32 %v1078, %v1079
        %v1081 = vrot.slane %v1080, 1
        %v1082 = vadd.f32 %v1080, %v1081
        %v1083 = vrot.slane %v1070, 4
        %v1084 = vadd.f32 %v1070, %v1083
        %v1085 = vrot.slane %v1084, 2
        %v1086 = vadd.f32 %v1084, %v1085
        %v1087 = vrot.slane %v1086, 1
        %v1088 = vadd.f32 %v1086, %v1087
        %v1089 = vrot.slane %v1071, 4
        %v1090 = vadd.f32 %v1071, %v1089
        %v1091 = vrot.slane %v1090, 2
        %v1092 = vadd.f32 %v1090, %v1091
        %v1093 = vrot.slane %v1092, 1
        %v1094 = vadd.f32 %v1092, %v1093
        %v1095 = vrot.slane %v1072, 4
        %v1096 = vadd.f32 %v1072, %v1095
        %v1097 = vrot.slane %v1096, 2
        %v1098 = vadd.f32 %v1096, %v1097
        %v1099 = vrot.slane %v1098, 1
        %v1100 = vadd.f32 %v1098, %v1099
        %v1101 = vrot.slane %v1073, 4
        %v1102 = vadd.f32 %v1073, %v1101
        %v1103 = vrot.slane %v1102, 2
        %v1104 = vadd.f32 %v1102, %v1103
        %v1105 = vrot.slane %v1104, 1
        %v1106 = vadd.f32 %v1104, %v1105
        %v1107 = vrot.slane %v1074, 4
        %v1108 = vadd.f32 %v1074, %v1107
        %v1109 = vrot.slane %v1108, 2
        %v1110 = vadd.f32 %v1108, %v1109
        %v1111 = vrot.slane %v1110, 1
        %v1112 = vadd.f32 %v1110, %v1111
        %v1113 = vrot.slane %v1075, 4
        %v1114 = vadd.f32 %v1075, %v1113
        %v1115 = vrot.slane %v1114, 2
        %v1116 = vadd.f32 %v1114, %v1115
        %v1117 = vrot.slane %v1116, 1
        %v1118 = vadd.f32 %v1116, %v1117
        %v1119 = vrot.slane %v1076, 4
        %v1120 = vadd.f32 %v1076, %v1119
        %v1121 = vrot.slane %v1120, 2
        %v1122 = vadd.f32 %v1120, %v1121
        %v1123 = vrot.slane %v1122, 1
        %v1124 = vadd.f32 %v1122, %v1123
        %v1125 = vsub.f32 %v970, %v1082
        %v1126 = vsub.f32 %v971, %v1088
        %v1127 = vsub.f32 %v972, %v1094
        %v1128 = vsub.f32 %v973, %v1100
        %v1129 = vsub.f32 %v974, %v1106
        %v1130 = vsub.f32 %v975, %v1112
        %v1131 = vsub.f32 %v976, %v1118
        %v1132 = vsub.f32 %v977, %v1124
        %s1133 = smul.u32 %s33, 128
        %v1134 = vlaneseq
        %v1135 = vand.u32 %v1134, 127
        %v1136 = vstv %s1133
        %v1137 = vadd.s32 %v1136, %v1135
        %vm1138 = vcmp.lt.s32.totalorder %v1137, 300
        %v1147 = vsel %vm814, %v1126, %v1125
        %v1148 = vsel %vm816, %v1127, %v1147
        %v1149 = vsel %vm818, %v1128, %v1148
        %v1150 = vsel %vm820, %v1129, %v1149
        %v1151 = vsel %vm822, %v1130, %v1150
        %v1152 = vsel %vm824, %v1131, %v1151
        %v1153 = vsel %vm826, %v1132, %v1152
        %v1155 = vsel %vm1138, %v1153, 0.0
        %v1156 = vsel %vm479, 0.0, %v1155
        %v1157 = vand.u32 2147483647, %v1156
        %v1158 = vld [vmem:[#allocation6] sm:$0xff]
        %v1159 = vmul.f32 %v1155, %v481
        %1160 = vadd.xlane.f32.xlu0 %v1159
        %v1161 = vpop.xlane.xlu0 %1160
        %v1162 = vadd.f32 %v1158, %v1161
        %1163 = vst.msk [vmem:[#allocation6] sm:$0xff] %vm486, %v1162
        %s1164 = smul.u32 %s33, 8
        %s1165 = scalar_lea.vmem [#allocation2], %s1164
        %1166 = vst [vmem:[%s1165] sm:$0xff] %v1155
        %s1167 = scalar_lea.vmem [#allocation3], %s1164
        %1168 = vst [vmem:[%s1167] sm:$0xff] %v1157
        %p1169 = scmp.eq.s32.totalorder %s33, 2
        // Predicated region
        $region65: #{tpu_custom_call.1} parent=39 // pred_check
          %p1170 = pneg %p1169
        $region66: #{tpu_custom_call.1} parent=39 // pred_check_branch
          %1172 = sbr.rel (%p1170) target = $region68
        $region67: #{tpu_custom_call.1} parent=39 // pred_region
          %v1173 = vld [vmem:[#allocation4] sm:$0xff]
          %v1174 = vmul.f32 %v1173, 3.0
          %v1175 = vmin.f32 %v1174, 300.0
          %v1176 = vld [vmem:[#allocation2] sm:$0xff]
          %v1177 = vld [vmem:[#allocation2 + $0x8] sm:$0xff]
          %v1178 = vld [vmem:[#allocation2 + $0x10] sm:$0xff]
          %v1179 = vld [vmem:[#allocation3] sm:$0xff]
          %v1180 = vld [vmem:[#allocation3 + $0x8] sm:$0xff]
          %v1181 = vld [vmem:[#allocation3 + $0x10] sm:$0xff]
          %vm1185 = vcmp.ge.s32.totalorder %v1179, 1069547520
          %vm1186 = vcmp.ge.s32.totalorder %v1180, 1069547520
          %vm1187 = vcmp.ge.s32.totalorder %v1181, 1069547520
          %v1188 = vsel %vm1185, 1.0, 0.0
          %v1189 = vsel %vm1186, 1.0, 0.0
          %v1190 = vsel %vm1187, 1.0, 0.0
          %v1191 = vadd.f32 %v1188, %v1189
          %v1192 = vadd.f32 %v1191, %v1190
          %1193 = vadd.xlane.f32.xlu0 %v1192
          %v1194 = vpop.xlane.xlu0 %1193
          %vm1195 = vcmp.ge.f32.partialorder %v1194, %v1175
          %v1196 = vsel %vm1195, 1069547520, 0
          %v1197 = vsel %vm1195, 2139095039, 1069547519
          %v1198 = vsub.s32 %v1197, %v1196
          %v1199 = vadd.s32 %v1198, 1
          %v1200 = vshra.s32 %v1199, 1
          %v1201 = vadd.s32 %v1196, %v1200
          %1202 = vset.pattern.permute.xlu0 0
          %1203 = vperm.xlu0 %1202, %v1201
          %v1204 = vpop.permute.xlu0 %1203
          %vm1205 = vcmp.ge.s32.totalorder %v1179, %v1204
          %vm1206 = vcmp.ge.s32.totalorder %v1180, %v1204
          %vm1207 = vcmp.ge.s32.totalorder %v1181, %v1204
          %v1208 = vsel %vm1205, 1.0, 0.0
          %v1209 = vsel %vm1206, 1.0, 0.0
          %v1210 = vsel %vm1207, 1.0, 0.0
          %v1211 = vadd.f32 %v1208, %v1209
          %v1212 = vadd.f32 %v1211, %v1210
          %1213 = vadd.xlane.f32.xlu0 %v1212
          %v1214 = vpop.xlane.xlu0 %1213
          %vm1215 = vcmp.ge.f32.partialorder %v1214, %v1175
          %v1216 = vsel %vm1215, %v1201, %v1196
          %v1217 = vsub.s32 %v1201, 1
          %v1218 = vsel %vm1215, %v1197, %v1217
          %v1219 = vsub.s32 %v1218, %v1216
          %v1220 = vadd.s32 %v1219, 1
          %v1221 = vshra.s32 %v1220, 1
          %v1222 = vadd.s32 %v1216, %v1221
          %1223 = vset.pattern.permute.xlu0 0
          %1224 = vperm.xlu0 %1223, %v1222
          %v1225 = vpop.permute.xlu0 %1224
          %vm1226 = vcmp.ge.s32.totalorder %v1179, %v1225
          %vm1227 = vcmp.ge.s32.totalorder %v1180, %v1225
          %vm1228 = vcmp.ge.s32.totalorder %v1181, %v1225
          %v1229 = vsel %vm1226, 1.0, 0.0
          %v1230 = vsel %vm1227, 1.0, 0.0
          %v1231 = vsel %vm1228, 1.0, 0.0
          %v1232 = vadd.f32 %v1229, %v1230
          %v1233 = vadd.f32 %v1232, %v1231
          %1234 = vadd.xlane.f32.xlu0 %v1233
          %v1235 = vpop.xlane.xlu0 %1234
          %vm1236 = vcmp.ge.f32.partialorder %v1235, %v1175
          %v1237 = vsel %vm1236, %v1222, %v1216
          %v1238 = vsub.s32 %v1222, 1
          %v1239 = vsel %vm1236, %v1218, %v1238
          %v1240 = vsub.s32 %v1239, %v1237
          %v1241 = vadd.s32 %v1240, 1
          %v1242 = vshra.s32 %v1241, 1
          %v1243 = vadd.s32 %v1237, %v1242
          %1244 = vset.pattern.permute.xlu0 0
          %1245 = vperm.xlu0 %1244, %v1243
          %v1246 = vpop.permute.xlu0 %1245
          %vm1247 = vcmp.ge.s32.totalorder %v1179, %v1246
          %vm1248 = vcmp.ge.s32.totalorder %v1180, %v1246
          %vm1249 = vcmp.ge.s32.totalorder %v1181, %v1246
          %v1250 = vsel %vm1247, 1.0, 0.0
          %v1251 = vsel %vm1248, 1.0, 0.0
          %v1252 = vsel %vm1249, 1.0, 0.0
          %v1253 = vadd.f32 %v1250, %v1251
          %v1254 = vadd.f32 %v1253, %v1252
          %1255 = vadd.xlane.f32.xlu0 %v1254
          %v1256 = vpop.xlane.xlu0 %1255
          %vm1257 = vcmp.ge.f32.partialorder %v1256, %v1175
          %v1258 = vsel %vm1257, %v1243, %v1237
          %v1259 = vsub.s32 %v1243, 1
          %v1260 = vsel %vm1257, %v1239, %v1259
          %v1261 = vsub.s32 %v1260, %v1258
          %v1262 = vadd.s32 %v1261, 1
          %v1263 = vshra.s32 %v1262, 1
          %v1264 = vadd.s32 %v1258, %v1263
          %1265 = vset.pattern.permute.xlu0 0
          %1266 = vperm.xlu0 %1265, %v1264
          %v1267 = vpop.permute.xlu0 %1266
          %vm1268 = vcmp.ge.s32.totalorder %v1179, %v1267
          %vm1269 = vcmp.ge.s32.totalorder %v1180, %v1267
          %vm1270 = vcmp.ge.s32.totalorder %v1181, %v1267
          %v1271 = vsel %vm1268, 1.0, 0.0
          %v1272 = vsel %vm1269, 1.0, 0.0
          %v1273 = vsel %vm1270, 1.0, 0.0
          %v1274 = vadd.f32 %v1271, %v1272
          %v1275 = vadd.f32 %v1274, %v1273
          %1276 = vadd.xlane.f32.xlu0 %v1275
          %v1277 = vpop.xlane.xlu0 %1276
          %vm1278 = vcmp.ge.f32.partialorder %v1277, %v1175
          %v1279 = vsel %vm1278, %v1264, %v1258
          %v1280 = vsub.s32 %v1264, 1
          %v1281 = vsel %vm1278, %v1260, %v1280
          %v1282 = vsub.s32 %v1281, %v1279
          %v1283 = vadd.s32 %v1282, 1
          %v1284 = vshra.s32 %v1283, 1
          %v1285 = vadd.s32 %v1279, %v1284
          %1286 = vset.pattern.permute.xlu0 0
          %1287 = vperm.xlu0 %1286, %v1285
          %v1288 = vpop.permute.xlu0 %1287
          %vm1289 = vcmp.ge.s32.totalorder %v1179, %v1288
          %vm1290 = vcmp.ge.s32.totalorder %v1180, %v1288
          %vm1291 = vcmp.ge.s32.totalorder %v1181, %v1288
          %v1292 = vsel %vm1289, 1.0, 0.0
          %v1293 = vsel %vm1290, 1.0, 0.0
          %v1294 = vsel %vm1291, 1.0, 0.0
          %v1295 = vadd.f32 %v1292, %v1293
          %v1296 = vadd.f32 %v1295, %v1294
          %1297 = vadd.xlane.f32.xlu0 %v1296
          %v1298 = vpop.xlane.xlu0 %1297
          %vm1299 = vcmp.ge.f32.partialorder %v1298, %v1175
          %v1300 = vsel %vm1299, %v1285, %v1279
          %v1301 = vsub.s32 %v1285, 1
          %v1302 = vsel %vm1299, %v1281, %v1301
          %v1303 = vsub.s32 %v1302, %v1300
          %v1304 = vadd.s32 %v1303, 1
          %v1305 = vshra.s32 %v1304, 1
          %v1306 = vadd.s32 %v1300, %v1305
          %1307 = vset.pattern.permute.xlu0 0
          %1308 = vperm.xlu0 %1307, %v1306
          %v1309 = vpop.permute.xlu0 %1308
          %vm1310 = vcmp.ge.s32.totalorder %v1179, %v1309
          %vm1311 = vcmp.ge.s32.totalorder %v1180, %v1309
          %vm1312 = vcmp.ge.s32.totalorder %v1181, %v1309
          %v1313 = vsel %vm1310, 1.0, 0.0
          %v1314 = vsel %vm1311, 1.0, 0.0
          %v1315 = vsel %vm1312, 1.0, 0.0
          %v1316 = vadd.f32 %v1313, %v1314
          %v1317 = vadd.f32 %v1316, %v1315
          %1318 = vadd.xlane.f32.xlu0 %v1317
          %v1319 = vpop.xlane.xlu0 %1318
          %vm1320 = vcmp.ge.f32.partialorder %v1319, %v1175
          %v1321 = vsel %vm1320, %v1306, %v1300
          %v1322 = vsub.s32 %v1306, 1
          %v1323 = vsel %vm1320, %v1302, %v1322
          %v1324 = vsub.s32 %v1323, %v1321
          %v1325 = vadd.s32 %v1324, 1
          %v1326 = vshra.s32 %v1325, 1
          %v1327 = vadd.s32 %v1321, %v1326
          %1328 = vset.pattern.permute.xlu0 0
          %1329 = vperm.xlu0 %1328, %v1327
          %v1330 = vpop.permute.xlu0 %1329
          %vm1331 = vcmp.ge.s32.totalorder %v1179, %v1330
          %vm1332 = vcmp.ge.s32.totalorder %v1180, %v1330
          %vm1333 = vcmp.ge.s32.totalorder %v1181, %v1330
          %v1334 = vsel %vm1331, 1.0, 0.0
          %v1335 = vsel %vm1332, 1.0, 0.0
          %v1336 = vsel %vm1333, 1.0, 0.0
          %v1337 = vadd.f32 %v1334, %v1335
          %v1338 = vadd.f32 %v1337, %v1336
          %1339 = vadd.xlane.f32.xlu0 %v1338
          %v1340 = vpop.xlane.xlu0 %1339
          %vm1341 = vcmp.ge.f32.partialorder %v1340, %v1175
          %v1342 = vsel %vm1341, %v1327, %v1321
          %v1343 = vsub.s32 %v1327, 1
          %v1344 = vsel %vm1341, %v1323, %v1343
          %v1345 = vsub.s32 %v1344, %v1342
          %v1346 = vadd.s32 %v1345, 1
          %v1347 = vshra.s32 %v1346, 1
          %v1348 = vadd.s32 %v1342, %v1347
          %1349 = vset.pattern.permute.xlu0 0
          %1350 = vperm.xlu0 %1349, %v1348
          %v1351 = vpop.permute.xlu0 %1350
          %vm1352 = vcmp.ge.s32.totalorder %v1179, %v1351
          %vm1353 = vcmp.ge.s32.totalorder %v1180, %v1351
          %vm1354 = vcmp.ge.s32.totalorder %v1181, %v1351
          %v1355 = vsel %vm1352, 1.0, 0.0
          %v1356 = vsel %vm1353, 1.0, 0.0
          %v1357 = vsel %vm1354, 1.0, 0.0
          %v1358 = vadd.f32 %v1355, %v1356
          %v1359 = vadd.f32 %v1358, %v1357
          %1360 = vadd.xlane.f32.xlu0 %v1359
          %v1361 = vpop.xlane.xlu0 %1360
          %vm1362 = vcmp.ge.f32.partialorder %v1361, %v1175
          %v1363 = vsel %vm1362, %v1348, %v1342
          %v1364 = vsub.s32 %v1348, 1
          %v1365 = vsel %vm1362, %v1344, %v1364
          %v1366 = vsub.s32 %v1365, %v1363
          %v1367 = vadd.s32 %v1366, 1
          %v1368 = vshra.s32 %v1367, 1
          %v1369 = vadd.s32 %v1363, %v1368
          %1370 = vset.pattern.permute.xlu0 0
          %1371 = vperm.xlu0 %1370, %v1369
          %v1372 = vpop.permute.xlu0 %1371
          %vm1373 = vcmp.ge.s32.totalorder %v1179, %v1372
          %vm1374 = vcmp.ge.s32.totalorder %v1180, %v1372
          %vm1375 = vcmp.ge.s32.totalorder %v1181, %v1372
          %v1376 = vsel %vm1373, 1.0, 0.0
          %v1377 = vsel %vm1374, 1.0, 0.0
          %v1378 = vsel %vm1375, 1.0, 0.0
          %v1379 = vadd.f32 %v1376, %v1377
          %v1380 = vadd.f32 %v1379, %v1378
          %1381 = vadd.xlane.f32.xlu0 %v1380
          %v1382 = vpop.xlane.xlu0 %1381
          %vm1383 = vcmp.ge.f32.partialorder %v1382, %v1175
          %v1384 = vsel %vm1383, %v1369, %v1363
          %v1385 = vsub.s32 %v1369, 1
          %v1386 = vsel %vm1383, %v1365, %v1385
          %v1387 = vsub.s32 %v1386, %v1384
          %v1388 = vadd.s32 %v1387, 1
          %v1389 = vshra.s32 %v1388, 1
          %v1390 = vadd.s32 %v1384, %v1389
          %1391 = vset.pattern.permute.xlu0 0
          %1392 = vperm.xlu0 %1391, %v1390
          %v1393 = vpop.permute.xlu0 %1392
          %vm1394 = vcmp.ge.s32.totalorder %v1179, %v1393
          %vm1395 = vcmp.ge.s32.totalorder %v1180, %v1393
          %vm1396 = vcmp.ge.s32.totalorder %v1181, %v1393
          %v1397 = vsel %vm1394, 1.0, 0.0
          %v1398 = vsel %vm1395, 1.0, 0.0
          %v1399 = vsel %vm1396, 1.0, 0.0
          %v1400 = vadd.f32 %v1397, %v1398
          %v1401 = vadd.f32 %v1400, %v1399
          %1402 = vadd.xlane.f32.xlu0 %v1401
          %v1403 = vpop.xlane.xlu0 %1402
          %vm1404 = vcmp.ge.f32.partialorder %v1403, %v1175
          %v1405 = vsel %vm1404, %v1390, %v1384
          %v1406 = vsub.s32 %v1390, 1
          %v1407 = vsel %vm1404, %v1386, %v1406
          %v1408 = vsub.s32 %v1407, %v1405
          %v1409 = vadd.s32 %v1408, 1
          %v1410 = vshra.s32 %v1409, 1
          %v1411 = vadd.s32 %v1405, %v1410
          %1412 = vset.pattern.permute.xlu0 0
          %1413 = vperm.xlu0 %1412, %v1411
          %v1414 = vpop.permute.xlu0 %1413
          %vm1415 = vcmp.ge.s32.totalorder %v1179, %v1414
          %vm1416 = vcmp.ge.s32.totalorder %v1180, %v1414
          %vm1417 = vcmp.ge.s32.totalorder %v1181, %v1414
          %v1418 = vsel %vm1415, 1.0, 0.0
          %v1419 = vsel %vm1416, 1.0, 0.0
          %v1420 = vsel %vm1417, 1.0, 0.0
          %v1421 = vadd.f32 %v1418, %v1419
          %v1422 = vadd.f32 %v1421, %v1420
          %1423 = vadd.xlane.f32.xlu0 %v1422
          %v1424 = vpop.xlane.xlu0 %1423
          %vm1425 = vcmp.ge.f32.partialorder %v1424, %v1175
          %v1426 = vsel %vm1425, %v1411, %v1405
          %v1427 = vsub.s32 %v1411, 1
          %v1428 = vsel %vm1425, %v1407, %v1427
          %v1429 = vsub.s32 %v1428, %v1426
          %v1430 = vadd.s32 %v1429, 1
          %v1431 = vshra.s32 %v1430, 1
          %v1432 = vadd.s32 %v1426, %v1431
          %1433 = vset.pattern.permute.xlu0 0
          %1434 = vperm.xlu0 %1433, %v1432
          %v1435 = vpop.permute.xlu0 %1434
          %vm1436 = vcmp.ge.s32.totalorder %v1179, %v1435
          %vm1437 = vcmp.ge.s32.totalorder %v1180, %v1435
          %vm1438 = vcmp.ge.s32.totalorder %v1181, %v1435
          %v1439 = vsel %vm1436, 1.0, 0.0
          %v1440 = vsel %vm1437, 1.0, 0.0
          %v1441 = vsel %vm1438, 1.0, 0.0
          %v1442 = vadd.f32 %v1439, %v1440
          %v1443 = vadd.f32 %v1442, %v1441
          %1444 = vadd.xlane.f32.xlu0 %v1443
          %v1445 = vpop.xlane.xlu0 %1444
          %vm1446 = vcmp.ge.f32.partialorder %v1445, %v1175
          %v1447 = vsel %vm1446, %v1432, %v1426
          %v1448 = vsub.s32 %v1432, 1
          %v1449 = vsel %vm1446, %v1428, %v1448
          %v1450 = vsub.s32 %v1449, %v1447
          %v1451 = vadd.s32 %v1450, 1
          %v1452 = vshra.s32 %v1451, 1
          %v1453 = vadd.s32 %v1447, %v1452
          %1454 = vset.pattern.permute.xlu0 0
          %1455 = vperm.xlu0 %1454, %v1453
          %v1456 = vpop.permute.xlu0 %1455
          %vm1457 = vcmp.ge.s32.totalorder %v1179, %v1456
          %vm1458 = vcmp.ge.s32.totalorder %v1180, %v1456
          %vm1459 = vcmp.ge.s32.totalorder %v1181, %v1456
          %v1460 = vsel %vm1457, 1.0, 0.0
          %v1461 = vsel %vm1458, 1.0, 0.0
          %v1462 = vsel %vm1459, 1.0, 0.0
          %v1463 = vadd.f32 %v1460, %v1461
          %v1464 = vadd.f32 %v1463, %v1462
          %1465 = vadd.xlane.f32.xlu0 %v1464
          %v1466 = vpop.xlane.xlu0 %1465
          %vm1467 = vcmp.ge.f32.partialorder %v1466, %v1175
          %v1468 = vsel %vm1467, %v1453, %v1447
          %v1469 = vsub.s32 %v1453, 1
          %v1470 = vsel %vm1467, %v1449, %v1469
          %v1471 = vsub.s32 %v1470, %v1468
          %v1472 = vadd.s32 %v1471, 1
          %v1473 = vshra.s32 %v1472, 1
          %v1474 = vadd.s32 %v1468, %v1473
          %1475 = vset.pattern.permute.xlu0 0
          %1476 = vperm.xlu0 %1475, %v1474
          %v1477 = vpop.permute.xlu0 %1476
          %vm1478 = vcmp.ge.s32.totalorder %v1179, %v1477
          %vm1479 = vcmp.ge.s32.totalorder %v1180, %v1477
          %vm1480 = vcmp.ge.s32.totalorder %v1181, %v1477
          %v1481 = vsel %vm1478, 1.0, 0.0
          %v1482 = vsel %vm1479, 1.0, 0.0
          %v1483 = vsel %vm1480, 1.0, 0.0
          %v1484 = vadd.f32 %v1481, %v1482
          %v1485 = vadd.f32 %v1484, %v1483
          %1486 = vadd.xlane.f32.xlu0 %v1485
          %v1487 = vpop.xlane.xlu0 %1486
          %vm1488 = vcmp.ge.f32.partialorder %v1487, %v1175
          %v1489 = vsel %vm1488, %v1474, %v1468
          %v1490 = vsub.s32 %v1474, 1
          %v1491 = vsel %vm1488, %v1470, %v1490
          %v1492 = vsub.s32 %v1491, %v1489
          %v1493 = vadd.s32 %v1492, 1
          %v1494 = vshra.s32 %v1493, 1
          %v1495 = vadd.s32 %v1489, %v1494
          %1496 = vset.pattern.permute.xlu0 0
          %1497 = vperm.xlu0 %1496, %v1495
          %v1498 = vpop.permute.xlu0 %1497
          %vm1499 = vcmp.ge.s32.totalorder %v1179, %v1498
          %vm1500 = vcmp.ge.s32.totalorder %v1180, %v1498
          %vm1501 = vcmp.ge.s32.totalorder %v1181, %v1498
          %v1502 = vsel %vm1499, 1.0, 0.0
          %v1503 = vsel %vm1500, 1.0, 0.0
          %v1504 = vsel %vm1501, 1.0, 0.0
          %v1505 = vadd.f32 %v1502, %v1503
          %v1506 = vadd.f32 %v1505, %v1504
          %1507 = vadd.xlane.f32.xlu0 %v1506
          %v1508 = vpop.xlane.xlu0 %1507
          %vm1509 = vcmp.ge.f32.partialorder %v1508, %v1175
          %v1510 = vsel %vm1509, %v1495, %v1489
          %v1511 = vsub.s32 %v1495, 1
          %v1512 = vsel %vm1509, %v1491, %v1511
          %v1513 = vsub.s32 %v1512, %v1510
          %v1514 = vadd.s32 %v1513, 1
          %v1515 = vshra.s32 %v1514, 1
          %v1516 = vadd.s32 %v1510, %v1515
          %1517 = vset.pattern.permute.xlu0 0
          %1518 = vperm.xlu0 %1517, %v1516
          %v1519 = vpop.permute.xlu0 %1518
          %vm1520 = vcmp.ge.s32.totalorder %v1179, %v1519
          %vm1521 = vcmp.ge.s32.totalorder %v1180, %v1519
          %vm1522 = vcmp.ge.s32.totalorder %v1181, %v1519
          %v1523 = vsel %vm1520, 1.0, 0.0
          %v1524 = vsel %vm1521, 1.0, 0.0
          %v1525 = vsel %vm1522, 1.0, 0.0
          %v1526 = vadd.f32 %v1523, %v1524
          %v1527 = vadd.f32 %v1526, %v1525
          %1528 = vadd.xlane.f32.xlu0 %v1527
          %v1529 = vpop.xlane.xlu0 %1528
          %vm1530 = vcmp.ge.f32.partialorder %v1529, %v1175
          %v1531 = vsel %vm1530, %v1516, %v1510
          %v1532 = vsub.s32 %v1516, 1
          %v1533 = vsel %vm1530, %v1512, %v1532
          %v1534 = vsub.s32 %v1533, %v1531
          %v1535 = vadd.s32 %v1534, 1
          %v1536 = vshra.s32 %v1535, 1
          %v1537 = vadd.s32 %v1531, %v1536
          %1538 = vset.pattern.permute.xlu0 0
          %1539 = vperm.xlu0 %1538, %v1537
          %v1540 = vpop.permute.xlu0 %1539
          %vm1541 = vcmp.ge.s32.totalorder %v1179, %v1540
          %vm1542 = vcmp.ge.s32.totalorder %v1180, %v1540
          %vm1543 = vcmp.ge.s32.totalorder %v1181, %v1540
          %v1544 = vsel %vm1541, 1.0, 0.0
          %v1545 = vsel %vm1542, 1.0, 0.0
          %v1546 = vsel %vm1543, 1.0, 0.0
          %v1547 = vadd.f32 %v1544, %v1545
          %v1548 = vadd.f32 %v1547, %v1546
          %1549 = vadd.xlane.f32.xlu0 %v1548
          %v1550 = vpop.xlane.xlu0 %1549
          %vm1551 = vcmp.ge.f32.partialorder %v1550, %v1175
          %v1552 = vsel %vm1551, %v1537, %v1531
          %v1553 = vsub.s32 %v1537, 1
          %v1554 = vsel %vm1551, %v1533, %v1553
          %v1555 = vsub.s32 %v1554, %v1552
          %v1556 = vadd.s32 %v1555, 1
          %v1557 = vshra.s32 %v1556, 1
          %v1558 = vadd.s32 %v1552, %v1557
          %1559 = vset.pattern.permute.xlu0 0
          %1560 = vperm.xlu0 %1559, %v1558
          %v1561 = vpop.permute.xlu0 %1560
          %vm1562 = vcmp.ge.s32.totalorder %v1179, %v1561
          %vm1563 = vcmp.ge.s32.totalorder %v1180, %v1561
          %vm1564 = vcmp.ge.s32.totalorder %v1181, %v1561
          %v1565 = vsel %vm1562, 1.0, 0.0
          %v1566 = vsel %vm1563, 1.0, 0.0
          %v1567 = vsel %vm1564, 1.0, 0.0
          %v1568 = vadd.f32 %v1565, %v1566
          %v1569 = vadd.f32 %v1568, %v1567
          %1570 = vadd.xlane.f32.xlu0 %v1569
          %v1571 = vpop.xlane.xlu0 %1570
          %vm1572 = vcmp.ge.f32.partialorder %v1571, %v1175
          %v1573 = vsel %vm1572, %v1558, %v1552
          %v1574 = vsub.s32 %v1558, 1
          %v1575 = vsel %vm1572, %v1554, %v1574
          %v1576 = vsub.s32 %v1575, %v1573
          %v1577 = vadd.s32 %v1576, 1
          %v1578 = vshra.s32 %v1577, 1
          %v1579 = vadd.s32 %v1573, %v1578
          %1580 = vset.pattern.permute.xlu0 0
          %1581 = vperm.xlu0 %1580, %v1579
          %v1582 = vpop.permute.xlu0 %1581
          %vm1583 = vcmp.ge.s32.totalorder %v1179, %v1582
          %vm1584 = vcmp.ge.s32.totalorder %v1180, %v1582
          %vm1585 = vcmp.ge.s32.totalorder %v1181, %v1582
          %v1586 = vsel %vm1583, 1.0, 0.0
          %v1587 = vsel %vm1584, 1.0, 0.0
          %v1588 = vsel %vm1585, 1.0, 0.0
          %v1589 = vadd.f32 %v1586, %v1587
          %v1590 = vadd.f32 %v1589, %v1588
          %1591 = vadd.xlane.f32.xlu0 %v1590
          %v1592 = vpop.xlane.xlu0 %1591
          %vm1593 = vcmp.ge.f32.partialorder %v1592, %v1175
          %v1594 = vsel %vm1593, %v1579, %v1573
          %v1595 = vsub.s32 %v1579, 1
          %v1596 = vsel %vm1593, %v1575, %v1595
          %v1597 = vsub.s32 %v1596, %v1594
          %v1598 = vadd.s32 %v1597, 1
          %v1599 = vshra.s32 %v1598, 1
          %v1600 = vadd.s32 %v1594, %v1599
          %1601 = vset.pattern.permute.xlu0 0
          %1602 = vperm.xlu0 %1601, %v1600
          %v1603 = vpop.permute.xlu0 %1602
          %vm1604 = vcmp.ge.s32.totalorder %v1179, %v1603
          %vm1605 = vcmp.ge.s32.totalorder %v1180, %v1603
          %vm1606 = vcmp.ge.s32.totalorder %v1181, %v1603
          %v1607 = vsel %vm1604, 1.0, 0.0
          %v1608 = vsel %vm1605, 1.0, 0.0
          %v1609 = vsel %vm1606, 1.0, 0.0
          %v1610 = vadd.f32 %v1607, %v1608
          %v1611 = vadd.f32 %v1610, %v1609
          %1612 = vadd.xlane.f32.xlu0 %v1611
          %v1613 = vpop.xlane.xlu0 %1612
          %vm1614 = vcmp.ge.f32.partialorder %v1613, %v1175
          %v1615 = vsel %vm1614, %v1600, %v1594
          %v1616 = vsub.s32 %v1600, 1
          %v1617 = vsel %vm1614, %v1596, %v1616
          %v1618 = vsub.s32 %v1617, %v1615
          %v1619 = vadd.s32 %v1618, 1
          %v1620 = vshra.s32 %v1619, 1
          %v1621 = vadd.s32 %v1615, %v1620
          %1622 = vset.pattern.permute.xlu0 0
          %1623 = vperm.xlu0 %1622, %v1621
          %v1624 = vpop.permute.xlu0 %1623
          %vm1625 = vcmp.ge.s32.totalorder %v1179, %v1624
          %vm1626 = vcmp.ge.s32.totalorder %v1180, %v1624
          %vm1627 = vcmp.ge.s32.totalorder %v1181, %v1624
          %v1628 = vsel %vm1625, 1.0, 0.0
          %v1629 = vsel %vm1626, 1.0, 0.0
          %v1630 = vsel %vm1627, 1.0, 0.0
          %v1631 = vadd.f32 %v1628, %v1629
          %v1632 = vadd.f32 %v1631, %v1630
          %1633 = vadd.xlane.f32.xlu0 %v1632
          %v1634 = vpop.xlane.xlu0 %1633
          %vm1635 = vcmp.ge.f32.partialorder %v1634, %v1175
          %v1636 = vsel %vm1635, %v1621, %v1615
          %v1637 = vsub.s32 %v1621, 1
          %v1638 = vsel %vm1635, %v1617, %v1637
          %v1639 = vsub.s32 %v1638, %v1636
          %v1640 = vadd.s32 %v1639, 1
          %v1641 = vshra.s32 %v1640, 1
          %v1642 = vadd.s32 %v1636, %v1641
          %1643 = vset.pattern.permute.xlu0 0
          %1644 = vperm.xlu0 %1643, %v1642
          %v1645 = vpop.permute.xlu0 %1644
          %vm1646 = vcmp.ge.s32.totalorder %v1179, %v1645
          %vm1647 = vcmp.ge.s32.totalorder %v1180, %v1645
          %vm1648 = vcmp.ge.s32.totalorder %v1181, %v1645
          %v1649 = vsel %vm1646, 1.0, 0.0
          %v1650 = vsel %vm1647, 1.0, 0.0
          %v1651 = vsel %vm1648, 1.0, 0.0
          %v1652 = vadd.f32 %v1649, %v1650
          %v1653 = vadd.f32 %v1652, %v1651
          %1654 = vadd.xlane.f32.xlu0 %v1653
          %v1655 = vpop.xlane.xlu0 %1654
          %vm1656 = vcmp.ge.f32.partialorder %v1655, %v1175
          %v1657 = vsel %vm1656, %v1642, %v1636
          %v1658 = vsub.s32 %v1642, 1
          %v1659 = vsel %vm1656, %v1638, %v1658
          %v1660 = vsub.s32 %v1659, %v1657
          %v1661 = vadd.s32 %v1660, 1
          %v1662 = vshra.s32 %v1661, 1
          %v1663 = vadd.s32 %v1657, %v1662
          %1664 = vset.pattern.permute.xlu0 0
          %1665 = vperm.xlu0 %1664, %v1663
          %v1666 = vpop.permute.xlu0 %1665
          %vm1667 = vcmp.ge.s32.totalorder %v1179, %v1666
          %vm1668 = vcmp.ge.s32.totalorder %v1180, %v1666
          %vm1669 = vcmp.ge.s32.totalorder %v1181, %v1666
          %v1670 = vsel %vm1667, 1.0, 0.0
          %v1671 = vsel %vm1668, 1.0, 0.0
          %v1672 = vsel %vm1669, 1.0, 0.0
          %v1673 = vadd.f32 %v1670, %v1671
          %v1674 = vadd.f32 %v1673, %v1672
          %1675 = vadd.xlane.f32.xlu0 %v1674
          %v1676 = vpop.xlane.xlu0 %1675
          %vm1677 = vcmp.ge.f32.partialorder %v1676, %v1175
          %v1678 = vsel %vm1677, %v1663, %v1657
          %v1679 = vsub.s32 %v1663, 1
          %v1680 = vsel %vm1677, %v1659, %v1679
          %v1681 = vsub.s32 %v1680, %v1678
          %v1682 = vadd.s32 %v1681, 1
          %v1683 = vshra.s32 %v1682, 1
          %v1684 = vadd.s32 %v1678, %v1683
          %1685 = vset.pattern.permute.xlu0 0
          %1686 = vperm.xlu0 %1685, %v1684
          %v1687 = vpop.permute.xlu0 %1686
          %vm1688 = vcmp.ge.s32.totalorder %v1179, %v1687
          %vm1689 = vcmp.ge.s32.totalorder %v1180, %v1687
          %vm1690 = vcmp.ge.s32.totalorder %v1181, %v1687
          %v1691 = vsel %vm1688, 1.0, 0.0
          %v1692 = vsel %vm1689, 1.0, 0.0
          %v1693 = vsel %vm1690, 1.0, 0.0
          %v1694 = vadd.f32 %v1691, %v1692
          %v1695 = vadd.f32 %v1694, %v1693
          %1696 = vadd.xlane.f32.xlu0 %v1695
          %v1697 = vpop.xlane.xlu0 %1696
          %vm1698 = vcmp.ge.f32.partialorder %v1697, %v1175
          %v1699 = vsel %vm1698, %v1684, %v1678
          %v1700 = vsub.s32 %v1684, 1
          %v1701 = vsel %vm1698, %v1680, %v1700
          %v1702 = vsub.s32 %v1701, %v1699
          %v1703 = vadd.s32 %v1702, 1
          %v1704 = vshra.s32 %v1703, 1
          %v1705 = vadd.s32 %v1699, %v1704
          %1706 = vset.pattern.permute.xlu0 0
          %1707 = vperm.xlu0 %1706, %v1705
          %v1708 = vpop.permute.xlu0 %1707
          %vm1709 = vcmp.ge.s32.totalorder %v1179, %v1708
          %vm1710 = vcmp.ge.s32.totalorder %v1180, %v1708
          %vm1711 = vcmp.ge.s32.totalorder %v1181, %v1708
          %v1712 = vsel %vm1709, 1.0, 0.0
          %v1713 = vsel %vm1710, 1.0, 0.0
          %v1714 = vsel %vm1711, 1.0, 0.0
          %v1715 = vadd.f32 %v1712, %v1713
          %v1716 = vadd.f32 %v1715, %v1714
          %1717 = vadd.xlane.f32.xlu0 %v1716
          %v1718 = vpop.xlane.xlu0 %1717
          %vm1719 = vcmp.ge.f32.partialorder %v1718, %v1175
          %v1720 = vsel %vm1719, %v1705, %v1699
          %v1721 = vsub.s32 %v1705, 1
          %v1722 = vsel %vm1719, %v1701, %v1721
          %v1723 = vsub.s32 %v1722, %v1720
          %v1724 = vadd.s32 %v1723, 1
          %v1725 = vshra.s32 %v1724, 1
          %v1726 = vadd.s32 %v1720, %v1725
          %1727 = vset.pattern.permute.xlu0 0
          %1728 = vperm.xlu0 %1727, %v1726
          %v1729 = vpop.permute.xlu0 %1728
          %vm1730 = vcmp.ge.s32.totalorder %v1179, %v1729
          %vm1731 = vcmp.ge.s32.totalorder %v1180, %v1729
          %vm1732 = vcmp.ge.s32.totalorder %v1181, %v1729
          %v1733 = vsel %vm1730, 1.0, 0.0
          %v1734 = vsel %vm1731, 1.0, 0.0
          %v1735 = vsel %vm1732, 1.0, 0.0
          %v1736 = vadd.f32 %v1733, %v1734
          %v1737 = vadd.f32 %v1736, %v1735
          %1738 = vadd.xlane.f32.xlu0 %v1737
          %v1739 = vpop.xlane.xlu0 %1738
          %vm1740 = vcmp.ge.f32.partialorder %v1739, %v1175
          %v1741 = vsel %vm1740, %v1726, %v1720
          %v1742 = vsub.s32 %v1726, 1
          %v1743 = vsel %vm1740, %v1722, %v1742
          %v1744 = vsub.s32 %v1743, %v1741
          %v1745 = vadd.s32 %v1744, 1
          %v1746 = vshra.s32 %v1745, 1
          %v1747 = vadd.s32 %v1741, %v1746
          %1748 = vset.pattern.permute.xlu0 0
          %1749 = vperm.xlu0 %1748, %v1747
          %v1750 = vpop.permute.xlu0 %1749
          %vm1751 = vcmp.ge.s32.totalorder %v1179, %v1750
          %vm1752 = vcmp.ge.s32.totalorder %v1180, %v1750
          %vm1753 = vcmp.ge.s32.totalorder %v1181, %v1750
          %v1754 = vsel %vm1751, 1.0, 0.0
          %v1755 = vsel %vm1752, 1.0, 0.0
          %v1756 = vsel %vm1753, 1.0, 0.0
          %v1757 = vadd.f32 %v1754, %v1755
          %v1758 = vadd.f32 %v1757, %v1756
          %1759 = vadd.xlane.f32.xlu0 %v1758
          %v1760 = vpop.xlane.xlu0 %1759
          %vm1761 = vcmp.ge.f32.partialorder %v1760, %v1175
          %v1762 = vsel %vm1761, %v1747, %v1741
          %v1763 = vsub.s32 %v1747, 1
          %v1764 = vsel %vm1761, %v1743, %v1763
          %v1765 = vsub.s32 %v1764, %v1762
          %v1766 = vadd.s32 %v1765, 1
          %v1767 = vshra.s32 %v1766, 1
          %v1768 = vadd.s32 %v1762, %v1767
          %1769 = vset.pattern.permute.xlu0 0
          %1770 = vperm.xlu0 %1769, %v1768
          %v1771 = vpop.permute.xlu0 %1770
          %vm1772 = vcmp.ge.s32.totalorder %v1179, %v1771
          %vm1773 = vcmp.ge.s32.totalorder %v1180, %v1771
          %vm1774 = vcmp.ge.s32.totalorder %v1181, %v1771
          %v1775 = vsel %vm1772, 1.0, 0.0
          %v1776 = vsel %vm1773, 1.0, 0.0
          %v1777 = vsel %vm1774, 1.0, 0.0
          %v1778 = vadd.f32 %v1775, %v1776
          %v1779 = vadd.f32 %v1778, %v1777
          %1780 = vadd.xlane.f32.xlu0 %v1779
          %v1781 = vpop.xlane.xlu0 %1780
          %vm1782 = vcmp.ge.f32.partialorder %v1781, %v1175
          %v1783 = vsel %vm1782, %v1768, %v1762
          %v1784 = vsub.s32 %v1768, 1
          %v1785 = vsel %vm1782, %v1764, %v1784
          %v1786 = vsub.s32 %v1785, %v1783
          %v1787 = vadd.s32 %v1786, 1
          %v1788 = vshra.s32 %v1787, 1
          %v1789 = vadd.s32 %v1783, %v1788
          %1790 = vset.pattern.permute.xlu0 0
          %1791 = vperm.xlu0 %1790, %v1789
          %v1792 = vpop.permute.xlu0 %1791
          %vm1793 = vcmp.ge.s32.totalorder %v1179, %v1792
          %vm1794 = vcmp.ge.s32.totalorder %v1180, %v1792
          %vm1795 = vcmp.ge.s32.totalorder %v1181, %v1792
          %v1796 = vsel %vm1793, 1.0, 0.0
          %v1797 = vsel %vm1794, 1.0, 0.0
          %v1798 = vsel %vm1795, 1.0, 0.0
          %v1799 = vadd.f32 %v1796, %v1797
          %v1800 = vadd.f32 %v1799, %v1798
          %1801 = vadd.xlane.f32.xlu0 %v1800
          %v1802 = vpop.xlane.xlu0 %1801
          %vm1803 = vcmp.ge.f32.partialorder %v1802, %v1175
          %v1804 = vsel %vm1803, %v1789, %v1783
          %v1805 = vsub.s32 %v1789, 1
          %v1806 = vsel %vm1803, %v1785, %v1805
          %v1807 = vsub.s32 %v1806, %v1804
          %v1808 = vadd.s32 %v1807, 1
          %v1809 = vshra.s32 %v1808, 1
          %v1810 = vadd.s32 %v1804, %v1809
          %1811 = vset.pattern.permute.xlu0 0
          %1812 = vperm.xlu0 %1811, %v1810
          %v1813 = vpop.permute.xlu0 %1812
          %vm1814 = vcmp.ge.s32.totalorder %v1179, %v1813
          %vm1815 = vcmp.ge.s32.totalorder %v1180, %v1813
          %vm1816 = vcmp.ge.s32.totalorder %v1181, %v1813
          %v1817 = vsel %vm1814, 1.0, 0.0
          %v1818 = vsel %vm1815, 1.0, 0.0
          %v1819 = vsel %vm1816, 1.0, 0.0
          %v1820 = vadd.f32 %v1817, %v1818
          %v1821 = vadd.f32 %v1820, %v1819
          %1822 = vadd.xlane.f32.xlu0 %v1821
          %v1823 = vpop.xlane.xlu0 %1822
          %vm1824 = vcmp.ge.f32.partialorder %v1823, %v1175
          %v1825 = vsel %vm1824, %v1810, %v1804
          %1826 = vset.pattern.permute.xlu0 0
          %1827 = vperm.xlu0 %1826, %v1825
          %v1828 = vpop.permute.xlu0 %1827
          %vm1829 = vcmp.gt.s32.totalorder %v1179, %v1828
          %vm1830 = vcmp.gt.s32.totalorder %v1180, %v1828
          %vm1831 = vcmp.gt.s32.totalorder %v1181, %v1828
          %v1832 = vsel %vm1829, 1.0, 0.0
          %v1833 = vsel %vm1830, 1.0, 0.0
          %v1834 = vsel %vm1831, 1.0, 0.0
          %v1835 = vadd.f32 %v1832, %v1833
          %v1836 = vadd.f32 %v1835, %v1834
          %1837 = vadd.xlane.f32.xlu0 %v1836
          %v1838 = vpop.xlane.xlu0 %1837
          %v1839 = vsub.f32 %v1175, %v1838
          %vm1840 = vcmp.eq.s32.totalorder %v1179, %v1828
          %vm1841 = vcmp.eq.s32.totalorder %v1180, %v1828
          %vm1842 = vcmp.eq.s32.totalorder %v1181, %v1828
          %v1843 = vadd.s32 %v1135, 128
          %v1844 = vadd.s32 %v1135, 256
          %vm1845 = vcmp.le.s32.totalorder %v1135, 191
          %vm1846 = vcmp.le.s32.totalorder %v1843, 191
          %vm1847 = vcmp.le.s32.totalorder %v1844, 191
          %vm1848 = vmand %vm1840, %vm1845
          %vm1849 = vmand %vm1841, %vm1846
          %vm1850 = vmand %vm1842, %vm1847
          %v1851 = vsel %vm1848, 1.0, 0.0
          %v1852 = vsel %vm1849, 1.0, 0.0
          %v1853 = vsel %vm1850, 1.0, 0.0
          %v1854 = vadd.f32 %v1851, %v1852
          %v1855 = vadd.f32 %v1854, %v1853
          %1856 = vadd.xlane.f32.xlu0 %v1855
          %v1857 = vpop.xlane.xlu0 %1856
          %vm1858 = vcmp.ge.f32.partialorder %v1857, %v1839
          %v1859 = vsel %vm1858, 0, 192
          %v1860 = vsel %vm1858, 191, 383
          %v1861 = vadd.s32 %v1859, %v1860
          %v1862 = vshra.s32 %v1861, 1
          %1863 = vset.pattern.permute.xlu0 0
          %1864 = vperm.xlu0 %1863, %v1862
          %v1865 = vpop.permute.xlu0 %1864
          %vm1866 = vcmp.le.s32.totalorder %v1135, %v1865
          %vm1867 = vcmp.le.s32.totalorder %v1843, %v1865
          %vm1868 = vcmp.le.s32.totalorder %v1844, %v1865
          %vm1869 = vmand %vm1840, %vm1866
          %vm1870 = vmand %vm1841, %vm1867
          %vm1871 = vmand %vm1842, %vm1868
          %v1872 = vsel %vm1869, 1.0, 0.0
          %v1873 = vsel %vm1870, 1.0, 0.0
          %v1874 = vsel %vm1871, 1.0, 0.0
          %v1875 = vadd.f32 %v1872, %v1873
          %v1876 = vadd.f32 %v1875, %v1874
          %1877 = vadd.xlane.f32.xlu0 %v1876
          %v1878 = vpop.xlane.xlu0 %1877
          %vm1879 = vcmp.ge.f32.partialorder %v1878, %v1839
          %v1880 = vadd.s32 %v1862, 1
          %v1881 = vsel %vm1879, %v1859, %v1880
          %v1882 = vsel %vm1879, %v1862, %v1860
          %v1883 = vadd.s32 %v1881, %v1882
          %v1884 = vshra.s32 %v1883, 1
          %1885 = vset.pattern.permute.xlu0 0
          %1886 = vperm.xlu0 %1885, %v1884
          %v1887 = vpop.permute.xlu0 %1886
          %vm1888 = vcmp.le.s32.totalorder %v1135, %v1887
          %vm1889 = vcmp.le.s32.totalorder %v1843, %v1887
          %vm1890 = vcmp.le.s32.totalorder %v1844, %v1887
          %vm1891 = vmand %vm1840, %vm1888
          %vm1892 = vmand %vm1841, %vm1889
          %vm1893 = vmand %vm1842, %vm1890
          %v1894 = vsel %vm1891, 1.0, 0.0
          %v1895 = vsel %vm1892, 1.0, 0.0
          %v1896 = vsel %vm1893, 1.0, 0.0
          %v1897 = vadd.f32 %v1894, %v1895
          %v1898 = vadd.f32 %v1897, %v1896
          %1899 = vadd.xlane.f32.xlu0 %v1898
          %v1900 = vpop.xlane.xlu0 %1899
          %vm1901 = vcmp.ge.f32.partialorder %v1900, %v1839
          %v1902 = vadd.s32 %v1884, 1
          %v1903 = vsel %vm1901, %v1881, %v1902
          %v1904 = vsel %vm1901, %v1884, %v1882
          %v1905 = vadd.s32 %v1903, %v1904
          %v1906 = vshra.s32 %v1905, 1
          %1907 = vset.pattern.permute.xlu0 0
          %1908 = vperm.xlu0 %1907, %v1906
          %v1909 = vpop.permute.xlu0 %1908
          %vm1910 = vcmp.le.s32.totalorder %v1135, %v1909
          %vm1911 = vcmp.le.s32.totalorder %v1843, %v1909
          %vm1912 = vcmp.le.s32.totalorder %v1844, %v1909
          %vm1913 = vmand %vm1840, %vm1910
          %vm1914 = vmand %vm1841, %vm1911
          %vm1915 = vmand %vm1842, %vm1912
          %v1916 = vsel %vm1913, 1.0, 0.0
          %v1917 = vsel %vm1914, 1.0, 0.0
          %v1918 = vsel %vm1915, 1.0, 0.0
          %v1919 = vadd.f32 %v1916, %v1917
          %v1920 = vadd.f32 %v1919, %v1918
          %1921 = vadd.xlane.f32.xlu0 %v1920
          %v1922 = vpop.xlane.xlu0 %1921
          %vm1923 = vcmp.ge.f32.partialorder %v1922, %v1839
          %v1924 = vadd.s32 %v1906, 1
          %v1925 = vsel %vm1923, %v1903, %v1924
          %v1926 = vsel %vm1923, %v1906, %v1904
          %v1927 = vadd.s32 %v1925, %v1926
          %v1928 = vshra.s32 %v1927, 1
          %1929 = vset.pattern.permute.xlu0 0
          %1930 = vperm.xlu0 %1929, %v1928
          %v1931 = vpop.permute.xlu0 %1930
          %vm1932 = vcmp.le.s32.totalorder %v1135, %v1931
          %vm1933 = vcmp.le.s32.totalorder %v1843, %v1931
          %vm1934 = vcmp.le.s32.totalorder %v1844, %v1931
          %vm1935 = vmand %vm1840, %vm1932
          %vm1936 = vmand %vm1841, %vm1933
          %vm1937 = vmand %vm1842, %vm1934
          %v1938 = vsel %vm1935, 1.0, 0.0
          %v1939 = vsel %vm1936, 1.0, 0.0
          %v1940 = vsel %vm1937, 1.0, 0.0
          %v1941 = vadd.f32 %v1938, %v1939
          %v1942 = vadd.f32 %v1941, %v1940
          %1943 = vadd.xlane.f32.xlu0 %v1942
          %v1944 = vpop.xlane.xlu0 %1943
          %vm1945 = vcmp.ge.f32.partialorder %v1944, %v1839
          %v1946 = vadd.s32 %v1928, 1
          %v1947 = vsel %vm1945, %v1925, %v1946
          %v1948 = vsel %vm1945, %v1928, %v1926
          %v1949 = vadd.s32 %v1947, %v1948
          %v1950 = vshra.s32 %v1949, 1
          %1951 = vset.pattern.permute.xlu0 0
          %1952 = vperm.xlu0 %1951, %v1950
          %v1953 = vpop.permute.xlu0 %1952
          %vm1954 = vcmp.le.s32.totalorder %v1135, %v1953
          %vm1955 = vcmp.le.s32.totalorder %v1843, %v1953
          %vm1956 = vcmp.le.s32.totalorder %v1844, %v1953
          %vm1957 = vmand %vm1840, %vm1954
          %vm1958 = vmand %vm1841, %vm1955
          %vm1959 = vmand %vm1842, %vm1956
          %v1960 = vsel %vm1957, 1.0, 0.0
          %v1961 = vsel %vm1958, 1.0, 0.0
          %v1962 = vsel %vm1959, 1.0, 0.0
          %v1963 = vadd.f32 %v1960, %v1961
          %v1964 = vadd.f32 %v1963, %v1962
          %1965 = vadd.xlane.f32.xlu0 %v1964
          %v1966 = vpop.xlane.xlu0 %1965
          %vm1967 = vcmp.ge.f32.partialorder %v1966, %v1839
          %v1968 = vadd.s32 %v1950, 1
          %v1969 = vsel %vm1967, %v1947, %v1968
          %v1970 = vsel %vm1967, %v1950, %v1948
          %v1971 = vadd.s32 %v1969, %v1970
          %v1972 = vshra.s32 %v1971, 1
          %1973 = vset.pattern.permute.xlu0 0
          %1974 = vperm.xlu0 %1973, %v1972
          %v1975 = vpop.permute.xlu0 %1974
          %vm1976 = vcmp.le.s32.totalorder %v1135, %v1975
          %vm1977 = vcmp.le.s32.totalorder %v1843, %v1975
          %vm1978 = vcmp.le.s32.totalorder %v1844, %v1975
          %vm1979 = vmand %vm1840, %vm1976
          %vm1980 = vmand %vm1841, %vm1977
          %vm1981 = vmand %vm1842, %vm1978
          %v1982 = vsel %vm1979, 1.0, 0.0
          %v1983 = vsel %vm1980, 1.0, 0.0
          %v1984 = vsel %vm1981, 1.0, 0.0
          %v1985 = vadd.f32 %v1982, %v1983
          %v1986 = vadd.f32 %v1985, %v1984
          %1987 = vadd.xlane.f32.xlu0 %v1986
          %v1988 = vpop.xlane.xlu0 %1987
          %vm1989 = vcmp.ge.f32.partialorder %v1988, %v1839
          %v1990 = vadd.s32 %v1972, 1
          %v1991 = vsel %vm1989, %v1969, %v1990
          %v1992 = vsel %vm1989, %v1972, %v1970
          %v1993 = vadd.s32 %v1991, %v1992
          %v1994 = vshra.s32 %v1993, 1
          %1995 = vset.pattern.permute.xlu0 0
          %1996 = vperm.xlu0 %1995, %v1994
          %v1997 = vpop.permute.xlu0 %1996
          %vm1998 = vcmp.le.s32.totalorder %v1135, %v1997
          %vm1999 = vcmp.le.s32.totalorder %v1843, %v1997
          %vm2000 = vcmp.le.s32.totalorder %v1844, %v1997
          %vm2001 = vmand %vm1840, %vm1998
          %vm2002 = vmand %vm1841, %vm1999
          %vm2003 = vmand %vm1842, %vm2000
          %v2004 = vsel %vm2001, 1.0, 0.0
          %v2005 = vsel %vm2002, 1.0, 0.0
          %v2006 = vsel %vm2003, 1.0, 0.0
          %v2007 = vadd.f32 %v2004, %v2005
          %v2008 = vadd.f32 %v2007, %v2006
          %2009 = vadd.xlane.f32.xlu0 %v2008
          %v2010 = vpop.xlane.xlu0 %2009
          %vm2011 = vcmp.ge.f32.partialorder %v2010, %v1839
          %v2012 = vadd.s32 %v1994, 1
          %v2013 = vsel %vm2011, %v1991, %v2012
          %v2014 = vsel %vm2011, %v1994, %v1992
          %v2015 = vadd.s32 %v2013, %v2014
          %v2016 = vshra.s32 %v2015, 1
          %2017 = vset.pattern.permute.xlu0 0
          %2018 = vperm.xlu0 %2017, %v2016
          %v2019 = vpop.permute.xlu0 %2018
          %vm2020 = vcmp.le.s32.totalorder %v1135, %v2019
          %vm2021 = vcmp.le.s32.totalorder %v1843, %v2019
          %vm2022 = vcmp.le.s32.totalorder %v1844, %v2019
          %vm2023 = vmand %vm1840, %vm2020
          %vm2024 = vmand %vm1841, %vm2021
          %vm2025 = vmand %vm1842, %vm2022
          %v2026 = vsel %vm2023, 1.0, 0.0
          %v2027 = vsel %vm2024, 1.0, 0.0
          %v2028 = vsel %vm2025, 1.0, 0.0
          %v2029 = vadd.f32 %v2026, %v2027
          %v2030 = vadd.f32 %v2029, %v2028
          %2031 = vadd.xlane.f32.xlu0 %v2030
          %v2032 = vpop.xlane.xlu0 %2031
          %vm2033 = vcmp.ge.f32.partialorder %v2032, %v1839
          %v2034 = vadd.s32 %v2016, 1
          %v2035 = vsel %vm2033, %v2013, %v2034
          %2036 = vset.pattern.permute.xlu0 0
          %2037 = vperm.xlu0 %2036, %v2035
          %v2038 = vpop.permute.xlu0 %2037
          %vm2039 = vcmp.le.s32.totalorder %v1135, %v2038
          %vm2040 = vcmp.le.s32.totalorder %v1843, %v2038
          %vm2041 = vcmp.le.s32.totalorder %v1844, %v2038
          %vm2042 = vmand %vm1840, %vm2039
          %vm2043 = vmand %vm1841, %vm2040
          %vm2044 = vmand %vm1842, %vm2041
          %vm2045 = vcmp.ge.f32.partialorder %v1839, 1.0
          %v2046 = vsel %vm2045, 1, 0
          %2047 = vset.pattern.permute.xlu0 0
          %2048 = vperm.xlu0 %2047, %v2046
          %v2049 = vpop.permute.xlu0 %2048
          %vm2050 = vcmp.eq.s32.totalorder %v2049, 1
          %vm2051 = vmand %vm2042, %vm2050
          %vm2052 = vmand %vm2043, %vm2050
          %vm2053 = vmand %vm2044, %vm2050
          %vm2054 = vmor %vm1829, %vm2051
          %vm2055 = vmor %vm1830, %vm2052
          %vm2056 = vmor %vm1831, %vm2053
          %v2057 = vsel %vm2054, 1.0, 0.0
          %v2058 = vsel %vm2055, 1.0, 0.0
          %v2059 = vsel %vm2056, 1.0, 0.0
          %v2060 = vmul.f32 %v1176, %v2057
          %v2061 = vmul.f32 %v1177, %v2058
          %v2062 = vmul.f32 %v1178, %v2059
          %v2063 = vadd.f32 %v2060, %v2061
          %v2064 = vadd.f32 %v2063, %v2062
          %2065 = vadd.xlane.f32.xlu0 %v2064
          %v2066 = vpop.xlane.xlu0 %2065
          %v2067 = vld [vmem:[#allocation5] sm:$0xff]
          %v2068 = vld [vmem:[#allocation6] sm:$0xff]
          %v2069 = vadd.f32 %v2067, %v2068
          %v2070 = vadd.f32 %v2069, %v2066
          %vm2071 = vcmp.gt.f32.partialorder %v1173, 0.0
          %v2072 = vsel %vm2071, 1, 0
          %v2073 = vcvt.s32.f32 %v2072
          %v2074 = vmul.f32 %v2070, %v2073
          %v2075 = vmax.f32 %v1173, 1e-06
          %v2076 = vrcp.pop %v2075
          %v2077 = vmul.f32 %v2074, %v2076
          %vm2078 = vcmp.eq.s32.totalorder %v979, %v1135
          %2080 = vset.pattern.permute.xlu0 0
          %2081 = vperm.xlu0 %2080, %v2077
          %v2082 = vpop.permute.xlu0 %2081
          %v2084 = vsel %vm2078, %v2082, 0.0
          %vm2085 = vcmask 64512
          %v2086 = vsel %vm2085, %v2084, 0.0
          %v2087 = vrot.slane %v2086, 4
          %v2088 = vadd.f32 %v2086, %v2087
          %v2089 = vrot.slane %v2088, 2
          %v2090 = vadd.f32 %v2088, %v2089
          %v2091 = vrot.slane %v2090, 1
          %v2092 = vadd.f32 %v2090, %v2091
          %vm2093 = vcmask 57344
          %2094 = vst.msk [vmem:[%s417] sm:$0x1] %vm2093, %v2092
        $region68: #{tpu_custom_call.1} parent=39 // pred_fallthru
          _
        %s2095 = sand.u32 %s186, 1
        %s2096 = scalar_lea.sflag [#allocation9], %s2095
        %s2097 = sand.u32 %s186, 1
        %s2098 = scalar_lea.vmem [#allocation16], %s2097
        // Predicated region
        $region69: #{tpu_custom_call.1} parent=39 // pred_check
          %p2099 = pneg %p196
        $region70: #{tpu_custom_call.1} parent=39 // pred_check_branch
          %2101 = sbr.rel (%p2099) target = $region72
        $region71: #{tpu_custom_call.1} parent=39 // pred_region
          %s2103 = ssub.s32 16, 16
          %2104 = vsyncadd %s2096, %s2103
          %s2105 = smul.addr %s32, 16
          %s2106 = scalar_lea.hbm %s5, %s2105
          %s2108 = sshll.u32 %s2098, 4
          %s2109 = int_to_ptr.vmem [resolvable:$true] %s2108
          %2111 = dma.vmem_to_hbm [thread:$0]  %s2109, 16, %s2106, %s2096
        $region72: #{tpu_custom_call.1} parent=39 // pred_fallthru
          _
      $region40: #{tpu_custom_call.1} parent=5 // pred_fallthru
        _
      %p2112 = scmp.le.s32.totalorder 2, %s23
      // Predicated region
      $region73: #{tpu_custom_call.1} parent=5 // pred_check
        %p2113 = pneg %p2112
      $region74: #{tpu_custom_call.1} parent=5 // pred_check_branch
        %2115 = sbr.rel (%p2113) target = $region76
      $region75: #{tpu_custom_call.1} parent=5 // pred_region
        %s2116 = ssub.s32 %s23, 2
        // Predicated region
        $region77: #{tpu_custom_call.1} parent=75 // pred_check
          %p2117 = pneg %p202
        $region78: #{tpu_custom_call.1} parent=75 // pred_check_branch
          %2119 = sbr.rel (%p2117) target = $region80
        $region79: #{tpu_custom_call.1} parent=75 // pred_region
          %s2120 = sand.u32 %s187, 1
          %s2121 = scalar_lea.sflag [#allocation9], %s2120
          %s2122 = sand.u32 %s187, 1
          %s2123 = scalar_lea.vmem [#allocation16], %s2122
          %2124 = dma.done %s2121, 16
        $region80: #{tpu_custom_call.1} parent=75 // pred_fallthru
          _
      $region76: #{tpu_custom_call.1} parent=5 // pred_fallthru
        _
    $region6: #{tpu_custom_call.1} parent=1 // loop_footer
      %s27 = sadd.s32 1, %s23
    $region7: #{tpu_custom_call.1} parent=1 // loop_footer_branch
      %22 = sbr.rel target = $region3
    $region8: #{tpu_custom_call.1} parent=1 // loop_exit
      _
    %2125 = vsyncpa [#allocation8], 1
    %s2126 = scalar_lea.sflag [#allocation8], 1
    %2127 = vsyncpa %s2126, 1
    %2128 = vsyncpa [#allocation11], 1
    %s2129 = scalar_lea.sflag [#allocation11], 1
    %2130 = vsyncpa %s2129, 1
    %2131 = vsyncpa [#allocation14], 1
    %s2132 = scalar_lea.sflag [#allocation14], 1
    %2133 = vsyncpa %s2132, 1
    %2134 = vsyncpa [#allocation9], 1
    %s2135 = scalar_lea.sflag [#allocation9], 1
    %2136 = vsyncpa %s2135, 1

</llo_original>
